<compile_context>
chip_gen: v5e
topology: v5e:2x2
jax: 0.10.0
libtpu: 0.0.40
codegen_flags: <defaults>
</compile_context>

<pallas_src>
import functools

import jax
import jax.numpy as jnp
from jax.experimental import pallas as pl
from jax.experimental.pallas import tpu as pltpu


PARAM = {
    'con_layers': 5, 'dense_layers': 1, 'output_activation': 'softmax',
    'input_channel': 3, 'padding': 1, 'stride': 1,
    'pool_padding': 0, 'pool_stride': 2, 'pool_filter_size': 2,
    'image_size': 32, 'filter_size': [3, 3, 3, 3, 3],
    'dense_output_list': [32], 'filter_num': 16, 'activation': 'ReLU',
    'filter_org': 'same', 'batch_norm': 'No',
    'dropout': [0, 0, 0, 0, 0, 0],
}


# -----------------------------------------------------------------------------
# Fused conv3x3(pad=1, stride=1, bias=False) + ReLU + maxpool 2x2 (stride 2)
# -----------------------------------------------------------------------------
def _conv_relu_pool_kernel(x_ref, w_ref, o_ref, *, H, W, C, F, TB):
    """x_ref: (TB, H, W*C) f32   per-image rows x (width*channels), unpadded
       w_ref: (3, (W+2)*C, W*F) bf16   banded per-row weight matrices
       o_ref: (TB, H//2, (W//2)*F) f32  pooled output (lane-dense last dim)."""
    PH, PW = H // 2, W // 2
    WP = W + 2
    zc = jnp.zeros((H, C), jnp.bfloat16)           # 1-pixel zero pad (left/right)
    zr = jnp.zeros((1, WP * C), jnp.bfloat16)      # 1-row zero pad (top/bottom)
    for n in range(TB):
        xb = x_ref[n].astype(jnp.bfloat16)                       # (H, W*C)
        xr = jnp.concatenate([zc, xb, zc], axis=1)               # (H, WP*C)
        xp = jnp.concatenate([zr, xr, zr], axis=0)               # (H+2, WP*C)
        # conv as 3 row-shifted band matmuls, f32 accumulation on the MXU.
        acc = jnp.zeros((H, W * F), jnp.float32)
        for i in range(3):
            acc = acc + jnp.dot(xp[i:i + H, :], w_ref[i],
                                preferred_element_type=jnp.float32)
        y = jnp.maximum(acc, 0.0)                                # ReLU, (H, W*F)
        # 2x2 / stride-2 max pool.  Rows (H direction):
        ev = jnp.concatenate([y[2 * p:2 * p + 1, :] for p in range(PH)], axis=0)
        od = jnp.concatenate([y[2 * p + 1:2 * p + 2, :] for p in range(PH)], axis=0)
        yh = jnp.maximum(ev, od)                                 # (PH, W*F)
        # Columns (W direction), F-sized lane blocks:
        evc = jnp.concatenate(
            [yh[:, (2 * q) * F:(2 * q + 1) * F] for q in range(PW)], axis=1)
        odc = jnp.concatenate(
            [yh[:, (2 * q + 1) * F:(2 * q + 2) * F] for q in range(PW)], axis=1)
        o_ref[n] = jnp.maximum(evc, odc).astype(o_ref.dtype)     # (PH, PW*F)


def conv_relu_pool(x, w_banded, H, W, C, F):
    """x: (B, H, W*C) f32;  w_banded: (3, (W+2)*C, W*F) bf16."""
    B = x.shape[0]
    TB = 1 if B < 8 else next(d for d in (8, 4, 2, 1) if B % d == 0)
    PH, PW = H // 2, W // 2
    kernel = functools.partial(_conv_relu_pool_kernel, H=H, W=W, C=C, F=F, TB=TB)
    return pl.pallas_call(
        kernel,
        out_shape=jax.ShapeDtypeStruct((B, PH, PW * F), jnp.float32),
        grid=(B // TB,),
        in_specs=[
            pl.BlockSpec((TB, H, W * C), lambda b: (b, 0, 0)),
            pl.BlockSpec((3, (W + 2) * C, W * F), lambda b: (0, 0, 0)),
        ],
        out_specs=pl.BlockSpec((TB, PH, PW * F), lambda b: (b, 0, 0)),
        compiler_params=pltpu.CompilerParams(
            dimension_semantics=("parallel",)),
    )(x, w_banded)


def build_banded_weights(w_hwio, W):
    """3x3 conv filter (KH, KW, C, F) -> (KH, (W+2)*C, W*F) banded matrices so
    that conv-output row h == sum_i  padded_input_row[h+i] @ M[i]
    (stride 1, padding 1).  Pure layout transform, done once in JAX."""
    KH, KW, C, F = w_hwio.shape
    WP = W + KW - 1
    q = jnp.arange(WP)[:, None]          # padded input column
    wcol = jnp.arange(W)[None, :]        # output column
    d = q - wcol                         # tap index j = q - w
    valid = (d >= 0) & (d < KW)
    dc = jnp.clip(d, 0, KW - 1)
    mats = []
    for i in range(KH):
        g = w_hwio[i][dc]                                    # (WP, W, C, F)
        g = jnp.where(valid[:, :, None, None], g, 0.0)
        g = jnp.transpose(g, (0, 2, 1, 3)).reshape(WP * C, W * F)
        mats.append(g)
    return jnp.stack(mats, axis=0).astype(jnp.bfloat16)


# -----------------------------------------------------------------------------
# Fused dense head: Linear(16->32)+ReLU, Linear(32->10)+Softmax(dim=1)
# -----------------------------------------------------------------------------
def _dense_head_kernel(x_ref, w1_ref, b1_ref, w2_ref, b2_ref, o_ref):
    x = x_ref[...].astype(jnp.bfloat16)
    h = jnp.dot(x, w1_ref[...], preferred_element_type=jnp.float32)
    h = jnp.maximum(h + b1_ref[...], 0.0)
    z = jnp.dot(h.astype(jnp.bfloat16), w2_ref[...],
                preferred_element_type=jnp.float32)
    z = z + b2_ref[...]
    m = jnp.max(z, axis=1, keepdims=True)
    e = jnp.exp(z - m)
    s = jnp.sum(e, axis=1, keepdims=True)
    o_ref[...] = (e * pl.reciprocal(s, approx=True)).astype(o_ref.dtype)


def dense_head(x, w1, b1, w2, b2):
    B, K = x.shape
    N1 = w1.shape[1]
    N2 = w2.shape[1]
    TB = min(B, 1024)
    return pl.pallas_call(
        _dense_head_kernel,
        out_shape=jax.ShapeDtypeStruct((B, N2), jnp.float32),
        grid=(pl.cdiv(B, TB),),
        in_specs=[
            pl.BlockSpec((TB, K), lambda i: (i, 0)),
            pl.BlockSpec((K, N1), lambda i: (0, 0)),
            pl.BlockSpec((1, N1), lambda i: (0, 0)),
            pl.BlockSpec((N1, N2), lambda i: (0, 0)),
            pl.BlockSpec((1, N2), lambda i: (0, 0)),
        ],
        out_specs=pl.BlockSpec((TB, N2), lambda i: (i, 0)),
        compiler_params=pltpu.CompilerParams(
            dimension_semantics=("parallel",)),
    )(x, w1.astype(jnp.bfloat16), b1.reshape(1, N1),
      w2.astype(jnp.bfloat16), b2.reshape(1, N2))


# -----------------------------------------------------------------------------
# Model: parameter construction + forward
# -----------------------------------------------------------------------------
def organize_filters(filter_org, filter_number, layers):
    if filter_org == 'same':
        return [filter_number] * layers
    if filter_org == 'double':
        return [filter_number * 2 ** i for i in range(layers)]
    if filter_org == 'half':
        return [int(filter_number * 2 ** (-i)) for i in range(layers)]
    raise ValueError(filter_org)


def init_params(key, param):
    filt = organize_filters(param['filter_org'], param['filter_num'],
                            param['con_layers'])
    ks = param['filter_size']
    img = param['image_size']
    cin = param['input_channel']

    conv_w = []
    for i in range(param['con_layers']):
        key, sub = jax.random.split(key)
        fan_in = ks[i] * ks[i] * cin
        w = jax.random.normal(sub, (ks[i], ks[i], cin, filt[i]),
                              jnp.float32) * jnp.sqrt(2.0 / fan_in)
        conv_w.append(w)
        img = (img - ks[i] + 2 * param['padding']) // param['stride'] + 1
        img = (img + 2 * param['pool_padding']
               - (param['pool_filter_size'] - 1) - 1) // param['pool_stride'] + 1
        cin = filt[i]

    dense_in = filt[-1] * img * img
    dense = []
    for out in param['dense_output_list']:
        key, kw, kb = jax.random.split(key, 3)
        w = jax.random.normal(kw, (dense_in, out), jnp.float32) * jnp.sqrt(2.0 / dense_in)
        b = jax.random.normal(kb, (out,), jnp.float32) * 0.01
        dense.append((w, b))
        dense_in = out

    key, kw, kb = jax.random.split(key, 3)
    wo = jax.random.normal(kw, (dense_in, 10), jnp.float32) * jnp.sqrt(2.0 / dense_in)
    bo = jax.random.normal(kb, (10,), jnp.float32) * 0.01
    return {'conv_w': conv_w, 'dense': dense, 'out': (wo, bo)}


def prepare_state(params, param):
    """One-time conversion of conv filters into kernel-ready banded matrices."""
    img = param['image_size']
    banded = []
    for w in params['conv_w']:
        banded.append(build_banded_weights(w, img))
        img = img // 2                     # conv preserves size; pool halves it
    return {'conv_banded': banded, 'dense': params['dense'], 'out': params['out']}


def make_forward(param):
    # kernel assumes this exact conv/pool geometry (the frozen config):
    assert param['padding'] == 1 and param['stride'] == 1
    assert all(k == 3 for k in param['filter_size'])
    assert (param['pool_filter_size'] == 2 and param['pool_stride'] == 2
            and param['pool_padding'] == 0)
    assert param['dense_layers'] == 1 and len(param['dense_output_list']) == 1

    filt = organize_filters(param['filter_org'], param['filter_num'],
                            param['con_layers'])
    img = param['image_size']
    cin = param['input_channel']
    dims = []                              # static (H, W, C, F) per conv layer
    for i in range(param['con_layers']):
        dims.append((img, img, cin, filt[i]))
        img = img // 2
        cin = filt[i]

    @jax.jit
    def forward(state, x_nchw):
        B, C0, H0, W0 = x_nchw.shape
        # NCHW -> per-image lane-dense 2D layout (rows=H, lanes=W*C).
        x = jnp.transpose(x_nchw, (0, 2, 3, 1)).reshape(B, H0, W0 * C0)
        for (H, W, C, F), wb in zip(dims, state['conv_banded']):
            x = conv_relu_pool(x, wb, H, W, C, F)
        # final spatial is 1x1 -> flatten; at 1x1 this matches torch.nn.Flatten
        # (NCHW) element order exactly.
        x = x.reshape(B, -1)
        (w1, b1) = state['dense'][0]
        (w2, b2) = state['out']
        return dense_head(x, w1, b1, w2, b2)

    return forward


if __name__ == "__main__":
    key = jax.random.PRNGKey(0)
    key, pkey, xkey = jax.random.split(key, 3)
    params = init_params(pkey, PARAM)
    state = prepare_state(params, PARAM)
    forward = make_forward(PARAM)

    batch = 2
    x = jax.random.normal(
        xkey,
        (batch, PARAM['input_channel'], PARAM['image_size'], PARAM['image_size']),
        jnp.float32)

    out = jax.block_until_ready(forward(state, x))

    assert out.shape == (batch, 10), out.shape
    row_sums = jnp.sum(out, axis=1)
    assert bool(jnp.all(jnp.abs(row_sums - 1.0) < 1e-2)), row_sums
    assert bool(jnp.all(out >= 0.0))
    print("KERNEL_OK")
</pallas_src>

<mosaic_0001>
module attributes {stable_mosaic.version = 11 : i64} {
  func.func @_conv_relu_pool_kernel(%arg0: i32, %arg1: memref<1x16x256xf32, #tpu.memory_space<vmem>>, %arg2: memref<3x288x256xbf16, #tpu.memory_space<vmem>>, %arg3: memref<1x8x128xf32, #tpu.memory_space<vmem>>) attributes {dimension_semantics = [#tpu.dimension_semantics<parallel>], iteration_bounds = array<i64: 2>, scalar_prefetch = 0 : i64, scratch_operands = 0 : i64, tpu.core_type = #tpu.core_type<tc>, window_params = [{transform_indices = @transform_0, window_bounds = array<i64: 1, 16, 256>}, {pipeline_mode = #tpu.pipeline_mode<synchronous>, transform_indices = @transform_1, window_bounds = array<i64: 3, 288, 256>}, {transform_indices = @transform_2, window_bounds = array<i64: 1, 8, 128>}]} {
    %cst = arith.constant 0.000000e+00 : bf16
    %0 = vector.broadcast %cst : bf16 to vector<16x16xbf16>
    %cst_0 = arith.constant 0.000000e+00 : bf16
    %1 = vector.broadcast %cst_0 : bf16 to vector<1x288xbf16>
    %c0 = arith.constant 0 : index
    %c0_1 = arith.constant 0 : index
    %c0_2 = arith.constant 0 : index
    %2 = vector.load %arg1[%c0, %c0_1, %c0_2] : memref<1x16x256xf32, #tpu.memory_space<vmem>>, vector<1x16x256xf32>
    %3 = vector.shape_cast %2 : vector<1x16x256xf32> to vector<16x256xf32>
    %4 = arith.truncf %3 : vector<16x256xf32> to vector<16x256xbf16>
    %5 = tpu.concatenate %0, %4, %0 in 1 : vector<16x16xbf16>, vector<16x256xbf16>, vector<16x16xbf16> -> vector<16x288xbf16>
    %6 = tpu.concatenate %1, %5, %1 in 0 : vector<1x288xbf16>, vector<16x288xbf16>, vector<1x288xbf16> -> vector<18x288xbf16>
    %cst_3 = arith.constant 0.000000e+00 : f32
    %7 = vector.broadcast %cst_3 : f32 to vector<16x256xf32>
    %8 = vector.extract_strided_slice %6 {offsets = [0, 0], sizes = [16, 288], strides = [1, 1]} : vector<18x288xbf16> to vector<16x288xbf16>
    %c0_4 = arith.constant 0 : index
    %c0_5 = arith.constant 0 : index
    %c0_6 = arith.constant 0 : index
    %9 = vector.load %arg2[%c0_4, %c0_5, %c0_6] : memref<3x288x256xbf16, #tpu.memory_space<vmem>>, vector<1x288x256xbf16>
    %10 = vector.shape_cast %9 : vector<1x288x256xbf16> to vector<288x256xbf16>
    %cst_7 = arith.constant dense<0.000000e+00> : vector<16x256xf32>
    %11 = tpu.matmul %8, %10, %cst_7 {dimension_numbers = #tpu.dot_dimension_numbers<[1], [0], [0], [1], [0, 0, 1, 1], [], []>} : vector<16x288xbf16>, vector<288x256xbf16>, vector<16x256xf32> -> vector<16x256xf32>
    %12 = arith.addf %7, %11 : vector<16x256xf32>
    %13 = vector.extract_strided_slice %6 {offsets = [1, 0], sizes = [16, 288], strides = [1, 1]} : vector<18x288xbf16> to vector<16x288xbf16>
    %c1 = arith.constant 1 : index
    %c0_8 = arith.constant 0 : index
    %c0_9 = arith.constant 0 : index
    %14 = vector.load %arg2[%c1, %c0_8, %c0_9] : memref<3x288x256xbf16, #tpu.memory_space<vmem>>, vector<1x288x256xbf16>
    %15 = vector.shape_cast %14 : vector<1x288x256xbf16> to vector<288x256xbf16>
    %cst_10 = arith.constant dense<0.000000e+00> : vector<16x256xf32>
    %16 = tpu.matmul %13, %15, %cst_10 {dimension_numbers = #tpu.dot_dimension_numbers<[1], [0], [0], [1], [0, 0, 1, 1], [], []>} : vector<16x288xbf16>, vector<288x256xbf16>, vector<16x256xf32> -> vector<16x256xf32>
    %17 = arith.addf %12, %16 : vector<16x256xf32>
    %18 = vector.extract_strided_slice %6 {offsets = [2, 0], sizes = [16, 288], strides = [1, 1]} : vector<18x288xbf16> to vector<16x288xbf16>
    %c2 = arith.constant 2 : index
    %c0_11 = arith.constant 0 : index
    %c0_12 = arith.constant 0 : index
    %19 = vector.load %arg2[%c2, %c0_11, %c0_12] : memref<3x288x256xbf16, #tpu.memory_space<vmem>>, vector<1x288x256xbf16>
    %20 = vector.shape_cast %19 : vector<1x288x256xbf16> to vector<288x256xbf16>
    %cst_13 = arith.constant dense<0.000000e+00> : vector<16x256xf32>
    %21 = tpu.matmul %18, %20, %cst_13 {dimension_numbers = #tpu.dot_dimension_numbers<[1], [0], [0], [1], [0, 0, 1, 1], [], []>} : vector<16x288xbf16>, vector<288x256xbf16>, vector<16x256xf32> -> vector<16x256xf32>
    %22 = arith.addf %17, %21 : vector<16x256xf32>
    %cst_14 = arith.constant 0.000000e+00 : f32
    %23 = vector.broadcast %cst_14 : f32 to vector<16x256xf32>
    %24 = arith.maximumf %22, %23 : vector<16x256xf32>
    %25 = vector.extract_strided_slice %24 {offsets = [0, 0], sizes = [1, 256], strides = [1, 1]} : vector<16x256xf32> to vector<1x256xf32>
    %26 = vector.extract_strided_slice %24 {offsets = [2, 0], sizes = [1, 256], strides = [1, 1]} : vector<16x256xf32> to vector<1x256xf32>
    %27 = vector.extract_strided_slice %24 {offsets = [4, 0], sizes = [1, 256], strides = [1, 1]} : vector<16x256xf32> to vector<1x256xf32>
    %28 = vector.extract_strided_slice %24 {offsets = [6, 0], sizes = [1, 256], strides = [1, 1]} : vector<16x256xf32> to vector<1x256xf32>
    %29 = vector.extract_strided_slice %24 {offsets = [8, 0], sizes = [1, 256], strides = [1, 1]} : vector<16x256xf32> to vector<1x256xf32>
    %30 = vector.extract_strided_slice %24 {offsets = [10, 0], sizes = [1, 256], strides = [1, 1]} : vector<16x256xf32> to vector<1x256xf32>
    %31 = vector.extract_strided_slice %24 {offsets = [12, 0], sizes = [1, 256], strides = [1, 1]} : vector<16x256xf32> to vector<1x256xf32>
    %32 = vector.extract_strided_slice %24 {offsets = [14, 0], sizes = [1, 256], strides = [1, 1]} : vector<16x256xf32> to vector<1x256xf32>
    %33 = tpu.concatenate %25, %26, %27, %28, %29, %30, %31, %32 in 0 : vector<1x256xf32>, vector<1x256xf32>, vector<1x256xf32>, vector<1x256xf32>, vector<1x256xf32>, vector<1x256xf32>, vector<1x256xf32>, vector<1x256xf32> -> vector<8x256xf32>
    %34 = vector.extract_strided_slice %24 {offsets = [1, 0], sizes = [1, 256], strides = [1, 1]} : vector<16x256xf32> to vector<1x256xf32>
    %35 = vector.extract_strided_slice %24 {offsets = [3, 0], sizes = [1, 256], strides = [1, 1]} : vector<16x256xf32> to vector<1x256xf32>
    %36 = vector.extract_strided_slice %24 {offsets = [5, 0], sizes = [1, 256], strides = [1, 1]} : vector<16x256xf32> to vector<1x256xf32>
    %37 = vector.extract_strided_slice %24 {offsets = [7, 0], sizes = [1, 256], strides = [1, 1]} : vector<16x256xf32> to vector<1x256xf32>
    %38 = vector.extract_strided_slice %24 {offsets = [9, 0], sizes = [1, 256], strides = [1, 1]} : vector<16x256xf32> to vector<1x256xf32>
    %39 = vector.extract_strided_slice %24 {offsets = [11, 0], sizes = [1, 256], strides = [1, 1]} : vector<16x256xf32> to vector<1x256xf32>
    %40 = vector.extract_strided_slice %24 {offsets = [13, 0], sizes = [1, 256], strides = [1, 1]} : vector<16x256xf32> to vector<1x256xf32>
    %41 = vector.extract_strided_slice %24 {offsets = [15, 0], sizes = [1, 256], strides = [1, 1]} : vector<16x256xf32> to vector<1x256xf32>
    %42 = tpu.concatenate %34, %35, %36, %37, %38, %39, %40, %41 in 0 : vector<1x256xf32>, vector<1x256xf32>, vector<1x256xf32>, vector<1x256xf32>, vector<1x256xf32>, vector<1x256xf32>, vector<1x256xf32>, vector<1x256xf32> -> vector<8x256xf32>
    %43 = arith.maximumf %33, %42 : vector<8x256xf32>
    %44 = vector.extract_strided_slice %43 {offsets = [0, 0], sizes = [8, 16], strides = [1, 1]} : vector<8x256xf32> to vector<8x16xf32>
    %45 = vector.extract_strided_slice %43 {offsets = [0, 32], sizes = [8, 16], strides = [1, 1]} : vector<8x256xf32> to vector<8x16xf32>
    %46 = vector.extract_strided_slice %43 {offsets = [0, 64], sizes = [8, 16], strides = [1, 1]} : vector<8x256xf32> to vector<8x16xf32>
    %47 = vector.extract_strided_slice %43 {offsets = [0, 96], sizes = [8, 16], strides = [1, 1]} : vector<8x256xf32> to vector<8x16xf32>
    %48 = vector.extract_strided_slice %43 {offsets = [0, 128], sizes = [8, 16], strides = [1, 1]} : vector<8x256xf32> to vector<8x16xf32>
    %49 = vector.extract_strided_slice %43 {offsets = [0, 160], sizes = [8, 16], strides = [1, 1]} : vector<8x256xf32> to vector<8x16xf32>
    %50 = vector.extract_strided_slice %43 {offsets = [0, 192], sizes = [8, 16], strides = [1, 1]} : vector<8x256xf32> to vector<8x16xf32>
    %51 = vector.extract_strided_slice %43 {offsets = [0, 224], sizes = [8, 16], strides = [1, 1]} : vector<8x256xf32> to vector<8x16xf32>
    %52 = tpu.concatenate %44, %45, %46, %47, %48, %49, %50, %51 in 1 : vector<8x16xf32>, vector<8x16xf32>, vector<8x16xf32>, vector<8x16xf32>, vector<8x16xf32>, vector<8x16xf32>, vector<8x16xf32>, vector<8x16xf32> -> vector<8x128xf32>
    %53 = vector.extract_strided_slice %43 {offsets = [0, 16], sizes = [8, 16], strides = [1, 1]} : vector<8x256xf32> to vector<8x16xf32>
    %54 = vector.extract_strided_slice %43 {offsets = [0, 48], sizes = [8, 16], strides = [1, 1]} : vector<8x256xf32> to vector<8x16xf32>
    %55 = vector.extract_strided_slice %43 {offsets = [0, 80], sizes = [8, 16], strides = [1, 1]} : vector<8x256xf32> to vector<8x16xf32>
    %56 = vector.extract_strided_slice %43 {offsets = [0, 112], sizes = [8, 16], strides = [1, 1]} : vector<8x256xf32> to vector<8x16xf32>
    %57 = vector.extract_strided_slice %43 {offsets = [0, 144], sizes = [8, 16], strides = [1, 1]} : vector<8x256xf32> to vector<8x16xf32>
    %58 = vector.extract_strided_slice %43 {offsets = [0, 176], sizes = [8, 16], strides = [1, 1]} : vector<8x256xf32> to vector<8x16xf32>
    %59 = vector.extract_strided_slice %43 {offsets = [0, 208], sizes = [8, 16], strides = [1, 1]} : vector<8x256xf32> to vector<8x16xf32>
    %60 = vector.extract_strided_slice %43 {offsets = [0, 240], sizes = [8, 16], strides = [1, 1]} : vector<8x256xf32> to vector<8x16xf32>
    %61 = tpu.concatenate %53, %54, %55, %56, %57, %58, %59, %60 in 1 : vector<8x16xf32>, vector<8x16xf32>, vector<8x16xf32>, vector<8x16xf32>, vector<8x16xf32>, vector<8x16xf32>, vector<8x16xf32>, vector<8x16xf32> -> vector<8x128xf32>
    %62 = arith.maximumf %52, %61 : vector<8x128xf32>
    %c0_15 = arith.constant 0 : index
    %c0_16 = arith.constant 0 : index
    %c0_17 = arith.constant 0 : index
    %63 = vector.load %arg3[%c0_15, %c0_16, %c0_17] : memref<1x8x128xf32, #tpu.memory_space<vmem>>, vector<1x8x128xf32>
    %64 = vector.shape_cast %63 : vector<1x8x128xf32> to vector<8x128xf32>
    %65 = vector.shape_cast %62 : vector<8x128xf32> to vector<1x8x128xf32>
    tpu.vector_store %arg3[%c0_15, %c0_16, %c0_17], %65 {strides = array<i32>} : memref<1x8x128xf32, #tpu.memory_space<vmem>>, vector<1x8x128xf32>,
    return
  }
  func.func @transform_0(%arg0: i32) -> (i32, i32, i32) {
    %c0_i32 = arith.constant 0 : i32
    %c0_i32_0 = arith.constant 0 : i32
    %c0_i32_1 = arith.constant 0 : i32
    return %arg0, %c0_i32, %c0_i32_0 : i32, i32, i32
  }
  func.func @transform_1(%arg0: i32) -> (i32, i32, i32) {
    %c0_i32 = arith.constant 0 : i32
    %c0_i32_0 = arith.constant 0 : i32
    %c0_i32_1 = arith.constant 0 : i32
    %c0_i32_2 = arith.constant 0 : i32
    return %c0_i32, %c0_i32_0, %c0_i32_1 : i32, i32, i32
  }
  func.func @transform_2(%arg0: i32) -> (i32, i32, i32) {
    %c0_i32 = arith.constant 0 : i32
    %c0_i32_0 = arith.constant 0 : i32
    %c0_i32_1 = arith.constant 0 : i32
    return %arg0, %c0_i32, %c0_i32_0 : i32, i32, i32
  }
}

module attributes {stable_mosaic.version = 11 : i64} {
  func.func @_conv_relu_pool_kernel(%arg0: i32, %arg1: memref<1x32x96xf32, #tpu.memory_space<vmem>>, %arg2: memref<3x102x512xbf16, #tpu.memory_space<vmem>>, %arg3: memref<1x16x256xf32, #tpu.memory_space<vmem>>) attributes {dimension_semantics = [#tpu.dimension_semantics<parallel>], iteration_bounds = array<i64: 2>, scalar_prefetch = 0 : i64, scratch_operands = 0 : i64, tpu.core_type = #tpu.core_type<tc>, window_params = [{transform_indices = @transform_0, window_bounds = array<i64: 1, 32, 96>}, {pipeline_mode = #tpu.pipeline_mode<synchronous>, transform_indices = @transform_1, window_bounds = array<i64: 3, 102, 512>}, {transform_indices = @transform_2, window_bounds = array<i64: 1, 16, 256>}]} {
    %cst = arith.constant 0.000000e+00 : bf16
    %0 = vector.broadcast %cst : bf16 to vector<32x3xbf16>
    %cst_0 = arith.constant 0.000000e+00 : bf16
    %1 = vector.broadcast %cst_0 : bf16 to vector<1x102xbf16>
    %c0 = arith.constant 0 : index
    %c0_1 = arith.constant 0 : index
    %c0_2 = arith.constant 0 : index
    %2 = vector.load %arg1[%c0, %c0_1, %c0_2] : memref<1x32x96xf32, #tpu.memory_space<vmem>>, vector<1x32x96xf32>
    %3 = vector.shape_cast %2 : vector<1x32x96xf32> to vector<32x96xf32>
    %4 = arith.truncf %3 : vector<32x96xf32> to vector<32x96xbf16>
    %5 = tpu.concatenate %0, %4, %0 in 1 : vector<32x3xbf16>, vector<32x96xbf16>, vector<32x3xbf16> -> vector<32x102xbf16>
    %6 = tpu.concatenate %1, %5, %1 in 0 : vector<1x102xbf16>, vector<32x102xbf16>, vector<1x102xbf16> -> vector<34x102xbf16>
    %cst_3 = arith.constant 0.000000e+00 : f32
    %7 = vector.broadcast %cst_3 : f32 to vector<32x512xf32>
    %8 = vector.extract_strided_slice %6 {offsets = [0, 0], sizes = [32, 102], strides = [1, 1]} : vector<34x102xbf16> to vector<32x102xbf16>
    %c0_4 = arith.constant 0 : index
    %c0_5 = arith.constant 0 : index
    %c0_6 = arith.constant 0 : index
    %9 = vector.load %arg2[%c0_4, %c0_5, %c0_6] : memref<3x102x512xbf16, #tpu.memory_space<vmem>>, vector<1x102x512xbf16>
    %10 = vector.shape_cast %9 : vector<1x102x512xbf16> to vector<102x512xbf16>
    %cst_7 = arith.constant dense<0.000000e+00> : vector<32x512xf32>
    %11 = tpu.matmul %8, %10, %cst_7 {dimension_numbers = #tpu.dot_dimension_numbers<[1], [0], [0], [1], [0, 0, 1, 1], [], []>} : vector<32x102xbf16>, vector<102x512xbf16>, vector<32x512xf32> -> vector<32x512xf32>
    %12 = arith.addf %7, %11 : vector<32x512xf32>
    %13 = vector.extract_strided_slice %6 {offsets = [1, 0], sizes = [32, 102], strides = [1, 1]} : vector<34x102xbf16> to vector<32x102xbf16>
    %c1 = arith.constant 1 : index
    %c0_8 = arith.constant 0 : index
    %c0_9 = arith.constant 0 : index
    %14 = vector.load %arg2[%c1, %c0_8, %c0_9] : memref<3x102x512xbf16, #tpu.memory_space<vmem>>, vector<1x102x512xbf16>
    %15 = vector.shape_cast %14 : vector<1x102x512xbf16> to vector<102x512xbf16>
    %cst_10 = arith.constant dense<0.000000e+00> : vector<32x512xf32>
    %16 = tpu.matmul %13, %15, %cst_10 {dimension_numbers = #tpu.dot_dimension_numbers<[1], [0], [0], [1], [0, 0, 1, 1], [], []>} : vector<32x102xbf16>, vector<102x512xbf16>, vector<32x512xf32> -> vector<32x512xf32>
    %17 = arith.addf %12, %16 : vector<32x512xf32>
    %18 = vector.extract_strided_slice %6 {offsets = [2, 0], sizes = [32, 102], strides = [1, 1]} : vector<34x102xbf16> to vector<32x102xbf16>
    %c2 = arith.constant 2 : index
    %c0_11 = arith.constant 0 : index
    %c0_12 = arith.constant 0 : index
    %19 = vector.load %arg2[%c2, %c0_11, %c0_12] : memref<3x102x512xbf16, #tpu.memory_space<vmem>>, vector<1x102x512xbf16>
    %20 = vector.shape_cast %19 : vector<1x102x512xbf16> to vector<102x512xbf16>
    %cst_13 = arith.constant dense<0.000000e+00> : vector<32x512xf32>
    %21 = tpu.matmul %18, %20, %cst_13 {dimension_numbers = #tpu.dot_dimension_numbers<[1], [0], [0], [1], [0, 0, 1, 1], [], []>} : vector<32x102xbf16>, vector<102x512xbf16>, vector<32x512xf32> -> vector<32x512xf32>
    %22 = arith.addf %17, %21 : vector<32x512xf32>
    %cst_14 = arith.constant 0.000000e+00 : f32
    %23 = vector.broadcast %cst_14 : f32 to vector<32x512xf32>
    %24 = arith.maximumf %22, %23 : vector<32x512xf32>
    %25 = vector.extract_strided_slice %24 {offsets = [0, 0], sizes = [1, 512], strides = [1, 1]} : vector<32x512xf32> to vector<1x512xf32>
    %26 = vector.extract_strided_slice %24 {offsets = [2, 0], sizes = [1, 512], strides = [1, 1]} : vector<32x512xf32> to vector<1x512xf32>
    %27 = vector.extract_strided_slice %24 {offsets = [4, 0], sizes = [1, 512], strides = [1, 1]} : vector<32x512xf32> to vector<1x512xf32>
    %28 = vector.extract_strided_slice %24 {offsets = [6, 0], sizes = [1, 512], strides = [1, 1]} : vector<32x512xf32> to vector<1x512xf32>
    %29 = vector.extract_strided_slice %24 {offsets = [8, 0], sizes = [1, 512], strides = [1, 1]} : vector<32x512xf32> to vector<1x512xf32>
    %30 = vector.extract_strided_slice %24 {offsets = [10, 0], sizes = [1, 512], strides = [1, 1]} : vector<32x512xf32> to vector<1x512xf32>
    %31 = vector.extract_strided_slice %24 {offsets = [12, 0], sizes = [1, 512], strides = [1, 1]} : vector<32x512xf32> to vector<1x512xf32>
    %32 = vector.extract_strided_slice %24 {offsets = [14, 0], sizes = [1, 512], strides = [1, 1]} : vector<32x512xf32> to vector<1x512xf32>
    %33 = vector.extract_strided_slice %24 {offsets = [16, 0], sizes = [1, 512], strides = [1, 1]} : vector<32x512xf32> to vector<1x512xf32>
    %34 = vector.extract_strided_slice %24 {offsets = [18, 0], sizes = [1, 512], strides = [1, 1]} : vector<32x512xf32> to vector<1x512xf32>
    %35 = vector.extract_strided_slice %24 {offsets = [20, 0], sizes = [1, 512], strides = [1, 1]} : vector<32x512xf32> to vector<1x512xf32>
    %36 = vector.extract_strided_slice %24 {offsets = [22, 0], sizes = [1, 512], strides = [1, 1]} : vector<32x512xf32> to vector<1x512xf32>
    %37 = vector.extract_strided_slice %24 {offsets = [24, 0], sizes = [1, 512], strides = [1, 1]} : vector<32x512xf32> to vector<1x512xf32>
    %38 = vector.extract_strided_slice %24 {offsets = [26, 0], sizes = [1, 512], strides = [1, 1]} : vector<32x512xf32> to vector<1x512xf32>
    %39 = vector.extract_strided_slice %24 {offsets = [28, 0], sizes = [1, 512], strides = [1, 1]} : vector<32x512xf32> to vector<1x512xf32>
    %40 = vector.extract_strided_slice %24 {offsets = [30, 0], sizes = [1, 512], strides = [1, 1]} : vector<32x512xf32> to vector<1x512xf32>
    %41 = tpu.concatenate %25, %26, %27, %28, %29, %30, %31, %32, %33, %34, %35, %36, %37, %38, %39, %40 in 0 : vector<1x512xf32>, vector<1x512xf32>, vector<1x512xf32>, vector<1x512xf32>, vector<1x512xf32>, vector<1x512xf32>, vector<1x512xf32>, vector<1x512xf32>, vector<1x512xf32>, vector<1x512xf32>, vector<1x512xf32>, vector<1x512xf32>, vector<1x512xf32>, vector<1x512xf32>, vector<1x512xf32>, vector<1x512xf32> -> vector<16x512xf32>
    %42 = vector.extract_strided_slice %24 {offsets = [1, 0], sizes = [1, 512], strides = [1, 1]} : vector<32x512xf32> to vector<1x512xf32>
    %43 = vector.extract_strided_slice %24 {offsets = [3, 0], sizes = [1, 512], strides = [1, 1]} : vector<32x512xf32> to vector<1x512xf32>
    %44 = vector.extract_strided_slice %24 {offsets = [5, 0], sizes = [1, 512], strides = [1, 1]} : vector<32x512xf32> to vector<1x512xf32>
    %45 = vector.extract_strided_slice %24 {offsets = [7, 0], sizes = [1, 512], strides = [1, 1]} : vector<32x512xf32> to vector<1x512xf32>
    %46 = vector.extract_strided_slice %24 {offsets = [9, 0], sizes = [1, 512], strides = [1, 1]} : vector<32x512xf32> to vector<1x512xf32>
    %47 = vector.extract_strided_slice %24 {offsets = [11, 0], sizes = [1, 512], strides = [1, 1]} : vector<32x512xf32> to vector<1x512xf32>
    %48 = vector.extract_strided_slice %24 {offsets = [13, 0], sizes = [1, 512], strides = [1, 1]} : vector<32x512xf32> to vector<1x512xf32>
    %49 = vector.extract_strided_slice %24 {offsets = [15, 0], sizes = [1, 512], strides = [1, 1]} : vector<32x512xf32> to vector<1x512xf32>
    %50 = vector.extract_strided_slice %24 {offsets = [17, 0], sizes = [1, 512], strides = [1, 1]} : vector<32x512xf32> to vector<1x512xf32>
    %51 = vector.extract_strided_slice %24 {offsets = [19, 0], sizes = [1, 512], strides = [1, 1]} : vector<32x512xf32> to vector<1x512xf32>
    %52 = vector.extract_strided_slice %24 {offsets = [21, 0], sizes = [1, 512], strides = [1, 1]} : vector<32x512xf32> to vector<1x512xf32>
    %53 = vector.extract_strided_slice %24 {offsets = [23, 0], sizes = [1, 512], strides = [1, 1]} : vector<32x512xf32> to vector<1x512xf32>
    %54 = vector.extract_strided_slice %24 {offsets = [25, 0], sizes = [1, 512], strides = [1, 1]} : vector<32x512xf32> to vector<1x512xf32>
    %55 = vector.extract_strided_slice %24 {offsets = [27, 0], sizes = [1, 512], strides = [1, 1]} : vector<32x512xf32> to vector<1x512xf32>
    %56 = vector.extract_strided_slice %24 {offsets = [29, 0], sizes = [1, 512], strides = [1, 1]} : vector<32x512xf32> to vector<1x512xf32>
    %57 = vector.extract_strided_slice %24 {offsets = [31, 0], sizes = [1, 512], strides = [1, 1]} : vector<32x512xf32> to vector<1x512xf32>
    %58 = tpu.concatenate %42, %43, %44, %45, %46, %47, %48, %49, %50, %51, %52, %53, %54, %55, %56, %57 in 0 : vector<1x512xf32>, vector<1x512xf32>, vector<1x512xf32>, vector<1x512xf32>, vector<1x512xf32>, vector<1x512xf32>, vector<1x512xf32>, vector<1x512xf32>, vector<1x512xf32>, vector<1x512xf32>, vector<1x512xf32>, vector<1x512xf32>, vector<1x512xf32>, vector<1x512xf32>, vector<1x512xf32>, vector<1x512xf32> -> vector<16x512xf32>
    %59 = arith.maximumf %41, %58 : vector<16x512xf32>
    %60 = vector.extract_strided_slice %59 {offsets = [0, 0], sizes = [16, 16], strides = [1, 1]} : vector<16x512xf32> to vector<16x16xf32>
    %61 = vector.extract_strided_slice %59 {offsets = [0, 32], sizes = [16, 16], strides = [1, 1]} : vector<16x512xf32> to vector<16x16xf32>
    %62 = vector.extract_strided_slice %59 {offsets = [0, 64], sizes = [16, 16], strides = [1, 1]} : vector<16x512xf32> to vector<16x16xf32>
    %63 = vector.extract_strided_slice %59 {offsets = [0, 96], sizes = [16, 16], strides = [1, 1]} : vector<16x512xf32> to vector<16x16xf32>
    %64 = vector.extract_strided_slice %59 {offsets = [0, 128], sizes = [16, 16], strides = [1, 1]} : vector<16x512xf32> to vector<16x16xf32>
    %65 = vector.extract_strided_slice %59 {offsets = [0, 160], sizes = [16, 16], strides = [1, 1]} : vector<16x512xf32> to vector<16x16xf32>
    %66 = vector.extract_strided_slice %59 {offsets = [0, 192], sizes = [16, 16], strides = [1, 1]} : vector<16x512xf32> to vector<16x16xf32>
    %67 = vector.extract_strided_slice %59 {offsets = [0, 224], sizes = [16, 16], strides = [1, 1]} : vector<16x512xf32> to vector<16x16xf32>
    %68 = vector.extract_strided_slice %59 {offsets = [0, 256], sizes = [16, 16], strides = [1, 1]} : vector<16x512xf32> to vector<16x16xf32>
    %69 = vector.extract_strided_slice %59 {offsets = [0, 288], sizes = [16, 16], strides = [1, 1]} : vector<16x512xf32> to vector<16x16xf32>
    %70 = vector.extract_strided_slice %59 {offsets = [0, 320], sizes = [16, 16], strides = [1, 1]} : vector<16x512xf32> to vector<16x16xf32>
    %71 = vector.extract_strided_slice %59 {offsets = [0, 352], sizes = [16, 16], strides = [1, 1]} : vector<16x512xf32> to vector<16x16xf32>
    %72 = vector.extract_strided_slice %59 {offsets = [0, 384], sizes = [16, 16], strides = [1, 1]} : vector<16x512xf32> to vector<16x16xf32>
    %73 = vector.extract_strided_slice %59 {offsets = [0, 416], sizes = [16, 16], strides = [1, 1]} : vector<16x512xf32> to vector<16x16xf32>
    %74 = vector.extract_strided_slice %59 {offsets = [0, 448], sizes = [16, 16], strides = [1, 1]} : vector<16x512xf32> to vector<16x16xf32>
    %75 = vector.extract_strided_slice %59 {offsets = [0, 480], sizes = [16, 16], strides = [1, 1]} : vector<16x512xf32> to vector<16x16xf32>
    %76 = tpu.concatenate %60, %61, %62, %63, %64, %65, %66, %67, %68, %69, %70, %71, %72, %73, %74, %75 in 1 : vector<16x16xf32>, vector<16x16xf32>, vector<16x16xf32>, vector<16x16xf32>, vector<16x16xf32>, vector<16x16xf32>, vector<16x16xf32>, vector<16x16xf32>, vector<16x16xf32>, vector<16x16xf32>, vector<16x16xf32>, vector<16x16xf32>, vector<16x16xf32>, vector<16x16xf32>, vector<16x16xf32>, vector<16x16xf32> -> vector<16x256xf32>
    %77 = vector.extract_strided_slice %59 {offsets = [0, 16], sizes = [16, 16], strides = [1, 1]} : vector<16x512xf32> to vector<16x16xf32>
    %78 = vector.extract_strided_slice %59 {offsets = [0, 48], sizes = [16, 16], strides = [1, 1]} : vector<16x512xf32> to vector<16x16xf32>
    %79 = vector.extract_strided_slice %59 {offsets = [0, 80], sizes = [16, 16], strides = [1, 1]} : vector<16x512xf32> to vector<16x16xf32>
    %80 = vector.extract_strided_slice %59 {offsets = [0, 112], sizes = [16, 16], strides = [1, 1]} : vector<16x512xf32> to vector<16x16xf32>
    %81 = vector.extract_strided_slice %59 {offsets = [0, 144], sizes = [16, 16], strides = [1, 1]} : vector<16x512xf32> to vector<16x16xf32>
    %82 = vector.extract_strided_slice %59 {offsets = [0, 176], sizes = [16, 16], strides = [1, 1]} : vector<16x512xf32> to vector<16x16xf32>
    %83 = vector.extract_strided_slice %59 {offsets = [0, 208], sizes = [16, 16], strides = [1, 1]} : vector<16x512xf32> to vector<16x16xf32>
    %84 = vector.extract_strided_slice %59 {offsets = [0, 240], sizes = [16, 16], strides = [1, 1]} : vector<16x512xf32> to vector<16x16xf32>
    %85 = vector.extract_strided_slice %59 {offsets = [0, 272], sizes = [16, 16], strides = [1, 1]} : vector<16x512xf32> to vector<16x16xf32>
    %86 = vector.extract_strided_slice %59 {offsets = [0, 304], sizes = [16, 16], strides = [1, 1]} : vector<16x512xf32> to vector<16x16xf32>
    %87 = vector.extract_strided_slice %59 {offsets = [0, 336], sizes = [16, 16], strides = [1, 1]} : vector<16x512xf32> to vector<16x16xf32>
    %88 = vector.extract_strided_slice %59 {offsets = [0, 368], sizes = [16, 16], strides = [1, 1]} : vector<16x512xf32> to vector<16x16xf32>
    %89 = vector.extract_strided_slice %59 {offsets = [0, 400], sizes = [16, 16], strides = [1, 1]} : vector<16x512xf32> to vector<16x16xf32>
    %90 = vector.extract_strided_slice %59 {offsets = [0, 432], sizes = [16, 16], strides = [1, 1]} : vector<16x512xf32> to vector<16x16xf32>
    %91 = vector.extract_strided_slice %59 {offsets = [0, 464], sizes = [16, 16], strides = [1, 1]} : vector<16x512xf32> to vector<16x16xf32>
    %92 = vector.extract_strided_slice %59 {offsets = [0, 496], sizes = [16, 16], strides = [1, 1]} : vector<16x512xf32> to vector<16x16xf32>
    %93 = tpu.concatenate %77, %78, %79, %80, %81, %82, %83, %84, %85, %86, %87, %88, %89, %90, %91, %92 in 1 : vector<16x16xf32>, vector<16x16xf32>, vector<16x16xf32>, vector<16x16xf32>, vector<16x16xf32>, vector<16x16xf32>, vector<16x16xf32>, vector<16x16xf32>, vector<16x16xf32>, vector<16x16xf32>, vector<16x16xf32>, vector<16x16xf32>, vector<16x16xf32>, vector<16x16xf32>, vector<16x16xf32>, vector<16x16xf32> -> vector<16x256xf32>
    %94 = arith.maximumf %76, %93 : vector<16x256xf32>
    %c0_15 = arith.constant 0 : index
    %c0_16 = arith.constant 0 : index
    %c0_17 = arith.constant 0 : index
    %95 = vector.load %arg3[%c0_15, %c0_16, %c0_17] : memref<1x16x256xf32, #tpu.memory_space<vmem>>, vector<1x16x256xf32>
    %96 = vector.shape_cast %95 : vector<1x16x256xf32> to vector<16x256xf32>
    %97 = vector.shape_cast %94 : vector<16x256xf32> to vector<1x16x256xf32>
    tpu.vector_store %arg3[%c0_15, %c0_16, %c0_17], %97 {strides = array<i32>} : memref<1x16x256xf32, #tpu.memory_space<vmem>>, vector<1x16x256xf32>,
    return
  }
  func.func @transform_0(%arg0: i32) -> (i32, i32, i32) {
    %c0_i32 = arith.constant 0 : i32
    %c0_i32_0 = arith.constant 0 : i32
    %c0_i32_1 = arith.constant 0 : i32
    return %arg0, %c0_i32, %c0_i32_0 : i32, i32, i32
  }
  func.func @transform_1(%arg0: i32) -> (i32, i32, i32) {
    %c0_i32 = arith.constant 0 : i32
    %c0_i32_0 = arith.constant 0 : i32
    %c0_i32_1 = arith.constant 0 : i32
    %c0_i32_2 = arith.constant 0 : i32
    return %c0_i32, %c0_i32_0, %c0_i32_1 : i32, i32, i32
  }
  func.func @transform_2(%arg0: i32) -> (i32, i32, i32) {
    %c0_i32 = arith.constant 0 : i32
    %c0_i32_0 = arith.constant 0 : i32
    %c0_i32_1 = arith.constant 0 : i32
    return %arg0, %c0_i32, %c0_i32_0 : i32, i32, i32
  }
}

module attributes {stable_mosaic.version = 11 : i64} {
  func.func @_conv_relu_pool_kernel(%arg0: i32, %arg1: memref<1x8x128xf32, #tpu.memory_space<vmem>>, %arg2: memref<3x160x128xbf16, #tpu.memory_space<vmem>>, %arg3: memref<1x4x64xf32, #tpu.memory_space<vmem>>) attributes {dimension_semantics = [#tpu.dimension_semantics<parallel>], iteration_bounds = array<i64: 2>, scalar_prefetch = 0 : i64, scratch_operands = 0 : i64, tpu.core_type = #tpu.core_type<tc>, window_params = [{transform_indices = @transform_0, window_bounds = array<i64: 1, 8, 128>}, {pipeline_mode = #tpu.pipeline_mode<synchronous>, transform_indices = @transform_1, window_bounds = array<i64: 3, 160, 128>}, {transform_indices = @transform_2, window_bounds = array<i64: 1, 4, 64>}]} {
    %cst = arith.constant 0.000000e+00 : bf16
    %0 = vector.broadcast %cst : bf16 to vector<8x16xbf16>
    %cst_0 = arith.constant 0.000000e+00 : bf16
    %1 = vector.broadcast %cst_0 : bf16 to vector<1x160xbf16>
    %c0 = arith.constant 0 : index
    %c0_1 = arith.constant 0 : index
    %c0_2 = arith.constant 0 : index
    %2 = vector.load %arg1[%c0, %c0_1, %c0_2] : memref<1x8x128xf32, #tpu.memory_space<vmem>>, vector<1x8x128xf32>
    %3 = vector.shape_cast %2 : vector<1x8x128xf32> to vector<8x128xf32>
    %4 = arith.truncf %3 : vector<8x128xf32> to vector<8x128xbf16>
    %5 = tpu.concatenate %0, %4, %0 in 1 : vector<8x16xbf16>, vector<8x128xbf16>, vector<8x16xbf16> -> vector<8x160xbf16>
    %6 = tpu.concatenate %1, %5, %1 in 0 : vector<1x160xbf16>, vector<8x160xbf16>, vector<1x160xbf16> -> vector<10x160xbf16>
    %cst_3 = arith.constant 0.000000e+00 : f32
    %7 = vector.broadcast %cst_3 : f32 to vector<8x128xf32>
    %8 = vector.extract_strided_slice %6 {offsets = [0, 0], sizes = [8, 160], strides = [1, 1]} : vector<10x160xbf16> to vector<8x160xbf16>
    %c0_4 = arith.constant 0 : index
    %c0_5 = arith.constant 0 : index
    %c0_6 = arith.constant 0 : index
    %9 = vector.load %arg2[%c0_4, %c0_5, %c0_6] : memref<3x160x128xbf16, #tpu.memory_space<vmem>>, vector<1x160x128xbf16>
    %10 = vector.shape_cast %9 : vector<1x160x128xbf16> to vector<160x128xbf16>
    %cst_7 = arith.constant dense<0.000000e+00> : vector<8x128xf32>
    %11 = tpu.matmul %8, %10, %cst_7 {dimension_numbers = #tpu.dot_dimension_numbers<[1], [0], [0], [1], [0, 0, 1, 1], [], []>} : vector<8x160xbf16>, vector<160x128xbf16>, vector<8x128xf32> -> vector<8x128xf32>
    %12 = arith.addf %7, %11 : vector<8x128xf32>
    %13 = vector.extract_strided_slice %6 {offsets = [1, 0], sizes = [8, 160], strides = [1, 1]} : vector<10x160xbf16> to vector<8x160xbf16>
    %c1 = arith.constant 1 : index
    %c0_8 = arith.constant 0 : index
    %c0_9 = arith.constant 0 : index
    %14 = vector.load %arg2[%c1, %c0_8, %c0_9] : memref<3x160x128xbf16, #tpu.memory_space<vmem>>, vector<1x160x128xbf16>
    %15 = vector.shape_cast %14 : vector<1x160x128xbf16> to vector<160x128xbf16>
    %cst_10 = arith.constant dense<0.000000e+00> : vector<8x128xf32>
    %16 = tpu.matmul %13, %15, %cst_10 {dimension_numbers = #tpu.dot_dimension_numbers<[1], [0], [0], [1], [0, 0, 1, 1], [], []>} : vector<8x160xbf16>, vector<160x128xbf16>, vector<8x128xf32> -> vector<8x128xf32>
    %17 = arith.addf %12, %16 : vector<8x128xf32>
    %18 = vector.extract_strided_slice %6 {offsets = [2, 0], sizes = [8, 160], strides = [1, 1]} : vector<10x160xbf16> to vector<8x160xbf16>
    %c2 = arith.constant 2 : index
    %c0_11 = arith.constant 0 : index
    %c0_12 = arith.constant 0 : index
    %19 = vector.load %arg2[%c2, %c0_11, %c0_12] : memref<3x160x128xbf16, #tpu.memory_space<vmem>>, vector<1x160x128xbf16>
    %20 = vector.shape_cast %19 : vector<1x160x128xbf16> to vector<160x128xbf16>
    %cst_13 = arith.constant dense<0.000000e+00> : vector<8x128xf32>
    %21 = tpu.matmul %18, %20, %cst_13 {dimension_numbers = #tpu.dot_dimension_numbers<[1], [0], [0], [1], [0, 0, 1, 1], [], []>} : vector<8x160xbf16>, vector<160x128xbf16>, vector<8x128xf32> -> vector<8x128xf32>
    %22 = arith.addf %17, %21 : vector<8x128xf32>
    %cst_14 = arith.constant 0.000000e+00 : f32
    %23 = vector.broadcast %cst_14 : f32 to vector<8x128xf32>
    %24 = arith.maximumf %22, %23 : vector<8x128xf32>
    %25 = vector.extract_strided_slice %24 {offsets = [0, 0], sizes = [1, 128], strides = [1, 1]} : vector<8x128xf32> to vector<1x128xf32>
    %26 = vector.extract_strided_slice %24 {offsets = [2, 0], sizes = [1, 128], strides = [1, 1]} : vector<8x128xf32> to vector<1x128xf32>
    %27 = vector.extract_strided_slice %24 {offsets = [4, 0], sizes = [1, 128], strides = [1, 1]} : vector<8x128xf32> to vector<1x128xf32>
    %28 = vector.extract_strided_slice %24 {offsets = [6, 0], sizes = [1, 128], strides = [1, 1]} : vector<8x128xf32> to vector<1x128xf32>
    %29 = tpu.concatenate %25, %26, %27, %28 in 0 : vector<1x128xf32>, vector<1x128xf32>, vector<1x128xf32>, vector<1x128xf32> -> vector<4x128xf32>
    %30 = vector.extract_strided_slice %24 {offsets = [1, 0], sizes = [1, 128], strides = [1, 1]} : vector<8x128xf32> to vector<1x128xf32>
    %31 = vector.extract_strided_slice %24 {offsets = [3, 0], sizes = [1, 128], strides = [1, 1]} : vector<8x128xf32> to vector<1x128xf32>
    %32 = vector.extract_strided_slice %24 {offsets = [5, 0], sizes = [1, 128], strides = [1, 1]} : vector<8x128xf32> to vector<1x128xf32>
    %33 = vector.extract_strided_slice %24 {offsets = [7, 0], sizes = [1, 128], strides = [1, 1]} : vector<8x128xf32> to vector<1x128xf32>
    %34 = tpu.concatenate %30, %31, %32, %33 in 0 : vector<1x128xf32>, vector<1x128xf32>, vector<1x128xf32>, vector<1x128xf32> -> vector<4x128xf32>
    %35 = arith.maximumf %29, %34 : vector<4x128xf32>
    %36 = vector.extract_strided_slice %35 {offsets = [0, 0], sizes = [4, 16], strides = [1, 1]} : vector<4x128xf32> to vector<4x16xf32>
    %37 = vector.extract_strided_slice %35 {offsets = [0, 32], sizes = [4, 16], strides = [1, 1]} : vector<4x128xf32> to vector<4x16xf32>
    %38 = vector.extract_strided_slice %35 {offsets = [0, 64], sizes = [4, 16], strides = [1, 1]} : vector<4x128xf32> to vector<4x16xf32>
    %39 = vector.extract_strided_slice %35 {offsets = [0, 96], sizes = [4, 16], strides = [1, 1]} : vector<4x128xf32> to vector<4x16xf32>
    %40 = tpu.concatenate %36, %37, %38, %39 in 1 : vector<4x16xf32>, vector<4x16xf32>, vector<4x16xf32>, vector<4x16xf32> -> vector<4x64xf32>
    %41 = vector.extract_strided_slice %35 {offsets = [0, 16], sizes = [4, 16], strides = [1, 1]} : vector<4x128xf32> to vector<4x16xf32>
    %42 = vector.extract_strided_slice %35 {offsets = [0, 48], sizes = [4, 16], strides = [1, 1]} : vector<4x128xf32> to vector<4x16xf32>
    %43 = vector.extract_strided_slice %35 {offsets = [0, 80], sizes = [4, 16], strides = [1, 1]} : vector<4x128xf32> to vector<4x16xf32>
    %44 = vector.extract_strided_slice %35 {offsets = [0, 112], sizes = [4, 16], strides = [1, 1]} : vector<4x128xf32> to vector<4x16xf32>
    %45 = tpu.concatenate %41, %42, %43, %44 in 1 : vector<4x16xf32>, vector<4x16xf32>, vector<4x16xf32>, vector<4x16xf32> -> vector<4x64xf32>
    %46 = arith.maximumf %40, %45 : vector<4x64xf32>
    %c0_15 = arith.constant 0 : index
    %c0_16 = arith.constant 0 : index
    %c0_17 = arith.constant 0 : index
    %47 = vector.load %arg3[%c0_15, %c0_16, %c0_17] : memref<1x4x64xf32, #tpu.memory_space<vmem>>, vector<1x4x64xf32>
    %48 = vector.shape_cast %47 : vector<1x4x64xf32> to vector<4x64xf32>
    %49 = vector.shape_cast %46 : vector<4x64xf32> to vector<1x4x64xf32>
    tpu.vector_store %arg3[%c0_15, %c0_16, %c0_17], %49 {strides = array<i32>} : memref<1x4x64xf32, #tpu.memory_space<vmem>>, vector<1x4x64xf32>,
    return
  }
  func.func @transform_0(%arg0: i32) -> (i32, i32, i32) {
    %c0_i32 = arith.constant 0 : i32
    %c0_i32_0 = arith.constant 0 : i32
    %c0_i32_1 = arith.constant 0 : i32
    return %arg0, %c0_i32, %c0_i32_0 : i32, i32, i32
  }
  func.func @transform_1(%arg0: i32) -> (i32, i32, i32) {
    %c0_i32 = arith.constant 0 : i32
    %c0_i32_0 = arith.constant 0 : i32
    %c0_i32_1 = arith.constant 0 : i32
    %c0_i32_2 = arith.constant 0 : i32
    return %c0_i32, %c0_i32_0, %c0_i32_1 : i32, i32, i32
  }
  func.func @transform_2(%arg0: i32) -> (i32, i32, i32) {
    %c0_i32 = arith.constant 0 : i32
    %c0_i32_0 = arith.constant 0 : i32
    %c0_i32_1 = arith.constant 0 : i32
    return %arg0, %c0_i32, %c0_i32_0 : i32, i32, i32
  }
}

module attributes {stable_mosaic.version = 11 : i64} {
  func.func @_conv_relu_pool_kernel(%arg0: i32, %arg1: memref<1x4x64xf32, #tpu.memory_space<vmem>>, %arg2: memref<3x96x64xbf16, #tpu.memory_space<vmem>>, %arg3: memref<1x2x32xf32, #tpu.memory_space<vmem>>) attributes {dimension_semantics = [#tpu.dimension_semantics<parallel>], iteration_bounds = array<i64: 2>, scalar_prefetch = 0 : i64, scratch_operands = 0 : i64, tpu.core_type = #tpu.core_type<tc>, window_params = [{transform_indices = @transform_0, window_bounds = array<i64: 1, 4, 64>}, {pipeline_mode = #tpu.pipeline_mode<synchronous>, transform_indices = @transform_1, window_bounds = array<i64: 3, 96, 64>}, {transform_indices = @transform_2, window_bounds = array<i64: 1, 2, 32>}]} {
    %cst = arith.constant 0.000000e+00 : bf16
    %0 = vector.broadcast %cst : bf16 to vector<4x16xbf16>
    %cst_0 = arith.constant 0.000000e+00 : bf16
    %1 = vector.broadcast %cst_0 : bf16 to vector<1x96xbf16>
    %c0 = arith.constant 0 : index
    %c0_1 = arith.constant 0 : index
    %c0_2 = arith.constant 0 : index
    %2 = vector.load %arg1[%c0, %c0_1, %c0_2] : memref<1x4x64xf32, #tpu.memory_space<vmem>>, vector<1x4x64xf32>
    %3 = vector.shape_cast %2 : vector<1x4x64xf32> to vector<4x64xf32>
    %4 = arith.truncf %3 : vector<4x64xf32> to vector<4x64xbf16>
    %5 = tpu.concatenate %0, %4, %0 in 1 : vector<4x16xbf16>, vector<4x64xbf16>, vector<4x16xbf16> -> vector<4x96xbf16>
    %6 = tpu.concatenate %1, %5, %1 in 0 : vector<1x96xbf16>, vector<4x96xbf16>, vector<1x96xbf16> -> vector<6x96xbf16>
    %cst_3 = arith.constant 0.000000e+00 : f32
    %7 = vector.broadcast %cst_3 : f32 to vector<4x64xf32>
    %8 = vector.extract_strided_slice %6 {offsets = [0, 0], sizes = [4, 96], strides = [1, 1]} : vector<6x96xbf16> to vector<4x96xbf16>
    %c0_4 = arith.constant 0 : index
    %c0_5 = arith.constant 0 : index
    %c0_6 = arith.constant 0 : index
    %9 = vector.load %arg2[%c0_4, %c0_5, %c0_6] : memref<3x96x64xbf16, #tpu.memory_space<vmem>>, vector<1x96x64xbf16>
    %10 = vector.shape_cast %9 : vector<1x96x64xbf16> to vector<96x64xbf16>
    %cst_7 = arith.constant dense<0.000000e+00> : vector<4x64xf32>
    %11 = tpu.matmul %8, %10, %cst_7 {dimension_numbers = #tpu.dot_dimension_numbers<[1], [0], [0], [1], [0, 0, 1, 1], [], []>} : vector<4x96xbf16>, vector<96x64xbf16>, vector<4x64xf32> -> vector<4x64xf32>
    %12 = arith.addf %7, %11 : vector<4x64xf32>
    %13 = vector.extract_strided_slice %6 {offsets = [1, 0], sizes = [4, 96], strides = [1, 1]} : vector<6x96xbf16> to vector<4x96xbf16>
    %c1 = arith.constant 1 : index
    %c0_8 = arith.constant 0 : index
    %c0_9 = arith.constant 0 : index
    %14 = vector.load %arg2[%c1, %c0_8, %c0_9] : memref<3x96x64xbf16, #tpu.memory_space<vmem>>, vector<1x96x64xbf16>
    %15 = vector.shape_cast %14 : vector<1x96x64xbf16> to vector<96x64xbf16>
    %cst_10 = arith.constant dense<0.000000e+00> : vector<4x64xf32>
    %16 = tpu.matmul %13, %15, %cst_10 {dimension_numbers = #tpu.dot_dimension_numbers<[1], [0], [0], [1], [0, 0, 1, 1], [], []>} : vector<4x96xbf16>, vector<96x64xbf16>, vector<4x64xf32> -> vector<4x64xf32>
    %17 = arith.addf %12, %16 : vector<4x64xf32>
    %18 = vector.extract_strided_slice %6 {offsets = [2, 0], sizes = [4, 96], strides = [1, 1]} : vector<6x96xbf16> to vector<4x96xbf16>
    %c2 = arith.constant 2 : index
    %c0_11 = arith.constant 0 : index
    %c0_12 = arith.constant 0 : index
    %19 = vector.load %arg2[%c2, %c0_11, %c0_12] : memref<3x96x64xbf16, #tpu.memory_space<vmem>>, vector<1x96x64xbf16>
    %20 = vector.shape_cast %19 : vector<1x96x64xbf16> to vector<96x64xbf16>
    %cst_13 = arith.constant dense<0.000000e+00> : vector<4x64xf32>
    %21 = tpu.matmul %18, %20, %cst_13 {dimension_numbers = #tpu.dot_dimension_numbers<[1], [0], [0], [1], [0, 0, 1, 1], [], []>} : vector<4x96xbf16>, vector<96x64xbf16>, vector<4x64xf32> -> vector<4x64xf32>
    %22 = arith.addf %17, %21 : vector<4x64xf32>
    %cst_14 = arith.constant 0.000000e+00 : f32
    %23 = vector.broadcast %cst_14 : f32 to vector<4x64xf32>
    %24 = arith.maximumf %22, %23 : vector<4x64xf32>
    %25 = vector.extract_strided_slice %24 {offsets = [0, 0], sizes = [1, 64], strides = [1, 1]} : vector<4x64xf32> to vector<1x64xf32>
    %26 = vector.extract_strided_slice %24 {offsets = [2, 0], sizes = [1, 64], strides = [1, 1]} : vector<4x64xf32> to vector<1x64xf32>
    %27 = tpu.concatenate %25, %26 in 0 : vector<1x64xf32>, vector<1x64xf32> -> vector<2x64xf32>
    %28 = vector.extract_strided_slice %24 {offsets = [1, 0], sizes = [1, 64], strides = [1, 1]} : vector<4x64xf32> to vector<1x64xf32>
    %29 = vector.extract_strided_slice %24 {offsets = [3, 0], sizes = [1, 64], strides = [1, 1]} : vector<4x64xf32> to vector<1x64xf32>
    %30 = tpu.concatenate %28, %29 in 0 : vector<1x64xf32>, vector<1x64xf32> -> vector<2x64xf32>
    %31 = arith.maximumf %27, %30 : vector<2x64xf32>
    %32 = vector.extract_strided_slice %31 {offsets = [0, 0], sizes = [2, 16], strides = [1, 1]} : vector<2x64xf32> to vector<2x16xf32>
    %33 = vector.extract_strided_slice %31 {offsets = [0, 32], sizes = [2, 16], strides = [1, 1]} : vector<2x64xf32> to vector<2x16xf32>
    %34 = tpu.concatenate %32, %33 in 1 : vector<2x16xf32>, vector<2x16xf32> -> vector<2x32xf32>
    %35 = vector.extract_strided_slice %31 {offsets = [0, 16], sizes = [2, 16], strides = [1, 1]} : vector<2x64xf32> to vector<2x16xf32>
    %36 = vector.extract_strided_slice %31 {offsets = [0, 48], sizes = [2, 16], strides = [1, 1]} : vector<2x64xf32> to vector<2x16xf32>
    %37 = tpu.concatenate %35, %36 in 1 : vector<2x16xf32>, vector<2x16xf32> -> vector<2x32xf32>
    %38 = arith.maximumf %34, %37 : vector<2x32xf32>
    %c0_15 = arith.constant 0 : index
    %c0_16 = arith.constant 0 : index
    %c0_17 = arith.constant 0 : index
    %39 = vector.load %arg3[%c0_15, %c0_16, %c0_17] : memref<1x2x32xf32, #tpu.memory_space<vmem>>, vector<1x2x32xf32>
    %40 = vector.shape_cast %39 : vector<1x2x32xf32> to vector<2x32xf32>
    %41 = vector.shape_cast %38 : vector<2x32xf32> to vector<1x2x32xf32>
    tpu.vector_store %arg3[%c0_15, %c0_16, %c0_17], %41 {strides = array<i32>} : memref<1x2x32xf32, #tpu.memory_space<vmem>>, vector<1x2x32xf32>,
    return
  }
  func.func @transform_0(%arg0: i32) -> (i32, i32, i32) {
    %c0_i32 = arith.constant 0 : i32
    %c0_i32_0 = arith.constant 0 : i32
    %c0_i32_1 = arith.constant 0 : i32
    return %arg0, %c0_i32, %c0_i32_0 : i32, i32, i32
  }
  func.func @transform_1(%arg0: i32) -> (i32, i32, i32) {
    %c0_i32 = arith.constant 0 : i32
    %c0_i32_0 = arith.constant 0 : i32
    %c0_i32_1 = arith.constant 0 : i32
    %c0_i32_2 = arith.constant 0 : i32
    return %c0_i32, %c0_i32_0, %c0_i32_1 : i32, i32, i32
  }
  func.func @transform_2(%arg0: i32) -> (i32, i32, i32) {
    %c0_i32 = arith.constant 0 : i32
    %c0_i32_0 = arith.constant 0 : i32
    %c0_i32_1 = arith.constant 0 : i32
    return %arg0, %c0_i32, %c0_i32_0 : i32, i32, i32
  }
}

module attributes {stable_mosaic.version = 11 : i64} {
  func.func @_conv_relu_pool_kernel(%arg0: i32, %arg1: memref<1x2x32xf32, #tpu.memory_space<vmem>>, %arg2: memref<3x64x32xbf16, #tpu.memory_space<vmem>>, %arg3: memref<1x1x16xf32, #tpu.memory_space<vmem>>) attributes {dimension_semantics = [#tpu.dimension_semantics<parallel>], iteration_bounds = array<i64: 2>, scalar_prefetch = 0 : i64, scratch_operands = 0 : i64, tpu.core_type = #tpu.core_type<tc>, window_params = [{transform_indices = @transform_0, window_bounds = array<i64: 1, 2, 32>}, {pipeline_mode = #tpu.pipeline_mode<synchronous>, transform_indices = @transform_1, window_bounds = array<i64: 3, 64, 32>}, {transform_indices = @transform_2, window_bounds = array<i64: 1, 1, 16>}]} {
    %cst = arith.constant 0.000000e+00 : bf16
    %0 = vector.broadcast %cst : bf16 to vector<2x16xbf16>
    %cst_0 = arith.constant 0.000000e+00 : bf16
    %1 = vector.broadcast %cst_0 : bf16 to vector<1x64xbf16>
    %c0 = arith.constant 0 : index
    %c0_1 = arith.constant 0 : index
    %c0_2 = arith.constant 0 : index
    %2 = vector.load %arg1[%c0, %c0_1, %c0_2] : memref<1x2x32xf32, #tpu.memory_space<vmem>>, vector<1x2x32xf32>
    %3 = vector.shape_cast %2 : vector<1x2x32xf32> to vector<2x32xf32>
    %4 = arith.truncf %3 : vector<2x32xf32> to vector<2x32xbf16>
    %5 = tpu.concatenate %0, %4, %0 in 1 : vector<2x16xbf16>, vector<2x32xbf16>, vector<2x16xbf16> -> vector<2x64xbf16>
    %6 = tpu.concatenate %1, %5, %1 in 0 : vector<1x64xbf16>, vector<2x64xbf16>, vector<1x64xbf16> -> vector<4x64xbf16>
    %cst_3 = arith.constant 0.000000e+00 : f32
    %7 = vector.broadcast %cst_3 : f32 to vector<2x32xf32>
    %8 = vector.extract_strided_slice %6 {offsets = [0, 0], sizes = [2, 64], strides = [1, 1]} : vector<4x64xbf16> to vector<2x64xbf16>
    %c0_4 = arith.constant 0 : index
    %c0_5 = arith.constant 0 : index
    %c0_6 = arith.constant 0 : index
    %9 = vector.load %arg2[%c0_4, %c0_5, %c0_6] : memref<3x64x32xbf16, #tpu.memory_space<vmem>>, vector<1x64x32xbf16>
    %10 = vector.shape_cast %9 : vector<1x64x32xbf16> to vector<64x32xbf16>
    %cst_7 = arith.constant dense<0.000000e+00> : vector<2x32xf32>
    %11 = tpu.matmul %8, %10, %cst_7 {dimension_numbers = #tpu.dot_dimension_numbers<[1], [0], [0], [1], [0, 0, 1, 1], [], []>} : vector<2x64xbf16>, vector<64x32xbf16>, vector<2x32xf32> -> vector<2x32xf32>
    %12 = arith.addf %7, %11 : vector<2x32xf32>
    %13 = vector.extract_strided_slice %6 {offsets = [1, 0], sizes = [2, 64], strides = [1, 1]} : vector<4x64xbf16> to vector<2x64xbf16>
    %c1 = arith.constant 1 : index
    %c0_8 = arith.constant 0 : index
    %c0_9 = arith.constant 0 : index
    %14 = vector.load %arg2[%c1, %c0_8, %c0_9] : memref<3x64x32xbf16, #tpu.memory_space<vmem>>, vector<1x64x32xbf16>
    %15 = vector.shape_cast %14 : vector<1x64x32xbf16> to vector<64x32xbf16>
    %cst_10 = arith.constant dense<0.000000e+00> : vector<2x32xf32>
    %16 = tpu.matmul %13, %15, %cst_10 {dimension_numbers = #tpu.dot_dimension_numbers<[1], [0], [0], [1], [0, 0, 1, 1], [], []>} : vector<2x64xbf16>, vector<64x32xbf16>, vector<2x32xf32> -> vector<2x32xf32>
    %17 = arith.addf %12, %16 : vector<2x32xf32>
    %18 = vector.extract_strided_slice %6 {offsets = [2, 0], sizes = [2, 64], strides = [1, 1]} : vector<4x64xbf16> to vector<2x64xbf16>
    %c2 = arith.constant 2 : index
    %c0_11 = arith.constant 0 : index
    %c0_12 = arith.constant 0 : index
    %19 = vector.load %arg2[%c2, %c0_11, %c0_12] : memref<3x64x32xbf16, #tpu.memory_space<vmem>>, vector<1x64x32xbf16>
    %20 = vector.shape_cast %19 : vector<1x64x32xbf16> to vector<64x32xbf16>
    %cst_13 = arith.constant dense<0.000000e+00> : vector<2x32xf32>
    %21 = tpu.matmul %18, %20, %cst_13 {dimension_numbers = #tpu.dot_dimension_numbers<[1], [0], [0], [1], [0, 0, 1, 1], [], []>} : vector<2x64xbf16>, vector<64x32xbf16>, vector<2x32xf32> -> vector<2x32xf32>
    %22 = arith.addf %17, %21 : vector<2x32xf32>
    %cst_14 = arith.constant 0.000000e+00 : f32
    %23 = vector.broadcast %cst_14 : f32 to vector<2x32xf32>
    %24 = arith.maximumf %22, %23 : vector<2x32xf32>
    %25 = vector.extract_strided_slice %24 {offsets = [0, 0], sizes = [1, 32], strides = [1, 1]} : vector<2x32xf32> to vector<1x32xf32>
    %26 = vector.extract_strided_slice %24 {offsets = [1, 0], sizes = [1, 32], strides = [1, 1]} : vector<2x32xf32> to vector<1x32xf32>
    %27 = arith.maximumf %25, %26 : vector<1x32xf32>
    %28 = vector.extract_strided_slice %27 {offsets = [0, 0], sizes = [1, 16], strides = [1, 1]} : vector<1x32xf32> to vector<1x16xf32>
    %29 = vector.extract_strided_slice %27 {offsets = [0, 16], sizes = [1, 16], strides = [1, 1]} : vector<1x32xf32> to vector<1x16xf32>
    %30 = arith.maximumf %28, %29 : vector<1x16xf32>
    %c0_15 = arith.constant 0 : index
    %c0_16 = arith.constant 0 : index
    %c0_17 = arith.constant 0 : index
    %31 = vector.load %arg3[%c0_15, %c0_16, %c0_17] : memref<1x1x16xf32, #tpu.memory_space<vmem>>, vector<1x1x16xf32>
    %32 = vector.shape_cast %31 : vector<1x1x16xf32> to vector<1x16xf32>
    %33 = vector.shape_cast %30 : vector<1x16xf32> to vector<1x1x16xf32>
    tpu.vector_store %arg3[%c0_15, %c0_16, %c0_17], %33 {strides = array<i32>} : memref<1x1x16xf32, #tpu.memory_space<vmem>>, vector<1x1x16xf32>,
    return
  }
  func.func @transform_0(%arg0: i32) -> (i32, i32, i32) {
    %c0_i32 = arith.constant 0 : i32
    %c0_i32_0 = arith.constant 0 : i32
    %c0_i32_1 = arith.constant 0 : i32
    return %arg0, %c0_i32, %c0_i32_0 : i32, i32, i32
  }
  func.func @transform_1(%arg0: i32) -> (i32, i32, i32) {
    %c0_i32 = arith.constant 0 : i32
    %c0_i32_0 = arith.constant 0 : i32
    %c0_i32_1 = arith.constant 0 : i32
    %c0_i32_2 = arith.constant 0 : i32
    return %c0_i32, %c0_i32_0, %c0_i32_1 : i32, i32, i32
  }
  func.func @transform_2(%arg0: i32) -> (i32, i32, i32) {
    %c0_i32 = arith.constant 0 : i32
    %c0_i32_0 = arith.constant 0 : i32
    %c0_i32_1 = arith.constant 0 : i32
    return %arg0, %c0_i32, %c0_i32_0 : i32, i32, i32
  }
}

module attributes {stable_mosaic.version = 11 : i64} {
  func.func @_dense_head_kernel(%arg0: i32, %arg1: memref<2x16xf32, #tpu.memory_space<vmem>>, %arg2: memref<16x32xbf16, #tpu.memory_space<vmem>>, %arg3: memref<1x32xf32, #tpu.memory_space<vmem>>, %arg4: memref<32x10xbf16, #tpu.memory_space<vmem>>, %arg5: memref<1x10xf32, #tpu.memory_space<vmem>>, %arg6: memref<2x10xf32, #tpu.memory_space<vmem>>) attributes {dimension_semantics = [#tpu.dimension_semantics<parallel>], iteration_bounds = array<i64: 1>, scalar_prefetch = 0 : i64, scratch_operands = 0 : i64, tpu.core_type = #tpu.core_type<tc>, window_params = [{transform_indices = @transform_0, window_bounds = array<i64: 2, 16>}, {pipeline_mode = #tpu.pipeline_mode<synchronous>, transform_indices = @transform_1, window_bounds = array<i64: 16, 32>}, {pipeline_mode = #tpu.pipeline_mode<synchronous>, transform_indices = @transform_2, window_bounds = array<i64: 1, 32>}, {pipeline_mode = #tpu.pipeline_mode<synchronous>, transform_indices = @transform_3, window_bounds = array<i64: 32, 10>}, {pipeline_mode = #tpu.pipeline_mode<synchronous>, transform_indices = @transform_4, window_bounds = array<i64: 1, 10>}, {transform_indices = @transform_5, window_bounds = array<i64: 2, 10>}]} {
    %c0 = arith.constant 0 : index
    %c0_0 = arith.constant 0 : index
    %0 = vector.load %arg1[%c0, %c0_0] : memref<2x16xf32, #tpu.memory_space<vmem>>, vector<2x16xf32>
    %1 = arith.truncf %0 : vector<2x16xf32> to vector<2x16xbf16>
    %c0_1 = arith.constant 0 : index
    %c0_2 = arith.constant 0 : index
    %2 = vector.load %arg2[%c0_1, %c0_2] : memref<16x32xbf16, #tpu.memory_space<vmem>>, vector<16x32xbf16>
    %cst = arith.constant dense<0.000000e+00> : vector<2x32xf32>
    %3 = tpu.matmul %1, %2, %cst {dimension_numbers = #tpu.dot_dimension_numbers<[1], [0], [0], [1], [0, 0, 1, 1], [], []>} : vector<2x16xbf16>, vector<16x32xbf16>, vector<2x32xf32> -> vector<2x32xf32>
    %c0_3 = arith.constant 0 : index
    %c0_4 = arith.constant 0 : index
    %4 = vector.load %arg3[%c0_3, %c0_4] : memref<1x32xf32, #tpu.memory_space<vmem>>, vector<1x32xf32>
    %5 = vector.broadcast %4 : vector<1x32xf32> to vector<2x32xf32>
    %6 = arith.addf %3, %5 : vector<2x32xf32>
    %cst_5 = arith.constant 0.000000e+00 : f32
    %7 = vector.broadcast %cst_5 : f32 to vector<2x32xf32>
    %8 = arith.maximumf %6, %7 : vector<2x32xf32>
    %9 = arith.truncf %8 : vector<2x32xf32> to vector<2x32xbf16>
    %c0_6 = arith.constant 0 : index
    %c0_7 = arith.constant 0 : index
    %10 = vector.load %arg4[%c0_6, %c0_7] : memref<32x10xbf16, #tpu.memory_space<vmem>>, vector<32x10xbf16>
    %cst_8 = arith.constant dense<0.000000e+00> : vector<2x10xf32>
    %11 = tpu.matmul %9, %10, %cst_8 {dimension_numbers = #tpu.dot_dimension_numbers<[1], [0], [0], [1], [0, 0, 1, 1], [], []>} : vector<2x32xbf16>, vector<32x10xbf16>, vector<2x10xf32> -> vector<2x10xf32>
    %c0_9 = arith.constant 0 : index
    %c0_10 = arith.constant 0 : index
    %12 = vector.load %arg5[%c0_9, %c0_10] : memref<1x10xf32, #tpu.memory_space<vmem>>, vector<1x10xf32>
    %13 = vector.broadcast %12 : vector<1x10xf32> to vector<2x10xf32>
    %14 = arith.addf %11, %13 : vector<2x10xf32>
    %cst_11 = arith.constant dense<0xFF800000> : vector<2xf32>
    %15 = vector.multi_reduction <maximumf>, %14, %cst_11 [1] : vector<2x10xf32> to vector<2xf32>
    %16 = vector.shape_cast %15 : vector<2xf32> to vector<2x1xf32>
    %17 = vector.broadcast %16 : vector<2x1xf32> to vector<2x10xf32>
    %18 = arith.subf %14, %17 : vector<2x10xf32>
    %19 = math.exp %18 : vector<2x10xf32>
    %cst_12 = arith.constant dense<0.000000e+00> : vector<2xf32>
    %20 = vector.multi_reduction <add>, %19, %cst_12 [1] : vector<2x10xf32> to vector<2xf32>
    %21 = vector.shape_cast %20 : vector<2xf32> to vector<2x1xf32>
    %22 = tpu.reciprocal %21 {approx = true} : vector<2x1xf32> -> vector<2x1xf32>
    %23 = vector.broadcast %22 : vector<2x1xf32> to vector<2x10xf32>
    %24 = arith.mulf %19, %23 : vector<2x10xf32>
    %c0_13 = arith.constant 0 : index
    %c0_14 = arith.constant 0 : index
    %25 = vector.load %arg6[%c0_13, %c0_14] : memref<2x10xf32, #tpu.memory_space<vmem>>, vector<2x10xf32>
    tpu.vector_store %arg6[%c0_13, %c0_14], %24 {strides = array<i32>} : memref<2x10xf32, #tpu.memory_space<vmem>>, vector<2x10xf32>,
    return
  }
  func.func @transform_0(%arg0: i32) -> (i32, i32) {
    %c0_i32 = arith.constant 0 : i32
    %c0_i32_0 = arith.constant 0 : i32
    return %arg0, %c0_i32 : i32, i32
  }
  func.func @transform_1(%arg0: i32) -> (i32, i32) {
    %c0_i32 = arith.constant 0 : i32
    %c0_i32_0 = arith.constant 0 : i32
    %c0_i32_1 = arith.constant 0 : i32
    return %c0_i32, %c0_i32_0 : i32, i32
  }
  func.func @transform_2(%arg0: i32) -> (i32, i32) {
    %c0_i32 = arith.constant 0 : i32
    %c0_i32_0 = arith.constant 0 : i32
    %c0_i32_1 = arith.constant 0 : i32
    return %c0_i32, %c0_i32_0 : i32, i32
  }
  func.func @transform_3(%arg0: i32) -> (i32, i32) {
    %c0_i32 = arith.constant 0 : i32
    %c0_i32_0 = arith.constant 0 : i32
    %c0_i32_1 = arith.constant 0 : i32
    return %c0_i32, %c0_i32_0 : i32, i32
  }
  func.func @transform_4(%arg0: i32) -> (i32, i32) {
    %c0_i32 = arith.constant 0 : i32
    %c0_i32_0 = arith.constant 0 : i32
    %c0_i32_1 = arith.constant 0 : i32
    return %c0_i32, %c0_i32_0 : i32, i32
  }
  func.func @transform_5(%arg0: i32) -> (i32, i32) {
    %c0_i32 = arith.constant 0 : i32
    %c0_i32_0 = arith.constant 0 : i32
    return %arg0, %c0_i32 : i32, i32
  }
}

</mosaic_0001>

<llo_original>
// kernel: forward.8
$region0: #{forward.8}
  #allocation0 [shape = 'u32[]', space=smem, size = 0x4, offset = 0x4, fixed_abs, tag = 'smem constant byte address 0x4 - core index']
  #allocation1 [shape = 'u32[72,128]{1,0:T(1,128)}', space=vmem, size = 0x9000, scoped, tag = 'internal scratch']
  %s0 = inlined_call_operand.vmem [shape: f32[2,8,128], index: 0, kind: input, shape index: {}]
  %s1 = inlined_call_operand.vmem [shape: bf16[3,160,128], index: 1, kind: input, shape index: {}]
  %s2 = inlined_call_operand.vmem [shape: f32[2,4,64], index: 2, kind: output, shape index: {}]
  %s3 = sld [smem:[#allocation0]]
  $region41: #{forward.8} parent=0
    _
  %s5 = ssub.s32 1, %s3
  %s6 = scalar_select 0, %s5, %s3
  loop: start=0, step=1, limit=4
  $region2: #{forward.8} parent=0 // loop_pre_header
    _
  $region3: #{forward.8} parent=0 // loop_header
    %s8 = sphi 0, %s12
    %p9 = scmp.ge.s32.totalorder %s8, 4
    %s18 = sphi 0, %s20
    %s21 = sphi 0, %s18
    %s22 = sphi 0, %s21
    %s38 = sphi 0, %s22
    %s42 = sphi 0, %s42
    %s44 = sphi 0, %s42
    %s45 = sphi 0, %s44
    %s59 = sphi 0, %s45
    %s65 = sphi 0, %s67
    %s68 = sphi 0, %s65
    %s69 = sphi 0, %s68
    %s85 = sphi 0, %s69
  $region4: #{forward.8} parent=0 // loop_header_branch
    %11 = sbr.rel (%p9) target = $region8
  $region5: #{forward.8} parent=0 // loop_body
    %s13 = ssub.s32 %s8, 1
    %s14 = ssub.s32 %s8, 2
    %s15 = sadd.s32 %s8, 1
    %s16 = ssub.s32 %s8, %s15
    %p17 = scmp.eq.s32.totalorder %s16, 0
    %s19 = sadd.s32 %s18, 1
    %s20 = scalar_select %p17, %s18, %s19
    %p23 = pneg %p17
    %p24 = scmp.eq.s32.totalorder %s8, 1
    %p25 = por %p23, %p24
    %p26 = scmp.ne.s32.totalorder %s18, %s21
    %p27 = scmp.eq.s32.totalorder %s8, 0
    %p28 = por %p26, %p27
    %p29 = scmp.ne.s32.totalorder %s18, %s21
    %p30 = scmp.eq.s32.totalorder %s13, 1
    %p31 = por %p29, %p30
    %p32 = scmp.ne.s32.totalorder %s21, %s22
    %p33 = scmp.eq.s32.totalorder %s13, 0
    %p34 = por %p32, %p33
    %p35 = scmp.ne.s32.totalorder %s21, %s22
    %p36 = scmp.eq.s32.totalorder %s14, 1
    %p37 = por %p35, %p36
    %p39 = scmp.ne.s32.totalorder %s22, %s38
    %p40 = scmp.eq.s32.totalorder %s14, 0
    %p41 = por %p39, %p40
    %s43 = sadd.s32 %s42, 1
    %p46 = scmp.eq.s32.totalorder %s8, 1
    %p47 = scmp.ne.s32.totalorder %s42, %s44
    %p48 = scmp.eq.s32.totalorder %s8, 0
    %p49 = por %p47, %p48
    %p50 = scmp.ne.s32.totalorder %s42, %s44
    %p51 = scmp.eq.s32.totalorder %s13, 1
    %p52 = por %p50, %p51
    %p53 = scmp.ne.s32.totalorder %s44, %s45
    %p54 = scmp.eq.s32.totalorder %s13, 0
    %p55 = por %p53, %p54
    %p56 = scmp.ne.s32.totalorder %s44, %s45
    %p57 = scmp.eq.s32.totalorder %s14, 1
    %p58 = por %p56, %p57
    %p60 = scmp.ne.s32.totalorder %s45, %s59
    %p61 = scmp.eq.s32.totalorder %s14, 0
    %p62 = por %p60, %p61
    %s63 = ssub.s32 %s8, %s15
    %p64 = scmp.eq.s32.totalorder %s63, 0
    %s66 = sadd.s32 %s65, 1
    %s67 = scalar_select %p64, %s65, %s66
    %p70 = pneg %p64
    %p71 = scmp.eq.s32.totalorder %s8, 1
    %p72 = por %p70, %p71
    %p73 = scmp.ne.s32.totalorder %s65, %s68
    %p74 = scmp.eq.s32.totalorder %s8, 0
    %p75 = por %p73, %p74
    %p76 = scmp.ne.s32.totalorder %s65, %s68
    %p77 = scmp.eq.s32.totalorder %s13, 1
    %p78 = por %p76, %p77
    %p79 = scmp.ne.s32.totalorder %s68, %s69
    %p80 = scmp.eq.s32.totalorder %s13, 0
    %p81 = por %p79, %p80
    %p82 = scmp.ne.s32.totalorder %s68, %s69
    %p83 = scmp.eq.s32.totalorder %s14, 1
    %p84 = por %p82, %p83
    %p86 = scmp.ne.s32.totalorder %s69, %s85
    %p87 = scmp.eq.s32.totalorder %s14, 0
    %p88 = por %p86, %p87
    %p89 = scmp.le.s32.totalorder 1, %s8
    %p90 = scmp.lt.s32.totalorder %s8, 3
    %p91 = pnand %p89, %p90
    %p92 = pneg %p91
    // Predicated region
    $region9: #{forward.8} parent=5 // pred_check
      _
    $region10: #{forward.8} parent=5 // pred_check_branch
      %94 = sbr.rel (%p91) target = $region12
    $region11: #{forward.8} parent=5 // pred_region
      %s95 = ssub.s32 %s8, 1
      // Predicated region
      $region13: #{forward.8} parent=11 // pred_check
        %p96 = pneg %p55
      $region14: #{forward.8} parent=11 // pred_check_branch
        %98 = sbr.rel (%p96) target = $region16
      $region15: #{forward.8} parent=11 // pred_region
        _
      $region16: #{forward.8} parent=11 // pred_fallthru
        _
    $region12: #{forward.8} parent=5 // pred_fallthru
      _
    %p99 = scmp.lt.s32.totalorder %s8, 2
    // Predicated region
    $region17: #{forward.8} parent=5 // pred_check
      %p100 = pneg %p99
    $region18: #{forward.8} parent=5 // pred_check_branch
      %102 = sbr.rel (%p100) target = $region20
    $region19: #{forward.8} parent=5 // pred_region
      // Predicated region
      $region21: #{forward.8} parent=19 // pred_check
        %p103 = pneg %p28
      $region22: #{forward.8} parent=19 // pred_check_branch
        %105 = sbr.rel (%p103) target = $region24
      $region23: #{forward.8} parent=19 // pred_region
        %p106 = scmp.lt.s32.totalorder %s8, 1
        %s107 = scalar_select %p106, %s8, 1
        %s108 = smul.addr %s107, 8
        %s109 = scalar_lea.vmem %s0, %s108
      $region24: #{forward.8} parent=19 // pred_fallthru
        _
    $region20: #{forward.8} parent=5 // pred_fallthru
      _
    %p110 = scmp.le.s32.totalorder 1, %s8
    %p111 = scmp.lt.s32.totalorder %s8, 3
    %p112 = pnand %p110, %p111
    %p113 = pneg %p112
    // Predicated region
    $region25: #{forward.8} parent=5 // pred_check
      _
    $region26: #{forward.8} parent=5 // pred_check_branch
      %115 = sbr.rel (%p112) target = $region28
    $region27: #{forward.8} parent=5 // pred_region
      %s116 = ssub.s32 %s8, 1
      %p117 = scmp.lt.s32.totalorder %s13, 1
      %s118 = scalar_select %p117, %s13, 1
      %s119 = smul.addr %s118, 8
      %s120 = scalar_lea.vmem %s0, %s119
      %p121 = pneg %p34
      %p122 = pneg %p31
      %p123 = pneg %p55
      %p124 = pneg %p52
      %p125 = pneg %p81
      %p126 = pneg %p78
      %p127 = scmp.lt.s32.totalorder %s13, 1
      %s128 = scalar_select %p127, %s13, 1
      %s129 = smul.addr %s128, 4
      %s130 = scalar_lea.vmem %s2, %s129
      %p131 = scmp.lt.s32.totalorder %s13, 1
      %s132 = scalar_select %p131, %s13, 1
      %s133 = smul.addr %s132, 8
      %s134 = scalar_lea.vmem %s0, %s133
      %p135 = scmp.lt.s32.totalorder %s13, 1
      %s136 = scalar_select %p135, %s13, 1
      %s137 = smul.addr %s136, 4
      %s138 = scalar_lea.vmem %s2, %s137
      %v140 = vld [vmem:[%s134] sm:$0xff]
      %v141 = vpack.c.bf16 %v140, %v140
      %v143 = vunpack.c.l.b16 %v141
      %v144 = vpack.c.b16 %v143, %v143
      %145 = vrot.lane.b32.xlu0 %v144, 16
      %v146 = vpop.permute.xlu0 %145
      %vm147 = vcmask 130048
      %v150 = vsel %vm147, 0, %v146
      %v151 = vsel %vm147, %v146, 0
      %v152 = vshrl.u32 %v150, 16
      %v154 = vrot.slane %v152, 7
      %v155 = vshll.u32 %v150, 16
      %v157 = vor.u32 %v154, %v155
      %v158 = vshrl.u32 %v151, 16
      %v160 = vrot.slane %v158, 7
      %v161 = vshll.u32 %v151, 16
      %v163 = vor.u32 %v160, %v161
      %vm166 = vcmask 1040384
      %vm167 = vsmask.f32 256
      %vm168 = vmand %vm166, %vm167
      %v169 = vsel %vm168, 0, %v157
      %v170 = vsel %vm168, 0, %v163
      %vm171 = vcmask 1044480
      %vm172 = vsmask.f32 4352
      %vm173 = vmand %vm171, %vm172
      %v174 = vsel %vm173, %v169, 0
      %v175 = vsel %vm173, %v170, 0
      %v176 = vld [vmem:[%s1] sm:$0xf]
      %v177 = vld [vmem:[%s1 + $0x4] sm:$0xf]
      %v178 = vld [vmem:[%s1 + $0x8] sm:$0xf]
      %v179 = vld [vmem:[%s1 + $0xc] sm:$0xf]
      %v180 = vld [vmem:[%s1 + $0x10] sm:$0xf]
      %v181 = vld [vmem:[%s1 + $0x14] sm:$0xf]
      %v182 = vld [vmem:[%s1 + $0x18] sm:$0xf]
      %v183 = vld [vmem:[%s1 + $0x1c] sm:$0xf]
      %v184 = vld [vmem:[%s1 + $0x20] sm:$0xf]
      %v185 = vld [vmem:[%s1 + $0x24] sm:$0xf]
      %v186 = vld [vmem:[%s1 + $0x28] sm:$0xf]
      %v187 = vld [vmem:[%s1 + $0x2c] sm:$0xf]
      %v188 = vld [vmem:[%s1 + $0x30] sm:$0xf]
      %v189 = vld [vmem:[%s1 + $0x34] sm:$0xf]
      %v190 = vld [vmem:[%s1 + $0x38] sm:$0xf]
      %v191 = vld [vmem:[%s1 + $0x3c] sm:$0xf]
      %v192 = vld [vmem:[%s1 + $0x40] sm:$0xf]
      %v193 = vld [vmem:[%s1 + $0x44] sm:$0xf]
      %v194 = vld [vmem:[%s1 + $0x48] sm:$0xf]
      %v195 = vld [vmem:[%s1 + $0x4c] sm:$0xf]
      %s196 = scalar_lea.vmem %s1, 80
      %v197 = vld [vmem:[%s196] sm:$0xf]
      %v198 = vld [vmem:[%s196 + $0x4] sm:$0xf]
      %v199 = vld [vmem:[%s196 + $0x8] sm:$0xf]
      %v200 = vld [vmem:[%s196 + $0xc] sm:$0xf]
      %v201 = vld [vmem:[%s196 + $0x10] sm:$0xf]
      %v202 = vld [vmem:[%s196 + $0x14] sm:$0xf]
      %v203 = vld [vmem:[%s196 + $0x18] sm:$0xf]
      %v204 = vld [vmem:[%s196 + $0x1c] sm:$0xf]
      %v205 = vld [vmem:[%s196 + $0x20] sm:$0xf]
      %v206 = vld [vmem:[%s196 + $0x24] sm:$0xf]
      %v207 = vld [vmem:[%s196 + $0x28] sm:$0xf]
      %v208 = vld [vmem:[%s196 + $0x2c] sm:$0xf]
      %v209 = vld [vmem:[%s196 + $0x30] sm:$0xf]
      %v210 = vld [vmem:[%s196 + $0x34] sm:$0xf]
      %v211 = vld [vmem:[%s196 + $0x38] sm:$0xf]
      %v212 = vld [vmem:[%s196 + $0x3c] sm:$0xf]
      %v213 = vld [vmem:[%s196 + $0x40] sm:$0xf]
      %v214 = vld [vmem:[%s196 + $0x44] sm:$0xf]
      %v215 = vld [vmem:[%s196 + $0x48] sm:$0xf]
      %v216 = vld [vmem:[%s196 + $0x4c] sm:$0xf]
      %v218 = vshrl.u32 %v174, 16
      %v220 = vshll.u32 %v174, 16
      %v222 = vrot.slane %v220, 1
      %v223 = vor.u32 %v218, %v222
      %v225 = vshrl.u32 %v175, 16
      %v227 = vshll.u32 %v175, 16
      %v229 = vrot.slane %v227, 1
      %v230 = vor.u32 %v225, %v229
      %v252 = vunpack.c.l.b16 %v197
      %v253 = vunpack.c.l.b16 %v198
      %v254 = vunpack.c.l.b16 %v199
      %v255 = vunpack.c.l.b16 %v200
      %v256 = vunpack.c.l.b16 %v201
      %v257 = vunpack.c.l.b16 %v202
      %v258 = vunpack.c.l.b16 %v203
      %v259 = vunpack.c.l.b16 %v204
      %v260 = vunpack.c.l.b16 %v205
      %v261 = vunpack.c.l.b16 %v206
      %v262 = vunpack.c.l.b16 %v207
      %v263 = vunpack.c.l.b16 %v208
      %v264 = vunpack.c.l.b16 %v209
      %v265 = vunpack.c.l.b16 %v210
      %v266 = vunpack.c.l.b16 %v211
      %v267 = vunpack.c.l.b16 %v212
      %v268 = vunpack.c.l.b16 %v213
      %v269 = vunpack.c.l.b16 %v214
      %v270 = vunpack.c.l.b16 %v215
      %v271 = vunpack.c.l.b16 %v216
      %v272 = vpack.c.b16 %v253, %v252
      %v273 = vpack.c.b16 %v255, %v254
      %v274 = vpack.c.b16 %v257, %v256
      %v275 = vpack.c.b16 %v259, %v258
      %v276 = vpack.c.b16 %v261, %v260
      %v277 = vpack.c.b16 %v263, %v262
      %v278 = vpack.c.b16 %v265, %v264
      %v279 = vpack.c.b16 %v267, %v266
      %v280 = vpack.c.b16 %v269, %v268
      %v281 = vpack.c.b16 %v271, %v270
      %vm292 = vcmask 261120
      %v294 = vsel %vm292, %v230, 0
      %296 = vmatpush.bf16.msra.mxu0 %v279
      %297 = vmatpush.bf16.msra.mxu0 %v278
      %298 = vmatpush.bf16.msra.mxu0 %v277
      %299 = vmatpush.bf16.msra.mxu0 %v276
      %300 = vmatpush.bf16.msra.mxu0 %v275
      %301 = vmatpush.bf16.msra.mxu0 %v274
      %302 = vmatpush.bf16.msra.mxu0 %v273
      %303 = vmatpush.bf16.msra.mxu0 %v272
      %304 = vmatmul.bf16.gmra.mxu0 %v223
      %v305 = vpop.f32.mrf.mxu0
      %v306 = vadd.f32 0.0, %v305
      %v307 = vpop.f32.mrf.mxu0
      %308 = vdwg.mxu0
      %309 = vmatpush.bf16.msra.mxu0 0
      %310 = vmatpush.bf16.msra.mxu0 0
      %311 = vmatpush.bf16.msra.mxu0 0
      %312 = vmatpush.bf16.msra.mxu0 0
      %313 = vmatpush.bf16.msra.mxu0 0
      %314 = vmatpush.bf16.msra.mxu0 0
      %315 = vmatpush.bf16.msra.mxu0 %v281
      %316 = vmatpush.bf16.msra.mxu0 %v280
      %317 = vmatmul.bf16.gmra.mxu0 %v294
      %v318 = vpop.f32.mrf.mxu0
      %v319 = vadd.f32 %v306, %v318
      %v320 = vpop.f32.mrf.mxu0
      %321 = vdwg.mxu0
      %v342 = vunpack.c.l.b16 %v176
      %v343 = vunpack.c.l.b16 %v177
      %v344 = vunpack.c.l.b16 %v178
      %v345 = vunpack.c.l.b16 %v179
      %v346 = vunpack.c.l.b16 %v180
      %v347 = vunpack.c.l.b16 %v181
      %v348 = vunpack.c.l.b16 %v182
      %v349 = vunpack.c.l.b16 %v183
      %v350 = vunpack.c.l.b16 %v184
      %v351 = vunpack.c.l.b16 %v185
      %v352 = vunpack.c.l.b16 %v186
      %v353 = vunpack.c.l.b16 %v187
      %v354 = vunpack.c.l.b16 %v188
      %v355 = vunpack.c.l.b16 %v189
      %v356 = vunpack.c.l.b16 %v190
      %v357 = vunpack.c.l.b16 %v191
      %v358 = vunpack.c.l.b16 %v192
      %v359 = vunpack.c.l.b16 %v193
      %v360 = vunpack.c.l.b16 %v194
      %v361 = vunpack.c.l.b16 %v195
      %v362 = vpack.c.b16 %v343, %v342
      %v363 = vpack.c.b16 %v345, %v344
      %v364 = vpack.c.b16 %v347, %v346
      %v365 = vpack.c.b16 %v349, %v348
      %v366 = vpack.c.b16 %v351, %v350
      %v367 = vpack.c.b16 %v353, %v352
      %v368 = vpack.c.b16 %v355, %v354
      %v369 = vpack.c.b16 %v357, %v356
      %v370 = vpack.c.b16 %v359, %v358
      %v371 = vpack.c.b16 %v361, %v360
      %v382 = vsel %vm292, %v175, 0
      %384 = vmatpush.bf16.msra.mxu0 %v369
      %385 = vmatpush.bf16.msra.mxu0 %v368
      %386 = vmatpush.bf16.msra.mxu0 %v367
      %387 = vmatpush.bf16.msra.mxu0 %v366
      %388 = vmatpush.bf16.msra.mxu0 %v365
      %389 = vmatpush.bf16.msra.mxu0 %v364
      %390 = vmatpush.bf16.msra.mxu0 %v363
      %391 = vmatpush.bf16.msra.mxu0 %v362
      %392 = vmatmul.bf16.gmra.mxu0 %v174
      %v393 = vpop.f32.mrf.mxu0
      %v394 = vadd.f32 %v319, %v393
      %v395 = vpop.f32.mrf.mxu0
      %396 = vdwg.mxu0
      %397 = vmatpush.bf16.msra.mxu0 0
      %398 = vmatpush.bf16.msra.mxu0 0
      %399 = vmatpush.bf16.msra.mxu0 0
      %400 = vmatpush.bf16.msra.mxu0 0
      %401 = vmatpush.bf16.msra.mxu0 0
      %402 = vmatpush.bf16.msra.mxu0 0
      %403 = vmatpush.bf16.msra.mxu0 %v371
      %404 = vmatpush.bf16.msra.mxu0 %v370
      %405 = vmatmul.bf16.gmra.mxu0 %v382
      %v406 = vpop.f32.mrf.mxu0
      %v407 = vadd.f32 %v394, %v406
      %v408 = vpop.f32.mrf.mxu0
      %409 = vdwg.mxu0
      %s410 = scalar_lea.vmem %s1, 160
      %v411 = vld [vmem:[%s410] sm:$0xf]
      %v412 = vld [vmem:[%s410 + $0x4] sm:$0xf]
      %v413 = vld [vmem:[%s410 + $0x8] sm:$0xf]
      %v414 = vld [vmem:[%s410 + $0xc] sm:$0xf]
      %v415 = vld [vmem:[%s410 + $0x10] sm:$0xf]
      %v416 = vld [vmem:[%s410 + $0x14] sm:$0xf]
      %v417 = vld [vmem:[%s410 + $0x18] sm:$0xf]
      %v418 = vld [vmem:[%s410 + $0x1c] sm:$0xf]
      %v419 = vld [vmem:[%s410 + $0x20] sm:$0xf]
      %v420 = vld [vmem:[%s410 + $0x24] sm:$0xf]
      %v421 = vld [vmem:[%s410 + $0x28] sm:$0xf]
      %v422 = vld [vmem:[%s410 + $0x2c] sm:$0xf]
      %v423 = vld [vmem:[%s410 + $0x30] sm:$0xf]
      %v424 = vld [vmem:[%s410 + $0x34] sm:$0xf]
      %v425 = vld [vmem:[%s410 + $0x38] sm:$0xf]
      %v426 = vld [vmem:[%s410 + $0x3c] sm:$0xf]
      %v427 = vld [vmem:[%s410 + $0x40] sm:$0xf]
      %v428 = vld [vmem:[%s410 + $0x44] sm:$0xf]
      %v429 = vld [vmem:[%s410 + $0x48] sm:$0xf]
      %v430 = vld [vmem:[%s410 + $0x4c] sm:$0xf]
      %v433 = vrot.slane %v174, 1
      %v434 = vrot.slane %v175, 1
      %v456 = vunpack.c.l.b16 %v411
      %v457 = vunpack.c.l.b16 %v412
      %v458 = vunpack.c.l.b16 %v413
      %v459 = vunpack.c.l.b16 %v414
      %v460 = vunpack.c.l.b16 %v415
      %v461 = vunpack.c.l.b16 %v416
      %v462 = vunpack.c.l.b16 %v417
      %v463 = vunpack.c.l.b16 %v418
      %v464 = vunpack.c.l.b16 %v419
      %v465 = vunpack.c.l.b16 %v420
      %v466 = vunpack.c.l.b16 %v421
      %v467 = vunpack.c.l.b16 %v422
      %v468 = vunpack.c.l.b16 %v423
      %v469 = vunpack.c.l.b16 %v424
      %v470 = vunpack.c.l.b16 %v425
      %v471 = vunpack.c.l.b16 %v426
      %v472 = vunpack.c.l.b16 %v427
      %v473 = vunpack.c.l.b16 %v428
      %v474 = vunpack.c.l.b16 %v429
      %v475 = vunpack.c.l.b16 %v430
      %v476 = vpack.c.b16 %v457, %v456
      %v477 = vpack.c.b16 %v459, %v458
      %v478 = vpack.c.b16 %v461, %v460
      %v479 = vpack.c.b16 %v463, %v462
      %v480 = vpack.c.b16 %v465, %v464
      %v481 = vpack.c.b16 %v467, %v466
      %v482 = vpack.c.b16 %v469, %v468
      %v483 = vpack.c.b16 %v471, %v470
      %v484 = vpack.c.b16 %v473, %v472
      %v485 = vpack.c.b16 %v475, %v474
      %v497 = vsel %vm292, %v434, 0
      %499 = vmatpush.bf16.msra.mxu0 %v483
      %500 = vmatpush.bf16.msra.mxu0 %v482
      %501 = vmatpush.bf16.msra.mxu0 %v481
      %502 = vmatpush.bf16.msra.mxu0 %v480
      %503 = vmatpush.bf16.msra.mxu0 %v479
      %504 = vmatpush.bf16.msra.mxu0 %v478
      %505 = vmatpush.bf16.msra.mxu0 %v477
      %506 = vmatpush.bf16.msra.mxu0 %v476
      %507 = vmatmul.bf16.gmra.mxu0 %v433
      %v508 = vpop.f32.mrf.mxu0
      %v509 = vadd.f32 0.0, %v508
      %v510 = vpop.f32.mrf.mxu0
      %511 = vdwg.mxu0
      %512 = vmatpush.bf16.msra.mxu0 0
      %513 = vmatpush.bf16.msra.mxu0 0
      %514 = vmatpush.bf16.msra.mxu0 0
      %515 = vmatpush.bf16.msra.mxu0 0
      %516 = vmatpush.bf16.msra.mxu0 0
      %517 = vmatpush.bf16.msra.mxu0 0
      %518 = vmatpush.bf16.msra.mxu0 %v485
      %519 = vmatpush.bf16.msra.mxu0 %v484
      %520 = vmatmul.bf16.gmra.mxu0 %v497
      %v521 = vpop.f32.mrf.mxu0
      %v522 = vadd.f32 %v509, %v521
      %v523 = vpop.f32.mrf.mxu0
      %524 = vdwg.mxu0
      %v525 = vadd.f32 %v407, %v522
      %v526 = vmax.f32 %v525, 0.0
      %v528 = vrot.slane %v526, 1
      %v530 = vrot.slane %v526, 2
      %v532 = vrot.slane %v526, 3
      %vm534 = vcmask 1040384
      %v535 = vsel %vm534, %v526, %v528
      %vm536 = vcmask 1041408
      %v537 = vsel %vm536, %v535, %v530
      %vm538 = vcmask 1042432
      %v539 = vsel %vm538, %v537, %v532
      %v540 = vrot.slane %v526, 4
      %v542 = vsel %vm534, %v528, %v530
      %v543 = vsel %vm536, %v542, %v532
      %v544 = vsel %vm538, %v543, %v540
      %v545 = vmax.f32 %v539, %v544
      %547 = vrot.lane.b32.xlu0 %v545, 112
      %v548 = vpop.permute.xlu0 %547
      %550 = vrot.lane.b32.xlu0 %v545, 96
      %v551 = vpop.permute.xlu0 %550
      %553 = vrot.lane.b32.xlu0 %v545, 80
      %v554 = vpop.permute.xlu0 %553
      %v556 = vsel %vm147, %v545, %v548
      %v557 = vsel %vm292, %v556, %v551
      %vm558 = vcmask 392192
      %v559 = vsel %vm558, %v557, %v554
      %560 = vrot.lane.b32.xlu0 %v545, 64
      %v561 = vpop.permute.xlu0 %560
      %v563 = vsel %vm147, %v548, %v551
      %v564 = vsel %vm292, %v563, %v554
      %v565 = vsel %vm558, %v564, %v561
      %v566 = vmax.f32 %v559, %v565
      %vm567 = vcmask 519168
      %568 = vst.msk [vmem:[%s138] sm:$0xf] %vm567, %v566
      %p569 = scmp.lt.s32.totalorder %s13, 1
      %s570 = scalar_select %p569, %s13, 1
      %s571 = smul.addr %s570, 4
      %s572 = scalar_lea.vmem %s2, %s571
      // Predicated region
      $region29: #{forward.8} parent=27 // pred_check
        %p573 = pneg %p78
      $region30: #{forward.8} parent=27 // pred_check_branch
        %575 = sbr.rel (%p573) target = $region32
      $region31: #{forward.8} parent=27 // pred_region
        _
      $region32: #{forward.8} parent=27 // pred_fallthru
        _
    $region28: #{forward.8} parent=5 // pred_fallthru
      _
    %p576 = scmp.le.s32.totalorder 2, %s8
    // Predicated region
    $region33: #{forward.8} parent=5 // pred_check
      %p577 = pneg %p576
    $region34: #{forward.8} parent=5 // pred_check_branch
      %579 = sbr.rel (%p577) target = $region36
    $region35: #{forward.8} parent=5 // pred_region
      %s580 = ssub.s32 %s8, 2
      // Predicated region
      $region37: #{forward.8} parent=35 // pred_check
        %p581 = pneg %p84
      $region38: #{forward.8} parent=35 // pred_check_branch
        %583 = sbr.rel (%p581) target = $region40
      $region39: #{forward.8} parent=35 // pred_region
        %p584 = scmp.lt.s32.totalorder %s14, 1
        %s585 = scalar_select %p584, %s14, 1
        %s586 = smul.addr %s585, 4
        %s587 = scalar_lea.vmem %s2, %s586
      $region40: #{forward.8} parent=35 // pred_fallthru
        _
    $region36: #{forward.8} parent=5 // pred_fallthru
      _
  $region6: #{forward.8} parent=0 // loop_footer
    %s12 = sadd.s32 1, %s8
  $region7: #{forward.8} parent=0 // loop_footer_branch
    %7 = sbr.rel target = $region3
  $region8: #{forward.8} parent=0 // loop_exit
    _

// kernel: forward.7
$region0: #{forward.7}
  #allocation0 [shape = 'u32[]', space=smem, size = 0x4, offset = 0x4, fixed_abs, tag = 'smem constant byte address 0x4 - core index']
  #allocation1 [shape = 'u32[72,128]{1,0:T(1,128)}', space=vmem, size = 0x9000, scoped, tag = 'internal scratch']
  %s0 = inlined_call_operand.vmem [shape: f32[2,16,256], index: 0, kind: input, shape index: {}]
  %s1 = inlined_call_operand.hbm [shape: bf16[3,288,256], index: 1, kind: input, shape index: {}]
  %s2 = inlined_call_operand.vmem [shape: f32[2,8,128], index: 2, kind: output, shape index: {}]
  %s3 = sld [smem:[#allocation0]]
  $region45: #{forward.7} parent=0
    _
  %s5 = ssub.s32 1, %s3
  %s6 = scalar_select 0, %s5, %s3
  $region1: #{forward.7} parent=0
    #allocation2 [shape = 'u8[442368]{0}', space=vmem, size = 0x6c000, scoped, tag = 'input window, operand 1, single buffered']
    #allocation3 [shape = 's32[2]{0}', space=sflag, size = 0x8, scoped, tag = 'scoped memory for forward.7']
    %7 = vsyncpa [#allocation3], 0
    loop: start=0, step=1, limit=4
    $region2: #{forward.7} parent=1 // loop_pre_header
      _
    $region3: #{forward.7} parent=1 // loop_header
      %s9 = sphi 0, %s13
      %p10 = scmp.ge.s32.totalorder %s9, 4
      %s19 = sphi 0, %s21
      %s22 = sphi 0, %s19
      %s23 = sphi 0, %s22
      %s39 = sphi 0, %s23
      %s43 = sphi 0, %s43
      %s45 = sphi 0, %s43
      %s46 = sphi 0, %s45
      %s60 = sphi 0, %s46
      %s66 = sphi 0, %s68
      %s69 = sphi 0, %s66
      %s70 = sphi 0, %s69
      %s86 = sphi 0, %s70
    $region4: #{forward.7} parent=1 // loop_header_branch
      %12 = sbr.rel (%p10) target = $region8
    $region5: #{forward.7} parent=1 // loop_body
      %s14 = ssub.s32 %s9, 1
      %s15 = ssub.s32 %s9, 2
      %s16 = sadd.s32 %s9, 1
      %s17 = ssub.s32 %s9, %s16
      %p18 = scmp.eq.s32.totalorder %s17, 0
      %s20 = sadd.s32 %s19, 1
      %s21 = scalar_select %p18, %s19, %s20
      %p24 = pneg %p18
      %p25 = scmp.eq.s32.totalorder %s9, 1
      %p26 = por %p24, %p25
      %p27 = scmp.ne.s32.totalorder %s19, %s22
      %p28 = scmp.eq.s32.totalorder %s9, 0
      %p29 = por %p27, %p28
      %p30 = scmp.ne.s32.totalorder %s19, %s22
      %p31 = scmp.eq.s32.totalorder %s14, 1
      %p32 = por %p30, %p31
      %p33 = scmp.ne.s32.totalorder %s22, %s23
      %p34 = scmp.eq.s32.totalorder %s14, 0
      %p35 = por %p33, %p34
      %p36 = scmp.ne.s32.totalorder %s22, %s23
      %p37 = scmp.eq.s32.totalorder %s15, 1
      %p38 = por %p36, %p37
      %p40 = scmp.ne.s32.totalorder %s23, %s39
      %p41 = scmp.eq.s32.totalorder %s15, 0
      %p42 = por %p40, %p41
      %s44 = sadd.s32 %s43, 1
      %p47 = scmp.eq.s32.totalorder %s9, 1
      %p48 = scmp.ne.s32.totalorder %s43, %s45
      %p49 = scmp.eq.s32.totalorder %s9, 0
      %p50 = por %p48, %p49
      %p51 = scmp.ne.s32.totalorder %s43, %s45
      %p52 = scmp.eq.s32.totalorder %s14, 1
      %p53 = por %p51, %p52
      %p54 = scmp.ne.s32.totalorder %s45, %s46
      %p55 = scmp.eq.s32.totalorder %s14, 0
      %p56 = por %p54, %p55
      %p57 = scmp.ne.s32.totalorder %s45, %s46
      %p58 = scmp.eq.s32.totalorder %s15, 1
      %p59 = por %p57, %p58
      %p61 = scmp.ne.s32.totalorder %s46, %s60
      %p62 = scmp.eq.s32.totalorder %s15, 0
      %p63 = por %p61, %p62
      %s64 = ssub.s32 %s9, %s16
      %p65 = scmp.eq.s32.totalorder %s64, 0
      %s67 = sadd.s32 %s66, 1
      %s68 = scalar_select %p65, %s66, %s67
      %p71 = pneg %p65
      %p72 = scmp.eq.s32.totalorder %s9, 1
      %p73 = por %p71, %p72
      %p74 = scmp.ne.s32.totalorder %s66, %s69
      %p75 = scmp.eq.s32.totalorder %s9, 0
      %p76 = por %p74, %p75
      %p77 = scmp.ne.s32.totalorder %s66, %s69
      %p78 = scmp.eq.s32.totalorder %s14, 1
      %p79 = por %p77, %p78
      %p80 = scmp.ne.s32.totalorder %s69, %s70
      %p81 = scmp.eq.s32.totalorder %s14, 0
      %p82 = por %p80, %p81
      %p83 = scmp.ne.s32.totalorder %s69, %s70
      %p84 = scmp.eq.s32.totalorder %s15, 1
      %p85 = por %p83, %p84
      %p87 = scmp.ne.s32.totalorder %s70, %s86
      %p88 = scmp.eq.s32.totalorder %s15, 0
      %p89 = por %p87, %p88
      %p90 = scmp.le.s32.totalorder 1, %s9
      %p91 = scmp.lt.s32.totalorder %s9, 3
      %p92 = pnand %p90, %p91
      %p93 = pneg %p92
      // Predicated region
      $region9: #{forward.7} parent=5 // pred_check
        _
      $region10: #{forward.7} parent=5 // pred_check_branch
        %95 = sbr.rel (%p92) target = $region12
      $region11: #{forward.7} parent=5 // pred_region
        %s96 = ssub.s32 %s9, 1
        // Predicated region
        $region13: #{forward.7} parent=11 // pred_check
          %p97 = pneg %p56
        $region14: #{forward.7} parent=11 // pred_check_branch
          %99 = sbr.rel (%p97) target = $region16
        $region15: #{forward.7} parent=11 // pred_region
          %101 = vsyncadd [#allocation3], 0
          %s102 = sshll.u32 %s1, 4
          %s103 = int_to_ptr.hbm [resolvable:$true] %s102
          %s104 = sshll.u32 [#allocation2], 4
          %s105 = int_to_ptr.vmem [resolvable:$true] %s104
          %110 = dma.hbm_to_vmem [thread:$0]  %s103, 13824, %s105, [#allocation3], 128, 128, 8
        $region16: #{forward.7} parent=11 // pred_fallthru
          _
      $region12: #{forward.7} parent=5 // pred_fallthru
        _
      %p111 = scmp.lt.s32.totalorder %s9, 2
      // Predicated region
      $region17: #{forward.7} parent=5 // pred_check
        %p112 = pneg %p111
      $region18: #{forward.7} parent=5 // pred_check_branch
        %114 = sbr.rel (%p112) target = $region20
      $region19: #{forward.7} parent=5 // pred_region
        // Predicated region
        $region21: #{forward.7} parent=19 // pred_check
          %p115 = pneg %p29
        $region22: #{forward.7} parent=19 // pred_check_branch
          %117 = sbr.rel (%p115) target = $region24
        $region23: #{forward.7} parent=19 // pred_region
          %p118 = scmp.lt.s32.totalorder %s9, 1
          %s119 = scalar_select %p118, %s9, 1
          %s120 = smul.addr %s119, 4
          %s121 = smul.addr %s120, 8
          %s122 = scalar_lea.vmem %s0, %s121
        $region24: #{forward.7} parent=19 // pred_fallthru
          _
      $region20: #{forward.7} parent=5 // pred_fallthru
        _
      %p123 = scmp.le.s32.totalorder 1, %s9
      %p124 = scmp.lt.s32.totalorder %s9, 3
      %p125 = pnand %p123, %p124
      %p126 = pneg %p125
      // Predicated region
      $region25: #{forward.7} parent=5 // pred_check
        _
      $region26: #{forward.7} parent=5 // pred_check_branch
        %128 = sbr.rel (%p125) target = $region28
      $region27: #{forward.7} parent=5 // pred_region
        %s129 = ssub.s32 %s9, 1
        // Predicated region
        $region29: #{forward.7} parent=27 // pred_check
          %p130 = pneg %p56
        $region30: #{forward.7} parent=27 // pred_check_branch
          %132 = sbr.rel (%p130) target = $region32
        $region31: #{forward.7} parent=27 // pred_region
          %134 = dma.done [#allocation3], 13824
        $region32: #{forward.7} parent=27 // pred_fallthru
          _
        %p135 = scmp.lt.s32.totalorder %s14, 1
        %s136 = scalar_select %p135, %s14, 1
        %s137 = smul.addr %s136, 4
        %s138 = smul.addr %s137, 8
        %s139 = scalar_lea.vmem %s0, %s138
        %p140 = pneg %p35
        %p141 = pneg %p32
        %p142 = pneg %p56
        %p143 = pneg %p53
        %p144 = pneg %p82
        %p145 = pneg %p79
        %p146 = scmp.lt.s32.totalorder %s14, 1
        %s147 = scalar_select %p146, %s14, 1
        %s148 = smul.addr %s147, 8
        %s149 = scalar_lea.vmem %s2, %s148
        %p150 = scmp.lt.s32.totalorder %s14, 1
        %s151 = scalar_select %p150, %s14, 1
        %s152 = smul.addr %s151, 4
        %s153 = smul.addr %s152, 8
        %s154 = scalar_lea.vmem %s0, %s153
        %p155 = scmp.lt.s32.totalorder %s14, 1
        %s156 = scalar_select %p155, %s14, 1
        %s157 = smul.addr %s156, 8
        %s158 = scalar_lea.vmem %s2, %s157
        %v160 = vld [vmem:[%s154] sm:$0xff]
        %v161 = vld [vmem:[%s154 + $0x8] sm:$0xff]
        %v162 = vld [vmem:[%s154 + $0x10] sm:$0xff]
        %v163 = vld [vmem:[%s154 + $0x18] sm:$0xff]
        %v164 = vpack.c.bf16 %v161, %v160
        %v165 = vpack.c.bf16 %v163, %v162
        %v168 = vunpack.c.l.b16 %v164
        %v169 = vunpack.c.h.b16 %v164
        %v170 = vunpack.c.l.b16 %v165
        %v171 = vunpack.c.h.b16 %v165
        %v172 = vpack.c.b16 %v170, %v168
        %v173 = vpack.c.b16 %v171, %v169
        %174 = vrot.lane.b32.xlu0 %v172, 16
        %v175 = vpop.permute.xlu0 %174
        %176 = vrot.lane.b32.xlu0 %v173, 16
        %v177 = vpop.permute.xlu0 %176
        %vm178 = vcmask 130048
        %v179 = vsel %vm178, %v175, %v177
        %vm180 = vcmask 130048
        %v183 = vsel %vm180, 0, %v175
        %v185 = vsel %vm180, %v177, 0
        %v186 = vshrl.u32 %v183, 16
        %v188 = vrot.slane %v186, 7
        %v189 = vshll.u32 %v183, 16
        %v191 = vor.u32 %v188, %v189
        %v193 = vshrl.u32 %v179, 16
        %v195 = vrot.slane %v193, 7
        %v196 = vshll.u32 %v179, 16
        %v198 = vor.u32 %v195, %v196
        %v199 = vshrl.u32 %v185, 16
        %v201 = vrot.slane %v199, 7
        %v202 = vshll.u32 %v185, 16
        %v204 = vor.u32 %v201, %v202
        %vm211 = vcmask 1040384
        %vm212 = vsmask.f32 256
        %vm213 = vmand %vm211, %vm212
        %v214 = vsel %vm213, 0, %v191
        %v215 = vsel %vm213, 0, %v198
        %v216 = vsel %vm213, 0, %v204
        %v217 = vsel %vm213, %v188, 0
        %v218 = vsel %vm213, %v195, 0
        %v219 = vsel %vm213, %v201, 0
        %v220 = vld [vmem:[#allocation2] sm:$0xff]
        %v221 = vld [vmem:[#allocation2 + $0x8] sm:$0xff]
        %v222 = vld [vmem:[#allocation2 + $0x10] sm:$0xff]
        %v223 = vld [vmem:[#allocation2 + $0x18] sm:$0xff]
        %v224 = vld [vmem:[#allocation2 + $0x20] sm:$0xff]
        %v225 = vld [vmem:[#allocation2 + $0x28] sm:$0xff]
        %v226 = vld [vmem:[#allocation2 + $0x30] sm:$0xff]
        %v227 = vld [vmem:[#allocation2 + $0x38] sm:$0xff]
        %v228 = vld [vmem:[#allocation2 + $0x40] sm:$0xff]
        %v229 = vld [vmem:[#allocation2 + $0x48] sm:$0xff]
        %v230 = vld [vmem:[#allocation2 + $0x50] sm:$0xff]
        %v231 = vld [vmem:[#allocation2 + $0x58] sm:$0xff]
        %v232 = vld [vmem:[#allocation2 + $0x60] sm:$0xff]
        %v233 = vld [vmem:[#allocation2 + $0x68] sm:$0xff]
        %v234 = vld [vmem:[#allocation2 + $0x70] sm:$0xff]
        %v235 = vld [vmem:[#allocation2 + $0x78] sm:$0xff]
        %v236 = vld [vmem:[#allocation2 + $0x80] sm:$0xff]
        %v237 = vld [vmem:[#allocation2 + $0x88] sm:$0xff]
        %v238 = vld [vmem:[#allocation2 + $0x90] sm:$0xff]
        %v239 = vld [vmem:[#allocation2 + $0x98] sm:$0xff]
        %v240 = vld [vmem:[#allocation2 + $0xa0] sm:$0xff]
        %v241 = vld [vmem:[#allocation2 + $0xa8] sm:$0xff]
        %v242 = vld [vmem:[#allocation2 + $0xb0] sm:$0xff]
        %v243 = vld [vmem:[#allocation2 + $0xb8] sm:$0xff]
        %v244 = vld [vmem:[#allocation2 + $0xc0] sm:$0xff]
        %v245 = vld [vmem:[#allocation2 + $0xc8] sm:$0xff]
        %v246 = vld [vmem:[#allocation2 + $0xd0] sm:$0xff]
        %v247 = vld [vmem:[#allocation2 + $0xd8] sm:$0xff]
        %v248 = vld [vmem:[#allocation2 + $0xe0] sm:$0xff]
        %v249 = vld [vmem:[#allocation2 + $0xe8] sm:$0xff]
        %v250 = vld [vmem:[#allocation2 + $0xf0] sm:$0xff]
        %v251 = vld [vmem:[#allocation2 + $0xf8] sm:$0xff]
        %v252 = vld [vmem:[#allocation2 + $0x100] sm:$0xff]
        %v253 = vld [vmem:[#allocation2 + $0x108] sm:$0xff]
        %v254 = vld [vmem:[#allocation2 + $0x110] sm:$0xff]
        %v255 = vld [vmem:[#allocation2 + $0x118] sm:$0xff]
        %s256 = scalar_lea.vmem [#allocation2], 288
        %v257 = vld [vmem:[%s256] sm:$0xff]
        %v258 = vld [vmem:[%s256 + $0x8] sm:$0xff]
        %v259 = vld [vmem:[%s256 + $0x10] sm:$0xff]
        %v260 = vld [vmem:[%s256 + $0x18] sm:$0xff]
        %v261 = vld [vmem:[%s256 + $0x20] sm:$0xff]
        %v262 = vld [vmem:[%s256 + $0x28] sm:$0xff]
        %v263 = vld [vmem:[%s256 + $0x30] sm:$0xff]
        %v264 = vld [vmem:[%s256 + $0x38] sm:$0xff]
        %v265 = vld [vmem:[%s256 + $0x40] sm:$0xff]
        %v266 = vld [vmem:[%s256 + $0x48] sm:$0xff]
        %v267 = vld [vmem:[%s256 + $0x50] sm:$0xff]
        %v268 = vld [vmem:[%s256 + $0x58] sm:$0xff]
        %v269 = vld [vmem:[%s256 + $0x60] sm:$0xff]
        %v270 = vld [vmem:[%s256 + $0x68] sm:$0xff]
        %v271 = vld [vmem:[%s256 + $0x70] sm:$0xff]
        %v272 = vld [vmem:[%s256 + $0x78] sm:$0xff]
        %v273 = vld [vmem:[%s256 + $0x80] sm:$0xff]
        %v274 = vld [vmem:[%s256 + $0x88] sm:$0xff]
        %v275 = vld [vmem:[%s256 + $0x90] sm:$0xff]
        %v276 = vld [vmem:[%s256 + $0x98] sm:$0xff]
        %v277 = vld [vmem:[%s256 + $0xa0] sm:$0xff]
        %v278 = vld [vmem:[%s256 + $0xa8] sm:$0xff]
        %v279 = vld [vmem:[%s256 + $0xb0] sm:$0xff]
        %v280 = vld [vmem:[%s256 + $0xb8] sm:$0xff]
        %v281 = vld [vmem:[%s256 + $0xc0] sm:$0xff]
        %v282 = vld [vmem:[%s256 + $0xc8] sm:$0xff]
        %v283 = vld [vmem:[%s256 + $0xd0] sm:$0xff]
        %v284 = vld [vmem:[%s256 + $0xd8] sm:$0xff]
        %v285 = vld [vmem:[%s256 + $0xe0] sm:$0xff]
        %v286 = vld [vmem:[%s256 + $0xe8] sm:$0xff]
        %v287 = vld [vmem:[%s256 + $0xf0] sm:$0xff]
        %v288 = vld [vmem:[%s256 + $0xf8] sm:$0xff]
        %v289 = vld [vmem:[%s256 + $0x100] sm:$0xff]
        %v290 = vld [vmem:[%s256 + $0x108] sm:$0xff]
        %v291 = vld [vmem:[%s256 + $0x110] sm:$0xff]
        %v292 = vld [vmem:[%s256 + $0x118] sm:$0xff]
        %vm293 = vsmask.f32 7424
        %v295 = vshrl.u32 %v214, 16
        %v297 = vshll.u32 %v214, 16
        %v299 = vrot.slane %v297, 1
        %v300 = vor.u32 %v295, %v299
        %v302 = vshll.u32 %v217, 16
        %v304 = vrot.slane %v302, 1
        %v305 = vsel %vm293, %v300, %v304
        %v307 = vshrl.u32 %v215, 16
        %v309 = vshll.u32 %v215, 16
        %v311 = vrot.slane %v309, 1
        %v312 = vor.u32 %v307, %v311
        %v314 = vshll.u32 %v218, 16
        %v316 = vrot.slane %v314, 1
        %v317 = vsel %vm293, %v312, %v316
        %v319 = vshrl.u32 %v216, 16
        %v321 = vshll.u32 %v216, 16
        %v323 = vrot.slane %v321, 1
        %v324 = vor.u32 %v319, %v323
        %v326 = vshll.u32 %v219, 16
        %v328 = vrot.slane %v326, 1
        %v329 = vsel %vm293, %v324, %v328
        %v368 = vunpack.c.l.b16 %v257
        %v369 = vunpack.c.h.b16 %v257
        %v370 = vunpack.c.l.b16 %v258
        %v371 = vunpack.c.h.b16 %v258
        %v372 = vunpack.c.l.b16 %v259
        %v373 = vunpack.c.h.b16 %v259
        %v374 = vunpack.c.l.b16 %v260
        %v375 = vunpack.c.h.b16 %v260
        %v376 = vunpack.c.l.b16 %v261
        %v377 = vunpack.c.h.b16 %v261
        %v378 = vunpack.c.l.b16 %v262
        %v379 = vunpack.c.h.b16 %v262
        %v380 = vunpack.c.l.b16 %v263
        %v381 = vunpack.c.h.b16 %v263
        %v382 = vunpack.c.l.b16 %v264
        %v383 = vunpack.c.h.b16 %v264
        %v384 = vunpack.c.l.b16 %v265
        %v385 = vunpack.c.h.b16 %v265
        %v386 = vunpack.c.l.b16 %v266
        %v387 = vunpack.c.h.b16 %v266
        %v388 = vunpack.c.l.b16 %v267
        %v389 = vunpack.c.h.b16 %v267
        %v390 = vunpack.c.l.b16 %v268
        %v391 = vunpack.c.h.b16 %v268
        %v392 = vunpack.c.l.b16 %v269
        %v393 = vunpack.c.h.b16 %v269
        %v394 = vunpack.c.l.b16 %v270
        %v395 = vunpack.c.h.b16 %v270
        %v396 = vunpack.c.l.b16 %v271
        %v397 = vunpack.c.h.b16 %v271
        %v398 = vunpack.c.l.b16 %v272
        %v399 = vunpack.c.h.b16 %v272
        %v400 = vunpack.c.l.b16 %v273
        %v401 = vunpack.c.h.b16 %v273
        %v402 = vunpack.c.l.b16 %v274
        %v403 = vunpack.c.h.b16 %v274
        %v404 = vunpack.c.l.b16 %v275
        %v405 = vunpack.c.h.b16 %v275
        %v406 = vunpack.c.l.b16 %v276
        %v407 = vunpack.c.h.b16 %v276
        %v408 = vunpack.c.l.b16 %v277
        %v409 = vunpack.c.h.b16 %v277
        %v410 = vunpack.c.l.b16 %v278
        %v411 = vunpack.c.h.b16 %v278
        %v412 = vunpack.c.l.b16 %v279
        %v413 = vunpack.c.h.b16 %v279
        %v414 = vunpack.c.l.b16 %v280
        %v415 = vunpack.c.h.b16 %v280
        %v416 = vunpack.c.l.b16 %v281
        %v417 = vunpack.c.h.b16 %v281
        %v418 = vunpack.c.l.b16 %v282
        %v419 = vunpack.c.h.b16 %v282
        %v420 = vunpack.c.l.b16 %v283
        %v421 = vunpack.c.h.b16 %v283
        %v422 = vunpack.c.l.b16 %v284
        %v423 = vunpack.c.h.b16 %v284
        %v424 = vunpack.c.l.b16 %v285
        %v425 = vunpack.c.h.b16 %v285
        %v426 = vunpack.c.l.b16 %v286
        %v427 = vunpack.c.h.b16 %v286
        %v428 = vunpack.c.l.b16 %v287
        %v429 = vunpack.c.h.b16 %v287
        %v430 = vunpack.c.l.b16 %v288
        %v431 = vunpack.c.h.b16 %v288
        %v432 = vunpack.c.l.b16 %v289
        %v433 = vunpack.c.h.b16 %v289
        %v434 = vunpack.c.l.b16 %v290
        %v435 = vunpack.c.h.b16 %v290
        %v436 = vunpack.c.l.b16 %v291
        %v437 = vunpack.c.h.b16 %v291
        %v438 = vunpack.c.l.b16 %v292
        %v439 = vunpack.c.h.b16 %v292
        %v440 = vpack.c.b16 %v370, %v368
        %v441 = vpack.c.b16 %v371, %v369
        %v442 = vpack.c.b16 %v374, %v372
        %v443 = vpack.c.b16 %v375, %v373
        %v444 = vpack.c.b16 %v378, %v376
        %v445 = vpack.c.b16 %v379, %v377
        %v446 = vpack.c.b16 %v382, %v380
        %v447 = vpack.c.b16 %v383, %v381
        %v448 = vpack.c.b16 %v386, %v384
        %v449 = vpack.c.b16 %v387, %v385
        %v450 = vpack.c.b16 %v390, %v388
        %v451 = vpack.c.b16 %v391, %v389
        %v452 = vpack.c.b16 %v394, %v392
        %v453 = vpack.c.b16 %v395, %v393
        %v454 = vpack.c.b16 %v398, %v396
        %v455 = vpack.c.b16 %v399, %v397
        %v456 = vpack.c.b16 %v402, %v400
        %v457 = vpack.c.b16 %v403, %v401
        %v458 = vpack.c.b16 %v406, %v404
        %v459 = vpack.c.b16 %v407, %v405
        %v460 = vpack.c.b16 %v410, %v408
        %v461 = vpack.c.b16 %v411, %v409
        %v462 = vpack.c.b16 %v414, %v412
        %v463 = vpack.c.b16 %v415, %v413
        %v464 = vpack.c.b16 %v418, %v416
        %v465 = vpack.c.b16 %v419, %v417
        %v466 = vpack.c.b16 %v422, %v420
        %v467 = vpack.c.b16 %v423, %v421
        %v468 = vpack.c.b16 %v426, %v424
        %v469 = vpack.c.b16 %v427, %v425
        %v470 = vpack.c.b16 %v430, %v428
        %v471 = vpack.c.b16 %v431, %v429
        %v472 = vpack.c.b16 %v434, %v432
        %v473 = vpack.c.b16 %v435, %v433
        %v474 = vpack.c.b16 %v438, %v436
        %v475 = vpack.c.b16 %v439, %v437
        %vm512 = vcmask 261120
        %v514 = vsel %vm512, %v329, 0
        %516 = vmatpush.bf16.msra.mxu0 %v454
        %517 = vmatpush.bf16.msra.mxu0 %v452
        %518 = vmatpush.bf16.msra.mxu0 %v450
        %519 = vmatpush.bf16.msra.mxu0 %v448
        %520 = vmatpush.bf16.msra.mxu0 %v446
        %521 = vmatpush.bf16.msra.mxu0 %v444
        %522 = vmatpush.bf16.msra.mxu0 %v442
        %523 = vmatpush.bf16.msra.mxu0 %v440
        %524 = vmatmul.bf16.gmra.mxu0 %v305
        %v525 = vpop.f32.mrf.mxu0
        %v526 = vadd.f32 0.0, %v525
        %v527 = vpop.f32.mrf.mxu0
        %v528 = vadd.f32 0.0, %v527
        %529 = vdwg.mxu0
        %530 = vmatpush.bf16.msra.mxu0 %v470
        %531 = vmatpush.bf16.msra.mxu0 %v468
        %532 = vmatpush.bf16.msra.mxu0 %v466
        %533 = vmatpush.bf16.msra.mxu0 %v464
        %534 = vmatpush.bf16.msra.mxu0 %v462
        %535 = vmatpush.bf16.msra.mxu0 %v460
        %536 = vmatpush.bf16.msra.mxu0 %v458
        %537 = vmatpush.bf16.msra.mxu0 %v456
        %538 = vmatmul.bf16.gmra.mxu0 %v317
        %v539 = vpop.f32.mrf.mxu0
        %v540 = vadd.f32 %v526, %v539
        %v541 = vpop.f32.mrf.mxu0
        %v542 = vadd.f32 %v528, %v541
        %543 = vdwg.mxu0
        %544 = vmatpush.bf16.msra.mxu0 0
        %545 = vmatpush.bf16.msra.mxu0 0
        %546 = vmatpush.bf16.msra.mxu0 0
        %547 = vmatpush.bf16.msra.mxu0 0
        %548 = vmatpush.bf16.msra.mxu0 0
        %549 = vmatpush.bf16.msra.mxu0 0
        %550 = vmatpush.bf16.msra.mxu0 %v474
        %551 = vmatpush.bf16.msra.mxu0 %v472
        %552 = vmatmul.bf16.gmra.mxu0 %v514
        %v553 = vpop.f32.mrf.mxu0
        %v554 = vadd.f32 %v540, %v553
        %v555 = vpop.f32.mrf.mxu0
        %v556 = vadd.f32 %v542, %v555
        %557 = vdwg.mxu0
        %558 = vmatpush.bf16.msra.mxu0 %v455
        %559 = vmatpush.bf16.msra.mxu0 %v453
        %560 = vmatpush.bf16.msra.mxu0 %v451
        %561 = vmatpush.bf16.msra.mxu0 %v449
        %562 = vmatpush.bf16.msra.mxu0 %v447
        %563 = vmatpush.bf16.msra.mxu0 %v445
        %564 = vmatpush.bf16.msra.mxu0 %v443
        %565 = vmatpush.bf16.msra.mxu0 %v441
        %566 = vmatmul.bf16.gmra.mxu0 %v305
        %v567 = vpop.f32.mrf.mxu0
        %v568 = vadd.f32 0.0, %v567
        %v569 = vpop.f32.mrf.mxu0
        %v570 = vadd.f32 0.0, %v569
        %571 = vdwg.mxu0
        %572 = vmatpush.bf16.msra.mxu0 %v471
        %573 = vmatpush.bf16.msra.mxu0 %v469
        %574 = vmatpush.bf16.msra.mxu0 %v467
        %575 = vmatpush.bf16.msra.mxu0 %v465
        %576 = vmatpush.bf16.msra.mxu0 %v463
        %577 = vmatpush.bf16.msra.mxu0 %v461
        %578 = vmatpush.bf16.msra.mxu0 %v459
        %579 = vmatpush.bf16.msra.mxu0 %v457
        %580 = vmatmul.bf16.gmra.mxu0 %v317
        %v581 = vpop.f32.mrf.mxu0
        %v582 = vadd.f32 %v568, %v581
        %v583 = vpop.f32.mrf.mxu0
        %v584 = vadd.f32 %v570, %v583
        %585 = vdwg.mxu0
        %586 = vmatpush.bf16.msra.mxu0 0
        %587 = vmatpush.bf16.msra.mxu0 0
        %588 = vmatpush.bf16.msra.mxu0 0
        %589 = vmatpush.bf16.msra.mxu0 0
        %590 = vmatpush.bf16.msra.mxu0 0
        %591 = vmatpush.bf16.msra.mxu0 0
        %592 = vmatpush.bf16.msra.mxu0 %v475
        %593 = vmatpush.bf16.msra.mxu0 %v473
        %594 = vmatmul.bf16.gmra.mxu0 %v514
        %v595 = vpop.f32.mrf.mxu0
        %v596 = vadd.f32 %v582, %v595
        %v597 = vpop.f32.mrf.mxu0
        %v598 = vadd.f32 %v584, %v597
        %599 = vdwg.mxu0
        %v636 = vunpack.c.l.b16 %v220
        %v637 = vunpack.c.h.b16 %v220
        %v638 = vunpack.c.l.b16 %v221
        %v639 = vunpack.c.h.b16 %v221
        %v640 = vunpack.c.l.b16 %v222
        %v641 = vunpack.c.h.b16 %v222
        %v642 = vunpack.c.l.b16 %v223
        %v643 = vunpack.c.h.b16 %v223
        %v644 = vunpack.c.l.b16 %v224
        %v645 = vunpack.c.h.b16 %v224
        %v646 = vunpack.c.l.b16 %v225
        %v647 = vunpack.c.h.b16 %v225
        %v648 = vunpack.c.l.b16 %v226
        %v649 = vunpack.c.h.b16 %v226
        %v650 = vunpack.c.l.b16 %v227
        %v651 = vunpack.c.h.b16 %v227
        %v652 = vunpack.c.l.b16 %v228
        %v653 = vunpack.c.h.b16 %v228
        %v654 = vunpack.c.l.b16 %v229
        %v655 = vunpack.c.h.b16 %v229
        %v656 = vunpack.c.l.b16 %v230
        %v657 = vunpack.c.h.b16 %v230
        %v658 = vunpack.c.l.b16 %v231
        %v659 = vunpack.c.h.b16 %v231
        %v660 = vunpack.c.l.b16 %v232
        %v661 = vunpack.c.h.b16 %v232
        %v662 = vunpack.c.l.b16 %v233
        %v663 = vunpack.c.h.b16 %v233
        %v664 = vunpack.c.l.b16 %v234
        %v665 = vunpack.c.h.b16 %v234
        %v666 = vunpack.c.l.b16 %v235
        %v667 = vunpack.c.h.b16 %v235
        %v668 = vunpack.c.l.b16 %v236
        %v669 = vunpack.c.h.b16 %v236
        %v670 = vunpack.c.l.b16 %v237
        %v671 = vunpack.c.h.b16 %v237
        %v672 = vunpack.c.l.b16 %v238
        %v673 = vunpack.c.h.b16 %v238
        %v674 = vunpack.c.l.b16 %v239
        %v675 = vunpack.c.h.b16 %v239
        %v676 = vunpack.c.l.b16 %v240
        %v677 = vunpack.c.h.b16 %v240
        %v678 = vunpack.c.l.b16 %v241
        %v679 = vunpack.c.h.b16 %v241
        %v680 = vunpack.c.l.b16 %v242
        %v681 = vunpack.c.h.b16 %v242
        %v682 = vunpack.c.l.b16 %v243
        %v683 = vunpack.c.h.b16 %v243
        %v684 = vunpack.c.l.b16 %v244
        %v685 = vunpack.c.h.b16 %v244
        %v686 = vunpack.c.l.b16 %v245
        %v687 = vunpack.c.h.b16 %v245
        %v688 = vunpack.c.l.b16 %v246
        %v689 = vunpack.c.h.b16 %v246
        %v690 = vunpack.c.l.b16 %v247
        %v691 = vunpack.c.h.b16 %v247
        %v692 = vunpack.c.l.b16 %v248
        %v693 = vunpack.c.h.b16 %v248
        %v694 = vunpack.c.l.b16 %v249
        %v695 = vunpack.c.h.b16 %v249
        %v696 = vunpack.c.l.b16 %v250
        %v697 = vunpack.c.h.b16 %v250
        %v698 = vunpack.c.l.b16 %v251
        %v699 = vunpack.c.h.b16 %v251
        %v700 = vunpack.c.l.b16 %v252
        %v701 = vunpack.c.h.b16 %v252
        %v702 = vunpack.c.l.b16 %v253
        %v703 = vunpack.c.h.b16 %v253
        %v704 = vunpack.c.l.b16 %v254
        %v705 = vunpack.c.h.b16 %v254
        %v706 = vunpack.c.l.b16 %v255
        %v707 = vunpack.c.h.b16 %v255
        %v708 = vpack.c.b16 %v638, %v636
        %v709 = vpack.c.b16 %v639, %v637
        %v710 = vpack.c.b16 %v642, %v640
        %v711 = vpack.c.b16 %v643, %v641
        %v712 = vpack.c.b16 %v646, %v644
        %v713 = vpack.c.b16 %v647, %v645
        %v714 = vpack.c.b16 %v650, %v648
        %v715 = vpack.c.b16 %v651, %v649
        %v716 = vpack.c.b16 %v654, %v652
        %v717 = vpack.c.b16 %v655, %v653
        %v718 = vpack.c.b16 %v658, %v656
        %v719 = vpack.c.b16 %v659, %v657
        %v720 = vpack.c.b16 %v662, %v660
        %v721 = vpack.c.b16 %v663, %v661
        %v722 = vpack.c.b16 %v666, %v664
        %v723 = vpack.c.b16 %v667, %v665
        %v724 = vpack.c.b16 %v670, %v668
        %v725 = vpack.c.b16 %v671, %v669
        %v726 = vpack.c.b16 %v674, %v672
        %v727 = vpack.c.b16 %v675, %v673
        %v728 = vpack.c.b16 %v678, %v676
        %v729 = vpack.c.b16 %v679, %v677
        %v730 = vpack.c.b16 %v682, %v680
        %v731 = vpack.c.b16 %v683, %v681
        %v732 = vpack.c.b16 %v686, %v684
        %v733 = vpack.c.b16 %v687, %v685
        %v734 = vpack.c.b16 %v690, %v688
        %v735 = vpack.c.b16 %v691, %v689
        %v736 = vpack.c.b16 %v694, %v692
        %v737 = vpack.c.b16 %v695, %v693
        %v738 = vpack.c.b16 %v698, %v696
        %v739 = vpack.c.b16 %v699, %v697
        %v740 = vpack.c.b16 %v702, %v700
        %v741 = vpack.c.b16 %v703, %v701
        %v742 = vpack.c.b16 %v706, %v704
        %v743 = vpack.c.b16 %v707, %v705
        %v780 = vsel %vm512, %v216, 0
        %782 = vmatpush.bf16.msra.mxu0 %v722
        %783 = vmatpush.bf16.msra.mxu0 %v720
        %784 = vmatpush.bf16.msra.mxu0 %v718
        %785 = vmatpush.bf16.msra.mxu0 %v716
        %786 = vmatpush.bf16.msra.mxu0 %v714
        %787 = vmatpush.bf16.msra.mxu0 %v712
        %788 = vmatpush.bf16.msra.mxu0 %v710
        %789 = vmatpush.bf16.msra.mxu0 %v708
        %790 = vmatmul.bf16.gmra.mxu0 %v214
        %v791 = vpop.f32.mrf.mxu0
        %v792 = vadd.f32 %v554, %v791
        %v793 = vpop.f32.mrf.mxu0
        %v794 = vadd.f32 %v556, %v793
        %795 = vdwg.mxu0
        %796 = vmatpush.bf16.msra.mxu0 %v738
        %797 = vmatpush.bf16.msra.mxu0 %v736
        %798 = vmatpush.bf16.msra.mxu0 %v734
        %799 = vmatpush.bf16.msra.mxu0 %v732
        %800 = vmatpush.bf16.msra.mxu0 %v730
        %801 = vmatpush.bf16.msra.mxu0 %v728
        %802 = vmatpush.bf16.msra.mxu0 %v726
        %803 = vmatpush.bf16.msra.mxu0 %v724
        %804 = vmatmul.bf16.gmra.mxu0 %v215
        %v805 = vpop.f32.mrf.mxu0
        %v806 = vadd.f32 %v792, %v805
        %v807 = vpop.f32.mrf.mxu0
        %v808 = vadd.f32 %v794, %v807
        %809 = vdwg.mxu0
        %810 = vmatpush.bf16.msra.mxu0 0
        %811 = vmatpush.bf16.msra.mxu0 0
        %812 = vmatpush.bf16.msra.mxu0 0
        %813 = vmatpush.bf16.msra.mxu0 0
        %814 = vmatpush.bf16.msra.mxu0 0
        %815 = vmatpush.bf16.msra.mxu0 0
        %816 = vmatpush.bf16.msra.mxu0 %v742
        %817 = vmatpush.bf16.msra.mxu0 %v740
        %818 = vmatmul.bf16.gmra.mxu0 %v780
        %v819 = vpop.f32.mrf.mxu0
        %v820 = vadd.f32 %v806, %v819
        %v821 = vpop.f32.mrf.mxu0
        %v822 = vadd.f32 %v808, %v821
        %823 = vdwg.mxu0
        %824 = vmatpush.bf16.msra.mxu0 %v723
        %825 = vmatpush.bf16.msra.mxu0 %v721
        %826 = vmatpush.bf16.msra.mxu0 %v719
        %827 = vmatpush.bf16.msra.mxu0 %v717
        %828 = vmatpush.bf16.msra.mxu0 %v715
        %829 = vmatpush.bf16.msra.mxu0 %v713
        %830 = vmatpush.bf16.msra.mxu0 %v711
        %831 = vmatpush.bf16.msra.mxu0 %v709
        %832 = vmatmul.bf16.gmra.mxu0 %v214
        %v833 = vpop.f32.mrf.mxu0
        %v834 = vadd.f32 %v596, %v833
        %v835 = vpop.f32.mrf.mxu0
        %v836 = vadd.f32 %v598, %v835
        %837 = vdwg.mxu0
        %838 = vmatpush.bf16.msra.mxu0 %v739
        %839 = vmatpush.bf16.msra.mxu0 %v737
        %840 = vmatpush.bf16.msra.mxu0 %v735
        %841 = vmatpush.bf16.msra.mxu0 %v733
        %842 = vmatpush.bf16.msra.mxu0 %v731
        %843 = vmatpush.bf16.msra.mxu0 %v729
        %844 = vmatpush.bf16.msra.mxu0 %v727
        %845 = vmatpush.bf16.msra.mxu0 %v725
        %846 = vmatmul.bf16.gmra.mxu0 %v215
        %v847 = vpop.f32.mrf.mxu0
        %v848 = vadd.f32 %v834, %v847
        %v849 = vpop.f32.mrf.mxu0
        %v850 = vadd.f32 %v836, %v849
        %851 = vdwg.mxu0
        %852 = vmatpush.bf16.msra.mxu0 0
        %853 = vmatpush.bf16.msra.mxu0 0
        %854 = vmatpush.bf16.msra.mxu0 0
        %855 = vmatpush.bf16.msra.mxu0 0
        %856 = vmatpush.bf16.msra.mxu0 0
        %857 = vmatpush.bf16.msra.mxu0 0
        %858 = vmatpush.bf16.msra.mxu0 %v743
        %859 = vmatpush.bf16.msra.mxu0 %v741
        %860 = vmatmul.bf16.gmra.mxu0 %v780
        %v861 = vpop.f32.mrf.mxu0
        %v862 = vadd.f32 %v848, %v861
        %v863 = vpop.f32.mrf.mxu0
        %v864 = vadd.f32 %v850, %v863
        %865 = vdwg.mxu0
        %s866 = scalar_lea.vmem [#allocation2], 576
        %v867 = vld [vmem:[%s866] sm:$0xff]
        %v868 = vld [vmem:[%s866 + $0x8] sm:$0xff]
        %v869 = vld [vmem:[%s866 + $0x10] sm:$0xff]
        %v870 = vld [vmem:[%s866 + $0x18] sm:$0xff]
        %v871 = vld [vmem:[%s866 + $0x20] sm:$0xff]
        %v872 = vld [vmem:[%s866 + $0x28] sm:$0xff]
        %v873 = vld [vmem:[%s866 + $0x30] sm:$0xff]
        %v874 = vld [vmem:[%s866 + $0x38] sm:$0xff]
        %v875 = vld [vmem:[%s866 + $0x40] sm:$0xff]
        %v876 = vld [vmem:[%s866 + $0x48] sm:$0xff]
        %v877 = vld [vmem:[%s866 + $0x50] sm:$0xff]
        %v878 = vld [vmem:[%s866 + $0x58] sm:$0xff]
        %v879 = vld [vmem:[%s866 + $0x60] sm:$0xff]
        %v880 = vld [vmem:[%s866 + $0x68] sm:$0xff]
        %v881 = vld [vmem:[%s866 + $0x70] sm:$0xff]
        %v882 = vld [vmem:[%s866 + $0x78] sm:$0xff]
        %v883 = vld [vmem:[%s866 + $0x80] sm:$0xff]
        %v884 = vld [vmem:[%s866 + $0x88] sm:$0xff]
        %v885 = vld [vmem:[%s866 + $0x90] sm:$0xff]
        %v886 = vld [vmem:[%s866 + $0x98] sm:$0xff]
        %v887 = vld [vmem:[%s866 + $0xa0] sm:$0xff]
        %v888 = vld [vmem:[%s866 + $0xa8] sm:$0xff]
        %v889 = vld [vmem:[%s866 + $0xb0] sm:$0xff]
        %v890 = vld [vmem:[%s866 + $0xb8] sm:$0xff]
        %v891 = vld [vmem:[%s866 + $0xc0] sm:$0xff]
        %v892 = vld [vmem:[%s866 + $0xc8] sm:$0xff]
        %v893 = vld [vmem:[%s866 + $0xd0] sm:$0xff]
        %v894 = vld [vmem:[%s866 + $0xd8] sm:$0xff]
        %v895 = vld [vmem:[%s866 + $0xe0] sm:$0xff]
        %v896 = vld [vmem:[%s866 + $0xe8] sm:$0xff]
        %v897 = vld [vmem:[%s866 + $0xf0] sm:$0xff]
        %v898 = vld [vmem:[%s866 + $0xf8] sm:$0xff]
        %v899 = vld [vmem:[%s866 + $0x100] sm:$0xff]
        %v900 = vld [vmem:[%s866 + $0x108] sm:$0xff]
        %v901 = vld [vmem:[%s866 + $0x110] sm:$0xff]
        %v902 = vld [vmem:[%s866 + $0x118] sm:$0xff]
        %vm909 = vcmask 1046528
        %v910 = vrot.slane %v214, 1
        %v911 = vrot.slane %v217, 1
        %v912 = vsel %vm909, %v910, %v911
        %v913 = vrot.slane %v215, 1
        %v914 = vrot.slane %v218, 1
        %v915 = vsel %vm909, %v913, %v914
        %v916 = vrot.slane %v216, 1
        %v917 = vrot.slane %v219, 1
        %v918 = vsel %vm909, %v916, %v917
        %v957 = vunpack.c.l.b16 %v867
        %v958 = vunpack.c.h.b16 %v867
        %v959 = vunpack.c.l.b16 %v868
        %v960 = vunpack.c.h.b16 %v868
        %v961 = vunpack.c.l.b16 %v869
        %v962 = vunpack.c.h.b16 %v869
        %v963 = vunpack.c.l.b16 %v870
        %v964 = vunpack.c.h.b16 %v870
        %v965 = vunpack.c.l.b16 %v871
        %v966 = vunpack.c.h.b16 %v871
        %v967 = vunpack.c.l.b16 %v872
        %v968 = vunpack.c.h.b16 %v872
        %v969 = vunpack.c.l.b16 %v873
        %v970 = vunpack.c.h.b16 %v873
        %v971 = vunpack.c.l.b16 %v874
        %v972 = vunpack.c.h.b16 %v874
        %v973 = vunpack.c.l.b16 %v875
        %v974 = vunpack.c.h.b16 %v875
        %v975 = vunpack.c.l.b16 %v876
        %v976 = vunpack.c.h.b16 %v876
        %v977 = vunpack.c.l.b16 %v877
        %v978 = vunpack.c.h.b16 %v877
        %v979 = vunpack.c.l.b16 %v878
        %v980 = vunpack.c.h.b16 %v878
        %v981 = vunpack.c.l.b16 %v879
        %v982 = vunpack.c.h.b16 %v879
        %v983 = vunpack.c.l.b16 %v880
        %v984 = vunpack.c.h.b16 %v880
        %v985 = vunpack.c.l.b16 %v881
        %v986 = vunpack.c.h.b16 %v881
        %v987 = vunpack.c.l.b16 %v882
        %v988 = vunpack.c.h.b16 %v882
        %v989 = vunpack.c.l.b16 %v883
        %v990 = vunpack.c.h.b16 %v883
        %v991 = vunpack.c.l.b16 %v884
        %v992 = vunpack.c.h.b16 %v884
        %v993 = vunpack.c.l.b16 %v885
        %v994 = vunpack.c.h.b16 %v885
        %v995 = vunpack.c.l.b16 %v886
        %v996 = vunpack.c.h.b16 %v886
        %v997 = vunpack.c.l.b16 %v887
        %v998 = vunpack.c.h.b16 %v887
        %v999 = vunpack.c.l.b16 %v888
        %v1000 = vunpack.c.h.b16 %v888
        %v1001 = vunpack.c.l.b16 %v889
        %v1002 = vunpack.c.h.b16 %v889
        %v1003 = vunpack.c.l.b16 %v890
        %v1004 = vunpack.c.h.b16 %v890
        %v1005 = vunpack.c.l.b16 %v891
        %v1006 = vunpack.c.h.b16 %v891
        %v1007 = vunpack.c.l.b16 %v892
        %v1008 = vunpack.c.h.b16 %v892
        %v1009 = vunpack.c.l.b16 %v893
        %v1010 = vunpack.c.h.b16 %v893
        %v1011 = vunpack.c.l.b16 %v894
        %v1012 = vunpack.c.h.b16 %v894
        %v1013 = vunpack.c.l.b16 %v895
        %v1014 = vunpack.c.h.b16 %v895
        %v1015 = vunpack.c.l.b16 %v896
        %v1016 = vunpack.c.h.b16 %v896
        %v1017 = vunpack.c.l.b16 %v897
        %v1018 = vunpack.c.h.b16 %v897
        %v1019 = vunpack.c.l.b16 %v898
        %v1020 = vunpack.c.h.b16 %v898
        %v1021 = vunpack.c.l.b16 %v899
        %v1022 = vunpack.c.h.b16 %v899
        %v1023 = vunpack.c.l.b16 %v900
        %v1024 = vunpack.c.h.b16 %v900
        %v1025 = vunpack.c.l.b16 %v901
        %v1026 = vunpack.c.h.b16 %v901
        %v1027 = vunpack.c.l.b16 %v902
        %v1028 = vunpack.c.h.b16 %v902
        %v1029 = vpack.c.b16 %v959, %v957
        %v1030 = vpack.c.b16 %v960, %v958
        %v1031 = vpack.c.b16 %v963, %v961
        %v1032 = vpack.c.b16 %v964, %v962
        %v1033 = vpack.c.b16 %v967, %v965
        %v1034 = vpack.c.b16 %v968, %v966
        %v1035 = vpack.c.b16 %v971, %v969
        %v1036 = vpack.c.b16 %v972, %v970
        %v1037 = vpack.c.b16 %v975, %v973
        %v1038 = vpack.c.b16 %v976, %v974
        %v1039 = vpack.c.b16 %v979, %v977
        %v1040 = vpack.c.b16 %v980, %v978
        %v1041 = vpack.c.b16 %v983, %v981
        %v1042 = vpack.c.b16 %v984, %v982
        %v1043 = vpack.c.b16 %v987, %v985
        %v1044 = vpack.c.b16 %v988, %v986
        %v1045 = vpack.c.b16 %v991, %v989
        %v1046 = vpack.c.b16 %v992, %v990
        %v1047 = vpack.c.b16 %v995, %v993
        %v1048 = vpack.c.b16 %v996, %v994
        %v1049 = vpack.c.b16 %v999, %v997
        %v1050 = vpack.c.b16 %v1000, %v998
        %v1051 = vpack.c.b16 %v1003, %v1001
        %v1052 = vpack.c.b16 %v1004, %v1002
        %v1053 = vpack.c.b16 %v1007, %v1005
        %v1054 = vpack.c.b16 %v1008, %v1006
        %v1055 = vpack.c.b16 %v1011, %v1009
        %v1056 = vpack.c.b16 %v1012, %v1010
        %v1057 = vpack.c.b16 %v1015, %v1013
        %v1058 = vpack.c.b16 %v1016, %v1014
        %v1059 = vpack.c.b16 %v1019, %v1017
        %v1060 = vpack.c.b16 %v1020, %v1018
        %v1061 = vpack.c.b16 %v1023, %v1021
        %v1062 = vpack.c.b16 %v1024, %v1022
        %v1063 = vpack.c.b16 %v1027, %v1025
        %v1064 = vpack.c.b16 %v1028, %v1026
        %v1102 = vsel %vm512, %v918, 0
        %1104 = vmatpush.bf16.msra.mxu0 %v1043
        %1105 = vmatpush.bf16.msra.mxu0 %v1041
        %1106 = vmatpush.bf16.msra.mxu0 %v1039
        %1107 = vmatpush.bf16.msra.mxu0 %v1037
        %1108 = vmatpush.bf16.msra.mxu0 %v1035
        %1109 = vmatpush.bf16.msra.mxu0 %v1033
        %1110 = vmatpush.bf16.msra.mxu0 %v1031
        %1111 = vmatpush.bf16.msra.mxu0 %v1029
        %1112 = vmatmul.bf16.gmra.mxu0 %v912
        %v1113 = vpop.f32.mrf.mxu0
        %v1114 = vadd.f32 0.0, %v1113
        %v1115 = vpop.f32.mrf.mxu0
        %v1116 = vadd.f32 0.0, %v1115
        %1117 = vdwg.mxu0
        %1118 = vmatpush.bf16.msra.mxu0 %v1059
        %1119 = vmatpush.bf16.msra.mxu0 %v1057
        %1120 = vmatpush.bf16.msra.mxu0 %v1055
        %1121 = vmatpush.bf16.msra.mxu0 %v1053
        %1122 = vmatpush.bf16.msra.mxu0 %v1051
        %1123 = vmatpush.bf16.msra.mxu0 %v1049
        %1124 = vmatpush.bf16.msra.mxu0 %v1047
        %1125 = vmatpush.bf16.msra.mxu0 %v1045
        %1126 = vmatmul.bf16.gmra.mxu0 %v915
        %v1127 = vpop.f32.mrf.mxu0
        %v1128 = vadd.f32 %v1114, %v1127
        %v1129 = vpop.f32.mrf.mxu0
        %v1130 = vadd.f32 %v1116, %v1129
        %1131 = vdwg.mxu0
        %1132 = vmatpush.bf16.msra.mxu0 0
        %1133 = vmatpush.bf16.msra.mxu0 0
        %1134 = vmatpush.bf16.msra.mxu0 0
        %1135 = vmatpush.bf16.msra.mxu0 0
        %1136 = vmatpush.bf16.msra.mxu0 0
        %1137 = vmatpush.bf16.msra.mxu0 0
        %1138 = vmatpush.bf16.msra.mxu0 %v1063
        %1139 = vmatpush.bf16.msra.mxu0 %v1061
        %1140 = vmatmul.bf16.gmra.mxu0 %v1102
        %v1141 = vpop.f32.mrf.mxu0
        %v1142 = vadd.f32 %v1128, %v1141
        %v1143 = vpop.f32.mrf.mxu0
        %v1144 = vadd.f32 %v1130, %v1143
        %1145 = vdwg.mxu0
        %1146 = vmatpush.bf16.msra.mxu0 %v1044
        %1147 = vmatpush.bf16.msra.mxu0 %v1042
        %1148 = vmatpush.bf16.msra.mxu0 %v1040
        %1149 = vmatpush.bf16.msra.mxu0 %v1038
        %1150 = vmatpush.bf16.msra.mxu0 %v1036
        %1151 = vmatpush.bf16.msra.mxu0 %v1034
        %1152 = vmatpush.bf16.msra.mxu0 %v1032
        %1153 = vmatpush.bf16.msra.mxu0 %v1030
        %1154 = vmatmul.bf16.gmra.mxu0 %v912
        %v1155 = vpop.f32.mrf.mxu0
        %v1156 = vadd.f32 0.0, %v1155
        %v1157 = vpop.f32.mrf.mxu0
        %v1158 = vadd.f32 0.0, %v1157
        %1159 = vdwg.mxu0
        %1160 = vmatpush.bf16.msra.mxu0 %v1060
        %1161 = vmatpush.bf16.msra.mxu0 %v1058
        %1162 = vmatpush.bf16.msra.mxu0 %v1056
        %1163 = vmatpush.bf16.msra.mxu0 %v1054
        %1164 = vmatpush.bf16.msra.mxu0 %v1052
        %1165 = vmatpush.bf16.msra.mxu0 %v1050
        %1166 = vmatpush.bf16.msra.mxu0 %v1048
        %1167 = vmatpush.bf16.msra.mxu0 %v1046
        %1168 = vmatmul.bf16.gmra.mxu0 %v915
        %v1169 = vpop.f32.mrf.mxu0
        %v1170 = vadd.f32 %v1156, %v1169
        %v1171 = vpop.f32.mrf.mxu0
        %v1172 = vadd.f32 %v1158, %v1171
        %1173 = vdwg.mxu0
        %1174 = vmatpush.bf16.msra.mxu0 0
        %1175 = vmatpush.bf16.msra.mxu0 0
        %1176 = vmatpush.bf16.msra.mxu0 0
        %1177 = vmatpush.bf16.msra.mxu0 0
        %1178 = vmatpush.bf16.msra.mxu0 0
        %1179 = vmatpush.bf16.msra.mxu0 0
        %1180 = vmatpush.bf16.msra.mxu0 %v1064
        %1181 = vmatpush.bf16.msra.mxu0 %v1062
        %1182 = vmatmul.bf16.gmra.mxu0 %v1102
        %v1183 = vpop.f32.mrf.mxu0
        %v1184 = vadd.f32 %v1170, %v1183
        %v1185 = vpop.f32.mrf.mxu0
        %v1186 = vadd.f32 %v1172, %v1185
        %1187 = vdwg.mxu0
        %v1188 = vadd.f32 %v820, %v1142
        %v1189 = vadd.f32 %v862, %v1184
        %v1190 = vadd.f32 %v822, %v1144
        %v1191 = vadd.f32 %v864, %v1186
        %v1192 = vmax.f32 %v1188, 0.0
        %v1193 = vmax.f32 %v1189, 0.0
        %v1194 = vmax.f32 %v1190, 0.0
        %v1195 = vmax.f32 %v1191, 0.0
        %v1198 = vrot.slane %v1192, 1
        %v1199 = vrot.slane %v1193, 1
        %v1202 = vrot.slane %v1192, 2
        %v1203 = vrot.slane %v1193, 2
        %v1206 = vrot.slane %v1192, 3
        %v1207 = vrot.slane %v1193, 3
        %v1212 = vrot.slane %v1194, 4
        %v1213 = vrot.slane %v1195, 4
        %v1216 = vrot.slane %v1194, 5
        %v1217 = vrot.slane %v1195, 5
        %v1220 = vrot.slane %v1194, 6
        %v1221 = vrot.slane %v1195, 6
        %v1224 = vrot.slane %v1194, 7
        %v1225 = vrot.slane %v1195, 7
        %vm1228 = vcmask 1040384
        %v1229 = vsel %vm1228, %v1192, %v1198
        %v1230 = vsel %vm1228, %v1193, %v1199
        %vm1231 = vcmask 1041408
        %v1232 = vsel %vm1231, %v1229, %v1202
        %v1233 = vsel %vm1231, %v1230, %v1203
        %vm1234 = vcmask 1042432
        %v1235 = vsel %vm1234, %v1232, %v1206
        %v1236 = vsel %vm1234, %v1233, %v1207
        %vm1237 = vcmask 1043456
        %v1238 = vsel %vm1237, %v1235, %v1212
        %v1239 = vsel %vm1237, %v1236, %v1213
        %vm1240 = vcmask 1044480
        %v1241 = vsel %vm1240, %v1238, %v1216
        %v1242 = vsel %vm1240, %v1239, %v1217
        %vm1243 = vcmask 1045504
        %v1244 = vsel %vm1243, %v1241, %v1220
        %v1245 = vsel %vm1243, %v1242, %v1221
        %vm1246 = vcmask 1046528
        %v1247 = vsel %vm1246, %v1244, %v1224
        %v1248 = vsel %vm1246, %v1245, %v1225
        %v1249 = vrot.slane %v1192, 4
        %v1250 = vrot.slane %v1193, 4
        %v1253 = vsel %vm1228, %v1198, %v1202
        %v1254 = vsel %vm1228, %v1199, %v1203
        %v1255 = vsel %vm1231, %v1253, %v1206
        %v1256 = vsel %vm1231, %v1254, %v1207
        %v1257 = vsel %vm1234, %v1255, %v1249
        %v1258 = vsel %vm1234, %v1256, %v1250
        %v1259 = vsel %vm1237, %v1257, %v1216
        %v1260 = vsel %vm1237, %v1258, %v1217
        %v1261 = vsel %vm1240, %v1259, %v1220
        %v1262 = vsel %vm1240, %v1260, %v1221
        %v1263 = vsel %vm1243, %v1261, %v1224
        %v1264 = vsel %vm1243, %v1262, %v1225
        %v1265 = vsel %vm1246, %v1263, %v1194
        %v1266 = vsel %vm1246, %v1264, %v1195
        %v1267 = vmax.f32 %v1247, %v1265
        %v1268 = vmax.f32 %v1248, %v1266
        %1270 = vrot.lane.b32.xlu0 %v1267, 112
        %v1271 = vpop.permute.xlu0 %1270
        %1273 = vrot.lane.b32.xlu0 %v1267, 96
        %v1274 = vpop.permute.xlu0 %1273
        %1276 = vrot.lane.b32.xlu0 %v1267, 80
        %v1277 = vpop.permute.xlu0 %1276
        %1280 = vrot.lane.b32.xlu0 %v1268, 64
        %v1281 = vpop.permute.xlu0 %1280
        %1283 = vrot.lane.b32.xlu0 %v1268, 48
        %v1284 = vpop.permute.xlu0 %1283
        %1286 = vrot.lane.b32.xlu0 %v1268, 32
        %v1287 = vpop.permute.xlu0 %1286
        %1289 = vrot.lane.b32.xlu0 %v1268, 16
        %v1290 = vpop.permute.xlu0 %1289
        %v1292 = vsel %vm180, %v1267, %v1271
        %v1293 = vsel %vm512, %v1292, %v1274
        %vm1294 = vcmask 392192
        %v1295 = vsel %vm1294, %v1293, %v1277
        %vm1296 = vcmask 523264
        %v1297 = vsel %vm1296, %v1295, %v1281
        %vm1298 = vcmask 654336
        %v1299 = vsel %vm1298, %v1297, %v1284
        %vm1300 = vcmask 785408
        %v1301 = vsel %vm1300, %v1299, %v1287
        %vm1302 = vcmask 916480
        %v1303 = vsel %vm1302, %v1301, %v1290
        %1304 = vrot.lane.b32.xlu0 %v1267, 64
        %v1305 = vpop.permute.xlu0 %1304
        %v1307 = vsel %vm180, %v1271, %v1274
        %v1308 = vsel %vm512, %v1307, %v1277
        %v1309 = vsel %vm1294, %v1308, %v1305
        %v1310 = vsel %vm1296, %v1309, %v1284
        %v1311 = vsel %vm1298, %v1310, %v1287
        %v1312 = vsel %vm1300, %v1311, %v1290
        %v1313 = vsel %vm1302, %v1312, %v1268
        %v1314 = vmax.f32 %v1303, %v1313
        %1315 = vst [vmem:[%s158] sm:$0xff] %v1314
        %p1316 = scmp.lt.s32.totalorder %s14, 1
        %s1317 = scalar_select %p1316, %s14, 1
        %s1318 = smul.addr %s1317, 8
        %s1319 = scalar_lea.vmem %s2, %s1318
        // Predicated region
        $region33: #{forward.7} parent=27 // pred_check
          %p1320 = pneg %p79
        $region34: #{forward.7} parent=27 // pred_check_branch
          %1322 = sbr.rel (%p1320) target = $region36
        $region35: #{forward.7} parent=27 // pred_region
          _
        $region36: #{forward.7} parent=27 // pred_fallthru
          _
      $region28: #{forward.7} parent=5 // pred_fallthru
        _
      %p1323 = scmp.le.s32.totalorder 2, %s9
      // Predicated region
      $region37: #{forward.7} parent=5 // pred_check
        %p1324 = pneg %p1323
      $region38: #{forward.7} parent=5 // pred_check_branch
        %1326 = sbr.rel (%p1324) target = $region40
      $region39: #{forward.7} parent=5 // pred_region
        %s1327 = ssub.s32 %s9, 2
        // Predicated region
        $region41: #{forward.7} parent=39 // pred_check
          %p1328 = pneg %p85
        $region42: #{forward.7} parent=39 // pred_check_branch
          %1330 = sbr.rel (%p1328) target = $region44
        $region43: #{forward.7} parent=39 // pred_region
          %p1331 = scmp.lt.s32.totalorder %s15, 1
          %s1332 = scalar_select %p1331, %s15, 1
          %s1333 = smul.addr %s1332, 8
          %s1334 = scalar_lea.vmem %s2, %s1333
        $region44: #{forward.7} parent=39 // pred_fallthru
          _
      $region40: #{forward.7} parent=5 // pred_fallthru
        _
    $region6: #{forward.7} parent=1 // loop_footer
      %s13 = sadd.s32 1, %s9
    $region7: #{forward.7} parent=1 // loop_footer_branch
      %8 = sbr.rel target = $region3
    $region8: #{forward.7} parent=1 // loop_exit
      _
    %1335 = vsyncpa [#allocation3], 1
    %s1336 = scalar_lea.sflag [#allocation3], 1
    %1337 = vsyncpa %s1336, 1

// kernel: forward.9
$region0: #{forward.9}
  #allocation0 [shape = 'u32[]', space=smem, size = 0x4, offset = 0x4, fixed_abs, tag = 'smem constant byte address 0x4 - core index']
  #allocation1 [shape = 'u32[72,128]{1,0:T(1,128)}', space=vmem, size = 0x9000, scoped, tag = 'internal scratch']
  %s0 = inlined_call_operand.vmem [shape: f32[2,4,64], index: 0, kind: input, shape index: {}]
  %s1 = inlined_call_operand.vmem [shape: bf16[3,96,64], index: 1, kind: input, shape index: {}]
  %s2 = inlined_call_operand.vmem [shape: f32[2,2,32], index: 2, kind: output, shape index: {}]
  %s3 = sld [smem:[#allocation0]]
  $region41: #{forward.9} parent=0
    _
  %s5 = ssub.s32 1, %s3
  %s6 = scalar_select 0, %s5, %s3
  loop: start=0, step=1, limit=4
  $region2: #{forward.9} parent=0 // loop_pre_header
    _
  $region3: #{forward.9} parent=0 // loop_header
    %s8 = sphi 0, %s12
    %p9 = scmp.ge.s32.totalorder %s8, 4
    %s18 = sphi 0, %s20
    %s21 = sphi 0, %s18
    %s22 = sphi 0, %s21
    %s38 = sphi 0, %s22
    %s42 = sphi 0, %s42
    %s44 = sphi 0, %s42
    %s45 = sphi 0, %s44
    %s59 = sphi 0, %s45
    %s65 = sphi 0, %s67
    %s68 = sphi 0, %s65
    %s69 = sphi 0, %s68
    %s85 = sphi 0, %s69
  $region4: #{forward.9} parent=0 // loop_header_branch
    %11 = sbr.rel (%p9) target = $region8
  $region5: #{forward.9} parent=0 // loop_body
    %s13 = ssub.s32 %s8, 1
    %s14 = ssub.s32 %s8, 2
    %s15 = sadd.s32 %s8, 1
    %s16 = ssub.s32 %s8, %s15
    %p17 = scmp.eq.s32.totalorder %s16, 0
    %s19 = sadd.s32 %s18, 1
    %s20 = scalar_select %p17, %s18, %s19
    %p23 = pneg %p17
    %p24 = scmp.eq.s32.totalorder %s8, 1
    %p25 = por %p23, %p24
    %p26 = scmp.ne.s32.totalorder %s18, %s21
    %p27 = scmp.eq.s32.totalorder %s8, 0
    %p28 = por %p26, %p27
    %p29 = scmp.ne.s32.totalorder %s18, %s21
    %p30 = scmp.eq.s32.totalorder %s13, 1
    %p31 = por %p29, %p30
    %p32 = scmp.ne.s32.totalorder %s21, %s22
    %p33 = scmp.eq.s32.totalorder %s13, 0
    %p34 = por %p32, %p33
    %p35 = scmp.ne.s32.totalorder %s21, %s22
    %p36 = scmp.eq.s32.totalorder %s14, 1
    %p37 = por %p35, %p36
    %p39 = scmp.ne.s32.totalorder %s22, %s38
    %p40 = scmp.eq.s32.totalorder %s14, 0
    %p41 = por %p39, %p40
    %s43 = sadd.s32 %s42, 1
    %p46 = scmp.eq.s32.totalorder %s8, 1
    %p47 = scmp.ne.s32.totalorder %s42, %s44
    %p48 = scmp.eq.s32.totalorder %s8, 0
    %p49 = por %p47, %p48
    %p50 = scmp.ne.s32.totalorder %s42, %s44
    %p51 = scmp.eq.s32.totalorder %s13, 1
    %p52 = por %p50, %p51
    %p53 = scmp.ne.s32.totalorder %s44, %s45
    %p54 = scmp.eq.s32.totalorder %s13, 0
    %p55 = por %p53, %p54
    %p56 = scmp.ne.s32.totalorder %s44, %s45
    %p57 = scmp.eq.s32.totalorder %s14, 1
    %p58 = por %p56, %p57
    %p60 = scmp.ne.s32.totalorder %s45, %s59
    %p61 = scmp.eq.s32.totalorder %s14, 0
    %p62 = por %p60, %p61
    %s63 = ssub.s32 %s8, %s15
    %p64 = scmp.eq.s32.totalorder %s63, 0
    %s66 = sadd.s32 %s65, 1
    %s67 = scalar_select %p64, %s65, %s66
    %p70 = pneg %p64
    %p71 = scmp.eq.s32.totalorder %s8, 1
    %p72 = por %p70, %p71
    %p73 = scmp.ne.s32.totalorder %s65, %s68
    %p74 = scmp.eq.s32.totalorder %s8, 0
    %p75 = por %p73, %p74
    %p76 = scmp.ne.s32.totalorder %s65, %s68
    %p77 = scmp.eq.s32.totalorder %s13, 1
    %p78 = por %p76, %p77
    %p79 = scmp.ne.s32.totalorder %s68, %s69
    %p80 = scmp.eq.s32.totalorder %s13, 0
    %p81 = por %p79, %p80
    %p82 = scmp.ne.s32.totalorder %s68, %s69
    %p83 = scmp.eq.s32.totalorder %s14, 1
    %p84 = por %p82, %p83
    %p86 = scmp.ne.s32.totalorder %s69, %s85
    %p87 = scmp.eq.s32.totalorder %s14, 0
    %p88 = por %p86, %p87
    %p89 = scmp.le.s32.totalorder 1, %s8
    %p90 = scmp.lt.s32.totalorder %s8, 3
    %p91 = pnand %p89, %p90
    %p92 = pneg %p91
    // Predicated region
    $region9: #{forward.9} parent=5 // pred_check
      _
    $region10: #{forward.9} parent=5 // pred_check_branch
      %94 = sbr.rel (%p91) target = $region12
    $region11: #{forward.9} parent=5 // pred_region
      %s95 = ssub.s32 %s8, 1
      // Predicated region
      $region13: #{forward.9} parent=11 // pred_check
        %p96 = pneg %p55
      $region14: #{forward.9} parent=11 // pred_check_branch
        %98 = sbr.rel (%p96) target = $region16
      $region15: #{forward.9} parent=11 // pred_region
        _
      $region16: #{forward.9} parent=11 // pred_fallthru
        _
    $region12: #{forward.9} parent=5 // pred_fallthru
      _
    %p99 = scmp.lt.s32.totalorder %s8, 2
    // Predicated region
    $region17: #{forward.9} parent=5 // pred_check
      %p100 = pneg %p99
    $region18: #{forward.9} parent=5 // pred_check_branch
      %102 = sbr.rel (%p100) target = $region20
    $region19: #{forward.9} parent=5 // pred_region
      // Predicated region
      $region21: #{forward.9} parent=19 // pred_check
        %p103 = pneg %p28
      $region22: #{forward.9} parent=19 // pred_check_branch
        %105 = sbr.rel (%p103) target = $region24
      $region23: #{forward.9} parent=19 // pred_region
        %p106 = scmp.lt.s32.totalorder %s8, 1
        %s107 = scalar_select %p106, %s8, 1
        %s108 = smul.addr %s107, 4
        %s109 = scalar_lea.vmem %s0, %s108
      $region24: #{forward.9} parent=19 // pred_fallthru
        _
    $region20: #{forward.9} parent=5 // pred_fallthru
      _
    %p110 = scmp.le.s32.totalorder 1, %s8
    %p111 = scmp.lt.s32.totalorder %s8, 3
    %p112 = pnand %p110, %p111
    %p113 = pneg %p112
    // Predicated region
    $region25: #{forward.9} parent=5 // pred_check
      _
    $region26: #{forward.9} parent=5 // pred_check_branch
      %115 = sbr.rel (%p112) target = $region28
    $region27: #{forward.9} parent=5 // pred_region
      %s116 = ssub.s32 %s8, 1
      %p117 = scmp.lt.s32.totalorder %s13, 1
      %s118 = scalar_select %p117, %s13, 1
      %s119 = smul.addr %s118, 4
      %s120 = scalar_lea.vmem %s0, %s119
      %p121 = pneg %p34
      %p122 = pneg %p31
      %p123 = pneg %p55
      %p124 = pneg %p52
      %p125 = pneg %p81
      %p126 = pneg %p78
      %p127 = scmp.lt.s32.totalorder %s13, 1
      %s128 = scalar_select %p127, %s13, 1
      %s129 = smul.addr %s128, 2
      %s130 = scalar_lea.vmem %s2, %s129
      %p131 = scmp.lt.s32.totalorder %s13, 1
      %s132 = scalar_select %p131, %s13, 1
      %s133 = smul.addr %s132, 4
      %s134 = scalar_lea.vmem %s0, %s133
      %p135 = scmp.lt.s32.totalorder %s13, 1
      %s136 = scalar_select %p135, %s13, 1
      %s137 = smul.addr %s136, 2
      %s138 = scalar_lea.vmem %s2, %s137
      %v140 = vld [vmem:[%s134] sm:$0xf]
      %v141 = vpack.c.bf16 %v140, %v140
      %v143 = vunpack.c.l.b16 %v141
      %v144 = vpack.c.b16 %v143, %v143
      %145 = vrot.lane.b32.xlu0 %v144, 16
      %v146 = vpop.permute.xlu0 %145
      %vm147 = vcmask 130048
      %v150 = vsel %vm147, 0, %v146
      %vm151 = vcmask 654336
      %v152 = vsel %vm151, %v150, 0
      %v153 = vshrl.u32 %v152, 16
      %v155 = vrot.slane %v153, 7
      %v156 = vshll.u32 %v152, 16
      %v158 = vor.u32 %v155, %v156
      %vm160 = vcmask 1040384
      %vm161 = vsmask.f32 256
      %vm162 = vmand %vm160, %vm161
      %v163 = vsel %vm162, 0, %v158
      %vm164 = vcmask 1042432
      %vm165 = vsmask.f32 2304
      %vm166 = vmand %vm164, %vm165
      %v167 = vsel %vm166, %v163, 0
      %v168 = vld [vmem:[%s1] sm:$0xf]
      %v169 = vld [vmem:[%s1 + $0x4] sm:$0xf]
      %v170 = vld [vmem:[%s1 + $0x8] sm:$0xf]
      %v171 = vld [vmem:[%s1 + $0xc] sm:$0xf]
      %v172 = vld [vmem:[%s1 + $0x10] sm:$0xf]
      %v173 = vld [vmem:[%s1 + $0x14] sm:$0xf]
      %v174 = vld [vmem:[%s1 + $0x18] sm:$0xf]
      %v175 = vld [vmem:[%s1 + $0x1c] sm:$0xf]
      %v176 = vld [vmem:[%s1 + $0x20] sm:$0xf]
      %v177 = vld [vmem:[%s1 + $0x24] sm:$0xf]
      %v178 = vld [vmem:[%s1 + $0x28] sm:$0xf]
      %v179 = vld [vmem:[%s1 + $0x2c] sm:$0xf]
      %s180 = scalar_lea.vmem %s1, 48
      %v181 = vld [vmem:[%s180] sm:$0xf]
      %v182 = vld [vmem:[%s180 + $0x4] sm:$0xf]
      %v183 = vld [vmem:[%s180 + $0x8] sm:$0xf]
      %v184 = vld [vmem:[%s180 + $0xc] sm:$0xf]
      %v185 = vld [vmem:[%s180 + $0x10] sm:$0xf]
      %v186 = vld [vmem:[%s180 + $0x14] sm:$0xf]
      %v187 = vld [vmem:[%s180 + $0x18] sm:$0xf]
      %v188 = vld [vmem:[%s180 + $0x1c] sm:$0xf]
      %v189 = vld [vmem:[%s180 + $0x20] sm:$0xf]
      %v190 = vld [vmem:[%s180 + $0x24] sm:$0xf]
      %v191 = vld [vmem:[%s180 + $0x28] sm:$0xf]
      %v192 = vld [vmem:[%s180 + $0x2c] sm:$0xf]
      %v194 = vshrl.u32 %v167, 16
      %v196 = vshll.u32 %v167, 16
      %v198 = vrot.slane %v196, 1
      %v199 = vor.u32 %v194, %v198
      %v212 = vunpack.c.l.b16 %v181
      %v213 = vunpack.c.l.b16 %v182
      %v214 = vunpack.c.l.b16 %v183
      %v215 = vunpack.c.l.b16 %v184
      %v216 = vunpack.c.l.b16 %v185
      %v217 = vunpack.c.l.b16 %v186
      %v218 = vunpack.c.l.b16 %v187
      %v219 = vunpack.c.l.b16 %v188
      %v220 = vunpack.c.l.b16 %v189
      %v221 = vunpack.c.l.b16 %v190
      %v222 = vunpack.c.l.b16 %v191
      %v223 = vunpack.c.l.b16 %v192
      %v224 = vpack.c.b16 %v213, %v212
      %v225 = vpack.c.b16 %v215, %v214
      %v226 = vpack.c.b16 %v217, %v216
      %v227 = vpack.c.b16 %v219, %v218
      %v228 = vpack.c.b16 %v221, %v220
      %v229 = vpack.c.b16 %v223, %v222
      %vm236 = vcmask 785408
      %v238 = vsel %vm236, %v199, 0
      %240 = vmatpush.bf16.msra.mxu0 0
      %241 = vmatpush.bf16.msra.mxu0 0
      %242 = vmatpush.bf16.msra.mxu0 %v229
      %243 = vmatpush.bf16.msra.mxu0 %v228
      %244 = vmatpush.bf16.msra.mxu0 %v227
      %245 = vmatpush.bf16.msra.mxu0 %v226
      %246 = vmatpush.bf16.msra.mxu0 %v225
      %247 = vmatpush.bf16.msra.mxu0 %v224
      %248 = vmatmul.bf16.gmra.mxu0 %v238
      %v249 = vpop.f32.mrf.mxu0
      %v250 = vadd.f32 0.0, %v249
      %v251 = vpop.f32.mrf.mxu0
      %252 = vdwg.mxu0
      %v265 = vunpack.c.l.b16 %v168
      %v266 = vunpack.c.l.b16 %v169
      %v267 = vunpack.c.l.b16 %v170
      %v268 = vunpack.c.l.b16 %v171
      %v269 = vunpack.c.l.b16 %v172
      %v270 = vunpack.c.l.b16 %v173
      %v271 = vunpack.c.l.b16 %v174
      %v272 = vunpack.c.l.b16 %v175
      %v273 = vunpack.c.l.b16 %v176
      %v274 = vunpack.c.l.b16 %v177
      %v275 = vunpack.c.l.b16 %v178
      %v276 = vunpack.c.l.b16 %v179
      %v277 = vpack.c.b16 %v266, %v265
      %v278 = vpack.c.b16 %v268, %v267
      %v279 = vpack.c.b16 %v270, %v269
      %v280 = vpack.c.b16 %v272, %v271
      %v281 = vpack.c.b16 %v274, %v273
      %v282 = vpack.c.b16 %v276, %v275
      %v289 = vsel %vm236, %v167, 0
      %291 = vmatpush.bf16.msra.mxu0 0
      %292 = vmatpush.bf16.msra.mxu0 0
      %293 = vmatpush.bf16.msra.mxu0 %v282
      %294 = vmatpush.bf16.msra.mxu0 %v281
      %295 = vmatpush.bf16.msra.mxu0 %v280
      %296 = vmatpush.bf16.msra.mxu0 %v279
      %297 = vmatpush.bf16.msra.mxu0 %v278
      %298 = vmatpush.bf16.msra.mxu0 %v277
      %299 = vmatmul.bf16.gmra.mxu0 %v289
      %v300 = vpop.f32.mrf.mxu0
      %v301 = vadd.f32 %v250, %v300
      %v302 = vpop.f32.mrf.mxu0
      %303 = vdwg.mxu0
      %s304 = scalar_lea.vmem %s1, 96
      %v305 = vld [vmem:[%s304] sm:$0xf]
      %v306 = vld [vmem:[%s304 + $0x4] sm:$0xf]
      %v307 = vld [vmem:[%s304 + $0x8] sm:$0xf]
      %v308 = vld [vmem:[%s304 + $0xc] sm:$0xf]
      %v309 = vld [vmem:[%s304 + $0x10] sm:$0xf]
      %v310 = vld [vmem:[%s304 + $0x14] sm:$0xf]
      %v311 = vld [vmem:[%s304 + $0x18] sm:$0xf]
      %v312 = vld [vmem:[%s304 + $0x1c] sm:$0xf]
      %v313 = vld [vmem:[%s304 + $0x20] sm:$0xf]
      %v314 = vld [vmem:[%s304 + $0x24] sm:$0xf]
      %v315 = vld [vmem:[%s304 + $0x28] sm:$0xf]
      %v316 = vld [vmem:[%s304 + $0x2c] sm:$0xf]
      %v318 = vrot.slane %v167, 1
      %v331 = vunpack.c.l.b16 %v305
      %v332 = vunpack.c.l.b16 %v306
      %v333 = vunpack.c.l.b16 %v307
      %v334 = vunpack.c.l.b16 %v308
      %v335 = vunpack.c.l.b16 %v309
      %v336 = vunpack.c.l.b16 %v310
      %v337 = vunpack.c.l.b16 %v311
      %v338 = vunpack.c.l.b16 %v312
      %v339 = vunpack.c.l.b16 %v313
      %v340 = vunpack.c.l.b16 %v314
      %v341 = vunpack.c.l.b16 %v315
      %v342 = vunpack.c.l.b16 %v316
      %v343 = vpack.c.b16 %v332, %v331
      %v344 = vpack.c.b16 %v334, %v333
      %v345 = vpack.c.b16 %v336, %v335
      %v346 = vpack.c.b16 %v338, %v337
      %v347 = vpack.c.b16 %v340, %v339
      %v348 = vpack.c.b16 %v342, %v341
      %v356 = vsel %vm236, %v318, 0
      %358 = vmatpush.bf16.msra.mxu0 0
      %359 = vmatpush.bf16.msra.mxu0 0
      %360 = vmatpush.bf16.msra.mxu0 %v348
      %361 = vmatpush.bf16.msra.mxu0 %v347
      %362 = vmatpush.bf16.msra.mxu0 %v346
      %363 = vmatpush.bf16.msra.mxu0 %v345
      %364 = vmatpush.bf16.msra.mxu0 %v344
      %365 = vmatpush.bf16.msra.mxu0 %v343
      %366 = vmatmul.bf16.gmra.mxu0 %v356
      %v367 = vpop.f32.mrf.mxu0
      %v368 = vadd.f32 0.0, %v367
      %v369 = vpop.f32.mrf.mxu0
      %370 = vdwg.mxu0
      %v371 = vadd.f32 %v301, %v368
      %v372 = vmax.f32 %v371, 0.0
      %v374 = vrot.slane %v372, 1
      %vm376 = vcmask 1040384
      %v377 = vsel %vm376, %v372, %v374
      %v378 = vrot.slane %v372, 2
      %v380 = vsel %vm376, %v374, %v378
      %v381 = vmax.f32 %v377, %v380
      %383 = vrot.lane.b32.xlu0 %v381, 112
      %v384 = vpop.permute.xlu0 %383
      %v386 = vsel %vm147, %v381, %v384
      %387 = vrot.lane.b32.xlu0 %v381, 96
      %v388 = vpop.permute.xlu0 %387
      %v390 = vsel %vm147, %v384, %v388
      %v391 = vmax.f32 %v386, %v390
      %vm392 = vcmask 254976
      %393 = vst.msk [vmem:[%s138] sm:$0x3] %vm392, %v391
      %p394 = scmp.lt.s32.totalorder %s13, 1
      %s395 = scalar_select %p394, %s13, 1
      %s396 = smul.addr %s395, 2
      %s397 = scalar_lea.vmem %s2, %s396
      // Predicated region
      $region29: #{forward.9} parent=27 // pred_check
        %p398 = pneg %p78
      $region30: #{forward.9} parent=27 // pred_check_branch
        %400 = sbr.rel (%p398) target = $region32
      $region31: #{forward.9} parent=27 // pred_region
        _
      $region32: #{forward.9} parent=27 // pred_fallthru
        _
    $region28: #{forward.9} parent=5 // pred_fallthru
      _
    %p401 = scmp.le.s32.totalorder 2, %s8
    // Predicated region
    $region33: #{forward.9} parent=5 // pred_check
      %p402 = pneg %p401
    $region34: #{forward.9} parent=5 // pred_check_branch
      %404 = sbr.rel (%p402) target = $region36
    $region35: #{forward.9} parent=5 // pred_region
      %s405 = ssub.s32 %s8, 2
      // Predicated region
      $region37: #{forward.9} parent=35 // pred_check
        %p406 = pneg %p84
      $region38: #{forward.9} parent=35 // pred_check_branch
        %408 = sbr.rel (%p406) target = $region40
      $region39: #{forward.9} parent=35 // pred_region
        %p409 = scmp.lt.s32.totalorder %s14, 1
        %s410 = scalar_select %p409, %s14, 1
        %s411 = smul.addr %s410, 2
        %s412 = scalar_lea.vmem %s2, %s411
      $region40: #{forward.9} parent=35 // pred_fallthru
        _
    $region36: #{forward.9} parent=5 // pred_fallthru
      _
  $region6: #{forward.9} parent=0 // loop_footer
    %s12 = sadd.s32 1, %s8
  $region7: #{forward.9} parent=0 // loop_footer_branch
    %7 = sbr.rel target = $region3
  $region8: #{forward.9} parent=0 // loop_exit
    _

// kernel: forward.6
$region0: #{forward.6}
  #allocation0 [shape = 'u32[]', space=smem, size = 0x4, offset = 0x4, fixed_abs, tag = 'smem constant byte address 0x4 - core index']
  #allocation1 [shape = 'u32[72,128]{1,0:T(1,128)}', space=vmem, size = 0x9000, scoped, tag = 'internal scratch']
  %s0 = inlined_call_operand.vmem [shape: f32[2,32,96], index: 0, kind: input, shape index: {}]
  %s1 = inlined_call_operand.hbm [shape: bf16[3,102,512], index: 1, kind: input, shape index: {}]
  %s2 = inlined_call_operand.vmem [shape: f32[2,16,256], index: 2, kind: output, shape index: {}]
  %s3 = sld [smem:[#allocation0]]
  $region45: #{forward.6} parent=0
    _
  %s5 = ssub.s32 1, %s3
  %s6 = scalar_select 0, %s5, %s3
  $region1: #{forward.6} parent=0
    #allocation2 [shape = 'u8[319488]{0}', space=vmem, size = 0x4e000, scoped, tag = 'input window, operand 1, single buffered']
    #allocation3 [shape = 's32[2]{0}', space=sflag, size = 0x8, scoped, tag = 'scoped memory for forward.6']
    %7 = vsyncpa [#allocation3], 0
    loop: start=0, step=1, limit=4
    $region2: #{forward.6} parent=1 // loop_pre_header
      _
    $region3: #{forward.6} parent=1 // loop_header
      %s9 = sphi 0, %s13
      %p10 = scmp.ge.s32.totalorder %s9, 4
      %s19 = sphi 0, %s21
      %s22 = sphi 0, %s19
      %s23 = sphi 0, %s22
      %s39 = sphi 0, %s23
      %s43 = sphi 0, %s43
      %s45 = sphi 0, %s43
      %s46 = sphi 0, %s45
      %s60 = sphi 0, %s46
      %s66 = sphi 0, %s68
      %s69 = sphi 0, %s66
      %s70 = sphi 0, %s69
      %s86 = sphi 0, %s70
    $region4: #{forward.6} parent=1 // loop_header_branch
      %12 = sbr.rel (%p10) target = $region8
    $region5: #{forward.6} parent=1 // loop_body
      %s14 = ssub.s32 %s9, 1
      %s15 = ssub.s32 %s9, 2
      %s16 = sadd.s32 %s9, 1
      %s17 = ssub.s32 %s9, %s16
      %p18 = scmp.eq.s32.totalorder %s17, 0
      %s20 = sadd.s32 %s19, 1
      %s21 = scalar_select %p18, %s19, %s20
      %p24 = pneg %p18
      %p25 = scmp.eq.s32.totalorder %s9, 1
      %p26 = por %p24, %p25
      %p27 = scmp.ne.s32.totalorder %s19, %s22
      %p28 = scmp.eq.s32.totalorder %s9, 0
      %p29 = por %p27, %p28
      %p30 = scmp.ne.s32.totalorder %s19, %s22
      %p31 = scmp.eq.s32.totalorder %s14, 1
      %p32 = por %p30, %p31
      %p33 = scmp.ne.s32.totalorder %s22, %s23
      %p34 = scmp.eq.s32.totalorder %s14, 0
      %p35 = por %p33, %p34
      %p36 = scmp.ne.s32.totalorder %s22, %s23
      %p37 = scmp.eq.s32.totalorder %s15, 1
      %p38 = por %p36, %p37
      %p40 = scmp.ne.s32.totalorder %s23, %s39
      %p41 = scmp.eq.s32.totalorder %s15, 0
      %p42 = por %p40, %p41
      %s44 = sadd.s32 %s43, 1
      %p47 = scmp.eq.s32.totalorder %s9, 1
      %p48 = scmp.ne.s32.totalorder %s43, %s45
      %p49 = scmp.eq.s32.totalorder %s9, 0
      %p50 = por %p48, %p49
      %p51 = scmp.ne.s32.totalorder %s43, %s45
      %p52 = scmp.eq.s32.totalorder %s14, 1
      %p53 = por %p51, %p52
      %p54 = scmp.ne.s32.totalorder %s45, %s46
      %p55 = scmp.eq.s32.totalorder %s14, 0
      %p56 = por %p54, %p55
      %p57 = scmp.ne.s32.totalorder %s45, %s46
      %p58 = scmp.eq.s32.totalorder %s15, 1
      %p59 = por %p57, %p58
      %p61 = scmp.ne.s32.totalorder %s46, %s60
      %p62 = scmp.eq.s32.totalorder %s15, 0
      %p63 = por %p61, %p62
      %s64 = ssub.s32 %s9, %s16
      %p65 = scmp.eq.s32.totalorder %s64, 0
      %s67 = sadd.s32 %s66, 1
      %s68 = scalar_select %p65, %s66, %s67
      %p71 = pneg %p65
      %p72 = scmp.eq.s32.totalorder %s9, 1
      %p73 = por %p71, %p72
      %p74 = scmp.ne.s32.totalorder %s66, %s69
      %p75 = scmp.eq.s32.totalorder %s9, 0
      %p76 = por %p74, %p75
      %p77 = scmp.ne.s32.totalorder %s66, %s69
      %p78 = scmp.eq.s32.totalorder %s14, 1
      %p79 = por %p77, %p78
      %p80 = scmp.ne.s32.totalorder %s69, %s70
      %p81 = scmp.eq.s32.totalorder %s14, 0
      %p82 = por %p80, %p81
      %p83 = scmp.ne.s32.totalorder %s69, %s70
      %p84 = scmp.eq.s32.totalorder %s15, 1
      %p85 = por %p83, %p84
      %p87 = scmp.ne.s32.totalorder %s70, %s86
      %p88 = scmp.eq.s32.totalorder %s15, 0
      %p89 = por %p87, %p88
      %p90 = scmp.le.s32.totalorder 1, %s9
      %p91 = scmp.lt.s32.totalorder %s9, 3
      %p92 = pnand %p90, %p91
      %p93 = pneg %p92
      // Predicated region
      $region9: #{forward.6} parent=5 // pred_check
        _
      $region10: #{forward.6} parent=5 // pred_check_branch
        %95 = sbr.rel (%p92) target = $region12
      $region11: #{forward.6} parent=5 // pred_region
        %s96 = ssub.s32 %s9, 1
        // Predicated region
        $region13: #{forward.6} parent=11 // pred_check
          %p97 = pneg %p56
        $region14: #{forward.6} parent=11 // pred_check_branch
          %99 = sbr.rel (%p97) target = $region16
        $region15: #{forward.6} parent=11 // pred_region
          %101 = vsyncadd [#allocation3], 0
          %s102 = sshll.u32 %s1, 4
          %s103 = int_to_ptr.hbm [resolvable:$true] %s102
          %s104 = sshll.u32 [#allocation2], 4
          %s105 = int_to_ptr.vmem [resolvable:$true] %s104
          %110 = dma.hbm_to_vmem [thread:$0]  %s103, 9984, %s105, [#allocation3], 256, 256, 16
        $region16: #{forward.6} parent=11 // pred_fallthru
          _
      $region12: #{forward.6} parent=5 // pred_fallthru
        _
      %p111 = scmp.lt.s32.totalorder %s9, 2
      // Predicated region
      $region17: #{forward.6} parent=5 // pred_check
        %p112 = pneg %p111
      $region18: #{forward.6} parent=5 // pred_check_branch
        %114 = sbr.rel (%p112) target = $region20
      $region19: #{forward.6} parent=5 // pred_region
        // Predicated region
        $region21: #{forward.6} parent=19 // pred_check
          %p115 = pneg %p29
        $region22: #{forward.6} parent=19 // pred_check_branch
          %117 = sbr.rel (%p115) target = $region24
        $region23: #{forward.6} parent=19 // pred_region
          %p118 = scmp.lt.s32.totalorder %s9, 1
          %s119 = scalar_select %p118, %s9, 1
          %s120 = smul.addr %s119, 4
          %s121 = smul.addr %s120, 8
          %s122 = scalar_lea.vmem %s0, %s121
        $region24: #{forward.6} parent=19 // pred_fallthru
          _
      $region20: #{forward.6} parent=5 // pred_fallthru
        _
      %p123 = scmp.le.s32.totalorder 1, %s9
      %p124 = scmp.lt.s32.totalorder %s9, 3
      %p125 = pnand %p123, %p124
      %p126 = pneg %p125
      // Predicated region
      $region25: #{forward.6} parent=5 // pred_check
        _
      $region26: #{forward.6} parent=5 // pred_check_branch
        %128 = sbr.rel (%p125) target = $region28
      $region27: #{forward.6} parent=5 // pred_region
        %s129 = ssub.s32 %s9, 1
        // Predicated region
        $region29: #{forward.6} parent=27 // pred_check
          %p130 = pneg %p56
        $region30: #{forward.6} parent=27 // pred_check_branch
          %132 = sbr.rel (%p130) target = $region32
        $region31: #{forward.6} parent=27 // pred_region
          %134 = dma.done [#allocation3], 9984
        $region32: #{forward.6} parent=27 // pred_fallthru
          _
        %p135 = scmp.lt.s32.totalorder %s14, 1
        %s136 = scalar_select %p135, %s14, 1
        %s137 = smul.addr %s136, 4
        %s138 = smul.addr %s137, 8
        %s139 = scalar_lea.vmem %s0, %s138
        %p140 = pneg %p35
        %p141 = pneg %p32
        %p142 = pneg %p56
        %p143 = pneg %p53
        %p144 = pneg %p82
        %p145 = pneg %p79
        %p146 = scmp.lt.s32.totalorder %s14, 1
        %s147 = scalar_select %p146, %s14, 1
        %s148 = smul.addr %s147, 4
        %s149 = smul.addr %s148, 8
        %s150 = scalar_lea.vmem %s2, %s149
        %p151 = scmp.lt.s32.totalorder %s14, 1
        %s152 = scalar_select %p151, %s14, 1
        %s153 = smul.addr %s152, 4
        %s154 = smul.addr %s153, 8
        %s155 = scalar_lea.vmem %s0, %s154
        %p156 = scmp.lt.s32.totalorder %s14, 1
        %s157 = scalar_select %p156, %s14, 1
        %s158 = smul.addr %s157, 4
        %s159 = smul.addr %s158, 8
        %s160 = scalar_lea.vmem %s2, %s159
        %v162 = vld [vmem:[%s155] sm:$0xff]
        %v163 = vld [vmem:[%s155 + $0x8] sm:$0xff]
        %v164 = vld [vmem:[%s155 + $0x10] sm:$0xff]
        %v165 = vld [vmem:[%s155 + $0x18] sm:$0xff]
        %v166 = vpack.c.bf16 %v162, %v162
        %v167 = vpack.c.bf16 %v163, %v163
        %v168 = vpack.c.bf16 %v164, %v164
        %v169 = vpack.c.bf16 %v165, %v165
        %v174 = vunpack.c.l.b16 %v166
        %v175 = vunpack.c.l.b16 %v167
        %v176 = vunpack.c.l.b16 %v168
        %v177 = vunpack.c.l.b16 %v169
        %v178 = vpack.c.b16 %v175, %v174
        %v179 = vpack.c.b16 %v177, %v176
        %180 = vrot.lane.b32.xlu0 %v178, 3
        %v181 = vpop.permute.xlu0 %180
        %182 = vrot.lane.b32.xlu0 %v179, 3
        %v183 = vpop.permute.xlu0 %182
        %vm184 = vcmask 23552
        %v187 = vsel %vm184, 0, %v181
        %v189 = vsel %vm184, 0, %v183
        %vm190 = vcmask 809984
        %v191 = vsel %vm190, %v187, 0
        %v192 = vsel %vm190, %v189, 0
        %vm193 = vsmask.f32 256
        %v194 = vshrl.u32 %v191, 16
        %v196 = vrot.slane %v194, 7
        %v197 = vshll.u32 %v191, 16
        %v199 = vor.u32 %v196, %v197
        %v200 = vshrl.u32 %v192, 16
        %v202 = vrot.slane %v200, 7
        %v203 = vshll.u32 %v192, 16
        %v205 = vor.u32 %v202, %v203
        %v206 = vsel %vm193, %v196, %v205
        %vm209 = vcmask 1040384
        %vm210 = vmand %vm209, %vm193
        %v211 = vsel %vm210, 0, %v199
        %v212 = vsel %vm210, %v202, 0
        %v213 = vld [vmem:[#allocation2] sm:$0xff]
        %v214 = vld [vmem:[#allocation2 + $0x8] sm:$0xff]
        %v215 = vld [vmem:[#allocation2 + $0x10] sm:$0xff]
        %v216 = vld [vmem:[#allocation2 + $0x18] sm:$0xff]
        %v217 = vld [vmem:[#allocation2 + $0x20] sm:$0xff]
        %v218 = vld [vmem:[#allocation2 + $0x28] sm:$0xff]
        %v219 = vld [vmem:[#allocation2 + $0x30] sm:$0xff]
        %v220 = vld [vmem:[#allocation2 + $0x38] sm:$0xff]
        %v221 = vld [vmem:[#allocation2 + $0x40] sm:$0xff]
        %v222 = vld [vmem:[#allocation2 + $0x48] sm:$0xff]
        %v223 = vld [vmem:[#allocation2 + $0x50] sm:$0xff]
        %v224 = vld [vmem:[#allocation2 + $0x58] sm:$0xff]
        %v225 = vld [vmem:[#allocation2 + $0x60] sm:$0xff]
        %v226 = vld [vmem:[#allocation2 + $0x68] sm:$0xff]
        %v227 = vld [vmem:[#allocation2 + $0x70] sm:$0xff]
        %v228 = vld [vmem:[#allocation2 + $0x78] sm:$0xff]
        %v229 = vld [vmem:[#allocation2 + $0x80] sm:$0xff]
        %v230 = vld [vmem:[#allocation2 + $0x88] sm:$0xff]
        %v231 = vld [vmem:[#allocation2 + $0x90] sm:$0xff]
        %v232 = vld [vmem:[#allocation2 + $0x98] sm:$0xff]
        %v233 = vld [vmem:[#allocation2 + $0xa0] sm:$0xff]
        %v234 = vld [vmem:[#allocation2 + $0xa8] sm:$0xff]
        %v235 = vld [vmem:[#allocation2 + $0xb0] sm:$0xff]
        %v236 = vld [vmem:[#allocation2 + $0xb8] sm:$0xff]
        %v237 = vld [vmem:[#allocation2 + $0xc0] sm:$0x77]
        %v238 = vld [vmem:[#allocation2 + $0xc8] sm:$0x77]
        %s239 = scalar_lea.vmem [#allocation2], 208
        %v240 = vld [vmem:[%s239] sm:$0xff]
        %v241 = vld [vmem:[%s239 + $0x8] sm:$0xff]
        %v242 = vld [vmem:[%s239 + $0x10] sm:$0xff]
        %v243 = vld [vmem:[%s239 + $0x18] sm:$0xff]
        %v244 = vld [vmem:[%s239 + $0x20] sm:$0xff]
        %v245 = vld [vmem:[%s239 + $0x28] sm:$0xff]
        %v246 = vld [vmem:[%s239 + $0x30] sm:$0xff]
        %v247 = vld [vmem:[%s239 + $0x38] sm:$0xff]
        %v248 = vld [vmem:[%s239 + $0x40] sm:$0xff]
        %v249 = vld [vmem:[%s239 + $0x48] sm:$0xff]
        %v250 = vld [vmem:[%s239 + $0x50] sm:$0xff]
        %v251 = vld [vmem:[%s239 + $0x58] sm:$0xff]
        %v252 = vld [vmem:[%s239 + $0x60] sm:$0xff]
        %v253 = vld [vmem:[%s239 + $0x68] sm:$0xff]
        %v254 = vld [vmem:[%s239 + $0x70] sm:$0xff]
        %v255 = vld [vmem:[%s239 + $0x78] sm:$0xff]
        %v256 = vld [vmem:[%s239 + $0x80] sm:$0xff]
        %v257 = vld [vmem:[%s239 + $0x88] sm:$0xff]
        %v258 = vld [vmem:[%s239 + $0x90] sm:$0xff]
        %v259 = vld [vmem:[%s239 + $0x98] sm:$0xff]
        %v260 = vld [vmem:[%s239 + $0xa0] sm:$0xff]
        %v261 = vld [vmem:[%s239 + $0xa8] sm:$0xff]
        %v262 = vld [vmem:[%s239 + $0xb0] sm:$0xff]
        %v263 = vld [vmem:[%s239 + $0xb8] sm:$0xff]
        %v264 = vld [vmem:[%s239 + $0xc0] sm:$0x77]
        %v265 = vld [vmem:[%s239 + $0xc8] sm:$0x77]
        %vm266 = vsmask.f32 7424
        %v268 = vshrl.u32 %v211, 16
        %v270 = vshll.u32 %v211, 16
        %v272 = vrot.slane %v270, 1
        %v273 = vor.u32 %v268, %v272
        %v275 = vshll.u32 %v206, 16
        %v277 = vrot.slane %v275, 1
        %v278 = vsel %vm266, %v273, %v277
        %v279 = vshrl.u32 %v206, 16
        %v281 = vor.u32 %v279, %v277
        %v283 = vshll.u32 %v212, 16
        %v285 = vrot.slane %v283, 1
        %v286 = vsel %vm266, %v281, %v285
        %v313 = vunpack.c.l.b16 %v240
        %v314 = vunpack.c.h.b16 %v240
        %v315 = vunpack.c.l.b16 %v241
        %v316 = vunpack.c.h.b16 %v241
        %v317 = vunpack.c.l.b16 %v242
        %v318 = vunpack.c.h.b16 %v242
        %v319 = vunpack.c.l.b16 %v243
        %v320 = vunpack.c.h.b16 %v243
        %v321 = vunpack.c.l.b16 %v244
        %v322 = vunpack.c.h.b16 %v244
        %v323 = vunpack.c.l.b16 %v245
        %v324 = vunpack.c.h.b16 %v245
        %v325 = vunpack.c.l.b16 %v246
        %v326 = vunpack.c.h.b16 %v246
        %v327 = vunpack.c.l.b16 %v247
        %v328 = vunpack.c.h.b16 %v247
        %v329 = vunpack.c.l.b16 %v248
        %v330 = vunpack.c.h.b16 %v248
        %v331 = vunpack.c.l.b16 %v249
        %v332 = vunpack.c.h.b16 %v249
        %v333 = vunpack.c.l.b16 %v250
        %v334 = vunpack.c.h.b16 %v250
        %v335 = vunpack.c.l.b16 %v251
        %v336 = vunpack.c.h.b16 %v251
        %v337 = vunpack.c.l.b16 %v252
        %v338 = vunpack.c.h.b16 %v252
        %v339 = vunpack.c.l.b16 %v253
        %v340 = vunpack.c.h.b16 %v253
        %v341 = vunpack.c.l.b16 %v254
        %v342 = vunpack.c.h.b16 %v254
        %v343 = vunpack.c.l.b16 %v255
        %v344 = vunpack.c.h.b16 %v255
        %v345 = vunpack.c.l.b16 %v256
        %v346 = vunpack.c.h.b16 %v256
        %v347 = vunpack.c.l.b16 %v257
        %v348 = vunpack.c.h.b16 %v257
        %v349 = vunpack.c.l.b16 %v258
        %v350 = vunpack.c.h.b16 %v258
        %v351 = vunpack.c.l.b16 %v259
        %v352 = vunpack.c.h.b16 %v259
        %v353 = vunpack.c.l.b16 %v260
        %v354 = vunpack.c.h.b16 %v260
        %v355 = vunpack.c.l.b16 %v261
        %v356 = vunpack.c.h.b16 %v261
        %v357 = vunpack.c.l.b16 %v262
        %v358 = vunpack.c.h.b16 %v262
        %v359 = vunpack.c.l.b16 %v263
        %v360 = vunpack.c.h.b16 %v263
        %v361 = vunpack.c.l.b16 %v264
        %v362 = vunpack.c.h.b16 %v264
        %v363 = vunpack.c.l.b16 %v265
        %v364 = vunpack.c.h.b16 %v265
        %v365 = vpack.c.b16 %v317, %v313
        %v366 = vpack.c.b16 %v318, %v314
        %v367 = vpack.c.b16 %v319, %v315
        %v368 = vpack.c.b16 %v320, %v316
        %v369 = vpack.c.b16 %v325, %v321
        %v370 = vpack.c.b16 %v326, %v322
        %v371 = vpack.c.b16 %v327, %v323
        %v372 = vpack.c.b16 %v328, %v324
        %v373 = vpack.c.b16 %v333, %v329
        %v374 = vpack.c.b16 %v334, %v330
        %v375 = vpack.c.b16 %v335, %v331
        %v376 = vpack.c.b16 %v336, %v332
        %v377 = vpack.c.b16 %v341, %v337
        %v378 = vpack.c.b16 %v342, %v338
        %v379 = vpack.c.b16 %v343, %v339
        %v380 = vpack.c.b16 %v344, %v340
        %v381 = vpack.c.b16 %v349, %v345
        %v382 = vpack.c.b16 %v350, %v346
        %v383 = vpack.c.b16 %v351, %v347
        %v384 = vpack.c.b16 %v352, %v348
        %v385 = vpack.c.b16 %v357, %v353
        %v386 = vpack.c.b16 %v358, %v354
        %v387 = vpack.c.b16 %v359, %v355
        %v388 = vpack.c.b16 %v360, %v356
        %v389 = vpack.c.b16 %v361, %v361
        %v390 = vpack.c.b16 %v362, %v362
        %v391 = vpack.c.b16 %v363, %v363
        %v392 = vpack.c.b16 %v364, %v364
        %vm417 = vcmask 834560
        %v419 = vsel %vm417, %v278, 0
        %v422 = vsel %vm417, %v286, 0
        %vm424 = vcmask 1042432
        %v426 = vsel %vm424, %v389, 0
        %v429 = vsel %vm424, %v390, 0
        %v432 = vsel %vm424, %v391, 0
        %v435 = vsel %vm424, %v392, 0
        %437 = vmatpush.bf16.msra.mxu0 0
        %438 = vmatpush.bf16.msra.mxu0 %v426
        %439 = vmatpush.bf16.msra.mxu0 %v385
        %440 = vmatpush.bf16.msra.mxu0 %v381
        %441 = vmatpush.bf16.msra.mxu0 %v377
        %442 = vmatpush.bf16.msra.mxu0 %v373
        %443 = vmatpush.bf16.msra.mxu0 %v369
        %444 = vmatpush.bf16.msra.mxu0 %v365
        %445 = vmatmul.bf16.gmra.mxu0 %v419
        %v446 = vpop.f32.mrf.mxu0
        %v447 = vadd.f32 0.0, %v446
        %v448 = vpop.f32.mrf.mxu0
        %v449 = vadd.f32 0.0, %v448
        %450 = vmatmul.bf16.gmra.mxu0 %v422
        %v451 = vpop.f32.mrf.mxu0
        %v452 = vadd.f32 0.0, %v451
        %v453 = vpop.f32.mrf.mxu0
        %v454 = vadd.f32 0.0, %v453
        %455 = vdwg.mxu0
        %456 = vmatpush.bf16.msra.mxu0 0
        %457 = vmatpush.bf16.msra.mxu0 %v429
        %458 = vmatpush.bf16.msra.mxu0 %v386
        %459 = vmatpush.bf16.msra.mxu0 %v382
        %460 = vmatpush.bf16.msra.mxu0 %v378
        %461 = vmatpush.bf16.msra.mxu0 %v374
        %462 = vmatpush.bf16.msra.mxu0 %v370
        %463 = vmatpush.bf16.msra.mxu0 %v366
        %464 = vmatmul.bf16.gmra.mxu0 %v419
        %v465 = vpop.f32.mrf.mxu0
        %v466 = vadd.f32 0.0, %v465
        %v467 = vpop.f32.mrf.mxu0
        %v468 = vadd.f32 0.0, %v467
        %469 = vmatmul.bf16.gmra.mxu0 %v422
        %v470 = vpop.f32.mrf.mxu0
        %v471 = vadd.f32 0.0, %v470
        %v472 = vpop.f32.mrf.mxu0
        %v473 = vadd.f32 0.0, %v472
        %474 = vdwg.mxu0
        %475 = vmatpush.bf16.msra.mxu0 0
        %476 = vmatpush.bf16.msra.mxu0 %v432
        %477 = vmatpush.bf16.msra.mxu0 %v387
        %478 = vmatpush.bf16.msra.mxu0 %v383
        %479 = vmatpush.bf16.msra.mxu0 %v379
        %480 = vmatpush.bf16.msra.mxu0 %v375
        %481 = vmatpush.bf16.msra.mxu0 %v371
        %482 = vmatpush.bf16.msra.mxu0 %v367
        %483 = vmatmul.bf16.gmra.mxu0 %v419
        %v484 = vpop.f32.mrf.mxu0
        %v485 = vadd.f32 0.0, %v484
        %v486 = vpop.f32.mrf.mxu0
        %v487 = vadd.f32 0.0, %v486
        %488 = vmatmul.bf16.gmra.mxu0 %v422
        %v489 = vpop.f32.mrf.mxu0
        %v490 = vadd.f32 0.0, %v489
        %v491 = vpop.f32.mrf.mxu0
        %v492 = vadd.f32 0.0, %v491
        %493 = vdwg.mxu0
        %494 = vmatpush.bf16.msra.mxu0 0
        %495 = vmatpush.bf16.msra.mxu0 %v435
        %496 = vmatpush.bf16.msra.mxu0 %v388
        %497 = vmatpush.bf16.msra.mxu0 %v384
        %498 = vmatpush.bf16.msra.mxu0 %v380
        %499 = vmatpush.bf16.msra.mxu0 %v376
        %500 = vmatpush.bf16.msra.mxu0 %v372
        %501 = vmatpush.bf16.msra.mxu0 %v368
        %502 = vmatmul.bf16.gmra.mxu0 %v419
        %v503 = vpop.f32.mrf.mxu0
        %v504 = vadd.f32 0.0, %v503
        %v505 = vpop.f32.mrf.mxu0
        %v506 = vadd.f32 0.0, %v505
        %507 = vmatmul.bf16.gmra.mxu0 %v422
        %v508 = vpop.f32.mrf.mxu0
        %v509 = vadd.f32 0.0, %v508
        %v510 = vpop.f32.mrf.mxu0
        %v511 = vadd.f32 0.0, %v510
        %512 = vdwg.mxu0
        %v539 = vunpack.c.l.b16 %v213
        %v540 = vunpack.c.h.b16 %v213
        %v541 = vunpack.c.l.b16 %v214
        %v542 = vunpack.c.h.b16 %v214
        %v543 = vunpack.c.l.b16 %v215
        %v544 = vunpack.c.h.b16 %v215
        %v545 = vunpack.c.l.b16 %v216
        %v546 = vunpack.c.h.b16 %v216
        %v547 = vunpack.c.l.b16 %v217
        %v548 = vunpack.c.h.b16 %v217
        %v549 = vunpack.c.l.b16 %v218
        %v550 = vunpack.c.h.b16 %v218
        %v551 = vunpack.c.l.b16 %v219
        %v552 = vunpack.c.h.b16 %v219
        %v553 = vunpack.c.l.b16 %v220
        %v554 = vunpack.c.h.b16 %v220
        %v555 = vunpack.c.l.b16 %v221
        %v556 = vunpack.c.h.b16 %v221
        %v557 = vunpack.c.l.b16 %v222
        %v558 = vunpack.c.h.b16 %v222
        %v559 = vunpack.c.l.b16 %v223
        %v560 = vunpack.c.h.b16 %v223
        %v561 = vunpack.c.l.b16 %v224
        %v562 = vunpack.c.h.b16 %v224
        %v563 = vunpack.c.l.b16 %v225
        %v564 = vunpack.c.h.b16 %v225
        %v565 = vunpack.c.l.b16 %v226
        %v566 = vunpack.c.h.b16 %v226
        %v567 = vunpack.c.l.b16 %v227
        %v568 = vunpack.c.h.b16 %v227
        %v569 = vunpack.c.l.b16 %v228
        %v570 = vunpack.c.h.b16 %v228
        %v571 = vunpack.c.l.b16 %v229
        %v572 = vunpack.c.h.b16 %v229
        %v573 = vunpack.c.l.b16 %v230
        %v574 = vunpack.c.h.b16 %v230
        %v575 = vunpack.c.l.b16 %v231
        %v576 = vunpack.c.h.b16 %v231
        %v577 = vunpack.c.l.b16 %v232
        %v578 = vunpack.c.h.b16 %v232
        %v579 = vunpack.c.l.b16 %v233
        %v580 = vunpack.c.h.b16 %v233
        %v581 = vunpack.c.l.b16 %v234
        %v582 = vunpack.c.h.b16 %v234
        %v583 = vunpack.c.l.b16 %v235
        %v584 = vunpack.c.h.b16 %v235
        %v585 = vunpack.c.l.b16 %v236
        %v586 = vunpack.c.h.b16 %v236
        %v587 = vunpack.c.l.b16 %v237
        %v588 = vunpack.c.h.b16 %v237
        %v589 = vunpack.c.l.b16 %v238
        %v590 = vunpack.c.h.b16 %v238
        %v591 = vpack.c.b16 %v543, %v539
        %v592 = vpack.c.b16 %v544, %v540
        %v593 = vpack.c.b16 %v545, %v541
        %v594 = vpack.c.b16 %v546, %v542
        %v595 = vpack.c.b16 %v551, %v547
        %v596 = vpack.c.b16 %v552, %v548
        %v597 = vpack.c.b16 %v553, %v549
        %v598 = vpack.c.b16 %v554, %v550
        %v599 = vpack.c.b16 %v559, %v555
        %v600 = vpack.c.b16 %v560, %v556
        %v601 = vpack.c.b16 %v561, %v557
        %v602 = vpack.c.b16 %v562, %v558
        %v603 = vpack.c.b16 %v567, %v563
        %v604 = vpack.c.b16 %v568, %v564
        %v605 = vpack.c.b16 %v569, %v565
        %v606 = vpack.c.b16 %v570, %v566
        %v607 = vpack.c.b16 %v575, %v571
        %v608 = vpack.c.b16 %v576, %v572
        %v609 = vpack.c.b16 %v577, %v573
        %v610 = vpack.c.b16 %v578, %v574
        %v611 = vpack.c.b16 %v583, %v579
        %v612 = vpack.c.b16 %v584, %v580
        %v613 = vpack.c.b16 %v585, %v581
        %v614 = vpack.c.b16 %v586, %v582
        %v615 = vpack.c.b16 %v587, %v587
        %v616 = vpack.c.b16 %v588, %v588
        %v617 = vpack.c.b16 %v589, %v589
        %v618 = vpack.c.b16 %v590, %v590
        %v643 = vsel %vm417, %v211, 0
        %v645 = vsel %vm417, %v206, 0
        %v648 = vsel %vm424, %v615, 0
        %v651 = vsel %vm424, %v616, 0
        %v654 = vsel %vm424, %v617, 0
        %v657 = vsel %vm424, %v618, 0
        %659 = vmatpush.bf16.msra.mxu0 0
        %660 = vmatpush.bf16.msra.mxu0 %v648
        %661 = vmatpush.bf16.msra.mxu0 %v611
        %662 = vmatpush.bf16.msra.mxu0 %v607
        %663 = vmatpush.bf16.msra.mxu0 %v603
        %664 = vmatpush.bf16.msra.mxu0 %v599
        %665 = vmatpush.bf16.msra.mxu0 %v595
        %666 = vmatpush.bf16.msra.mxu0 %v591
        %667 = vmatmul.bf16.gmra.mxu0 %v643
        %v668 = vpop.f32.mrf.mxu0
        %v669 = vadd.f32 %v447, %v668
        %v670 = vpop.f32.mrf.mxu0
        %v671 = vadd.f32 %v449, %v670
        %672 = vmatmul.bf16.gmra.mxu0 %v645
        %v673 = vpop.f32.mrf.mxu0
        %v674 = vadd.f32 %v452, %v673
        %v675 = vpop.f32.mrf.mxu0
        %v676 = vadd.f32 %v454, %v675
        %677 = vdwg.mxu0
        %678 = vmatpush.bf16.msra.mxu0 0
        %679 = vmatpush.bf16.msra.mxu0 %v651
        %680 = vmatpush.bf16.msra.mxu0 %v612
        %681 = vmatpush.bf16.msra.mxu0 %v608
        %682 = vmatpush.bf16.msra.mxu0 %v604
        %683 = vmatpush.bf16.msra.mxu0 %v600
        %684 = vmatpush.bf16.msra.mxu0 %v596
        %685 = vmatpush.bf16.msra.mxu0 %v592
        %686 = vmatmul.bf16.gmra.mxu0 %v643
        %v687 = vpop.f32.mrf.mxu0
        %v688 = vadd.f32 %v466, %v687
        %v689 = vpop.f32.mrf.mxu0
        %v690 = vadd.f32 %v468, %v689
        %691 = vmatmul.bf16.gmra.mxu0 %v645
        %v692 = vpop.f32.mrf.mxu0
        %v693 = vadd.f32 %v471, %v692
        %v694 = vpop.f32.mrf.mxu0
        %v695 = vadd.f32 %v473, %v694
        %696 = vdwg.mxu0
        %697 = vmatpush.bf16.msra.mxu0 0
        %698 = vmatpush.bf16.msra.mxu0 %v654
        %699 = vmatpush.bf16.msra.mxu0 %v613
        %700 = vmatpush.bf16.msra.mxu0 %v609
        %701 = vmatpush.bf16.msra.mxu0 %v605
        %702 = vmatpush.bf16.msra.mxu0 %v601
        %703 = vmatpush.bf16.msra.mxu0 %v597
        %704 = vmatpush.bf16.msra.mxu0 %v593
        %705 = vmatmul.bf16.gmra.mxu0 %v643
        %v706 = vpop.f32.mrf.mxu0
        %v707 = vadd.f32 %v485, %v706
        %v708 = vpop.f32.mrf.mxu0
        %v709 = vadd.f32 %v487, %v708
        %710 = vmatmul.bf16.gmra.mxu0 %v645
        %v711 = vpop.f32.mrf.mxu0
        %v712 = vadd.f32 %v490, %v711
        %v713 = vpop.f32.mrf.mxu0
        %v714 = vadd.f32 %v492, %v713
        %715 = vdwg.mxu0
        %716 = vmatpush.bf16.msra.mxu0 0
        %717 = vmatpush.bf16.msra.mxu0 %v657
        %718 = vmatpush.bf16.msra.mxu0 %v614
        %719 = vmatpush.bf16.msra.mxu0 %v610
        %720 = vmatpush.bf16.msra.mxu0 %v606
        %721 = vmatpush.bf16.msra.mxu0 %v602
        %722 = vmatpush.bf16.msra.mxu0 %v598
        %723 = vmatpush.bf16.msra.mxu0 %v594
        %724 = vmatmul.bf16.gmra.mxu0 %v643
        %v725 = vpop.f32.mrf.mxu0
        %v726 = vadd.f32 %v504, %v725
        %v727 = vpop.f32.mrf.mxu0
        %v728 = vadd.f32 %v506, %v727
        %729 = vmatmul.bf16.gmra.mxu0 %v645
        %v730 = vpop.f32.mrf.mxu0
        %v731 = vadd.f32 %v509, %v730
        %v732 = vpop.f32.mrf.mxu0
        %v733 = vadd.f32 %v511, %v732
        %734 = vdwg.mxu0
        %s735 = scalar_lea.vmem [#allocation2], 416
        %v736 = vld [vmem:[%s735] sm:$0xff]
        %v737 = vld [vmem:[%s735 + $0x8] sm:$0xff]
        %v738 = vld [vmem:[%s735 + $0x10] sm:$0xff]
        %v739 = vld [vmem:[%s735 + $0x18] sm:$0xff]
        %v740 = vld [vmem:[%s735 + $0x20] sm:$0xff]
        %v741 = vld [vmem:[%s735 + $0x28] sm:$0xff]
        %v742 = vld [vmem:[%s735 + $0x30] sm:$0xff]
        %v743 = vld [vmem:[%s735 + $0x38] sm:$0xff]
        %v744 = vld [vmem:[%s735 + $0x40] sm:$0xff]
        %v745 = vld [vmem:[%s735 + $0x48] sm:$0xff]
        %v746 = vld [vmem:[%s735 + $0x50] sm:$0xff]
        %v747 = vld [vmem:[%s735 + $0x58] sm:$0xff]
        %v748 = vld [vmem:[%s735 + $0x60] sm:$0xff]
        %v749 = vld [vmem:[%s735 + $0x68] sm:$0xff]
        %v750 = vld [vmem:[%s735 + $0x70] sm:$0xff]
        %v751 = vld [vmem:[%s735 + $0x78] sm:$0xff]
        %v752 = vld [vmem:[%s735 + $0x80] sm:$0xff]
        %v753 = vld [vmem:[%s735 + $0x88] sm:$0xff]
        %v754 = vld [vmem:[%s735 + $0x90] sm:$0xff]
        %v755 = vld [vmem:[%s735 + $0x98] sm:$0xff]
        %v756 = vld [vmem:[%s735 + $0xa0] sm:$0xff]
        %v757 = vld [vmem:[%s735 + $0xa8] sm:$0xff]
        %v758 = vld [vmem:[%s735 + $0xb0] sm:$0xff]
        %v759 = vld [vmem:[%s735 + $0xb8] sm:$0xff]
        %v760 = vld [vmem:[%s735 + $0xc0] sm:$0x77]
        %v761 = vld [vmem:[%s735 + $0xc8] sm:$0x77]
        %vm764 = vcmask 1046528
        %v765 = vrot.slane %v211, 1
        %v766 = vrot.slane %v206, 1
        %v767 = vsel %vm764, %v765, %v766
        %v768 = vrot.slane %v212, 1
        %v769 = vsel %vm764, %v766, %v768
        %v796 = vunpack.c.l.b16 %v736
        %v797 = vunpack.c.h.b16 %v736
        %v798 = vunpack.c.l.b16 %v737
        %v799 = vunpack.c.h.b16 %v737
        %v800 = vunpack.c.l.b16 %v738
        %v801 = vunpack.c.h.b16 %v738
        %v802 = vunpack.c.l.b16 %v739
        %v803 = vunpack.c.h.b16 %v739
        %v804 = vunpack.c.l.b16 %v740
        %v805 = vunpack.c.h.b16 %v740
        %v806 = vunpack.c.l.b16 %v741
        %v807 = vunpack.c.h.b16 %v741
        %v808 = vunpack.c.l.b16 %v742
        %v809 = vunpack.c.h.b16 %v742
        %v810 = vunpack.c.l.b16 %v743
        %v811 = vunpack.c.h.b16 %v743
        %v812 = vunpack.c.l.b16 %v744
        %v813 = vunpack.c.h.b16 %v744
        %v814 = vunpack.c.l.b16 %v745
        %v815 = vunpack.c.h.b16 %v745
        %v816 = vunpack.c.l.b16 %v746
        %v817 = vunpack.c.h.b16 %v746
        %v818 = vunpack.c.l.b16 %v747
        %v819 = vunpack.c.h.b16 %v747
        %v820 = vunpack.c.l.b16 %v748
        %v821 = vunpack.c.h.b16 %v748
        %v822 = vunpack.c.l.b16 %v749
        %v823 = vunpack.c.h.b16 %v749
        %v824 = vunpack.c.l.b16 %v750
        %v825 = vunpack.c.h.b16 %v750
        %v826 = vunpack.c.l.b16 %v751
        %v827 = vunpack.c.h.b16 %v751
        %v828 = vunpack.c.l.b16 %v752
        %v829 = vunpack.c.h.b16 %v752
        %v830 = vunpack.c.l.b16 %v753
        %v831 = vunpack.c.h.b16 %v753
        %v832 = vunpack.c.l.b16 %v754
        %v833 = vunpack.c.h.b16 %v754
        %v834 = vunpack.c.l.b16 %v755
        %v835 = vunpack.c.h.b16 %v755
        %v836 = vunpack.c.l.b16 %v756
        %v837 = vunpack.c.h.b16 %v756
        %v838 = vunpack.c.l.b16 %v757
        %v839 = vunpack.c.h.b16 %v757
        %v840 = vunpack.c.l.b16 %v758
        %v841 = vunpack.c.h.b16 %v758
        %v842 = vunpack.c.l.b16 %v759
        %v843 = vunpack.c.h.b16 %v759
        %v844 = vunpack.c.l.b16 %v760
        %v845 = vunpack.c.h.b16 %v760
        %v846 = vunpack.c.l.b16 %v761
        %v847 = vunpack.c.h.b16 %v761
        %v848 = vpack.c.b16 %v800, %v796
        %v849 = vpack.c.b16 %v801, %v797
        %v850 = vpack.c.b16 %v802, %v798
        %v851 = vpack.c.b16 %v803, %v799
        %v852 = vpack.c.b16 %v808, %v804
        %v853 = vpack.c.b16 %v809, %v805
        %v854 = vpack.c.b16 %v810, %v806
        %v855 = vpack.c.b16 %v811, %v807
        %v856 = vpack.c.b16 %v816, %v812
        %v857 = vpack.c.b16 %v817, %v813
        %v858 = vpack.c.b16 %v818, %v814
        %v859 = vpack.c.b16 %v819, %v815
        %v860 = vpack.c.b16 %v824, %v820
        %v861 = vpack.c.b16 %v825, %v821
        %v862 = vpack.c.b16 %v826, %v822
        %v863 = vpack.c.b16 %v827, %v823
        %v864 = vpack.c.b16 %v832, %v828
        %v865 = vpack.c.b16 %v833, %v829
        %v866 = vpack.c.b16 %v834, %v830
        %v867 = vpack.c.b16 %v835, %v831
        %v868 = vpack.c.b16 %v840, %v836
        %v869 = vpack.c.b16 %v841, %v837
        %v870 = vpack.c.b16 %v842, %v838
        %v871 = vpack.c.b16 %v843, %v839
        %v872 = vpack.c.b16 %v844, %v844
        %v873 = vpack.c.b16 %v845, %v845
        %v874 = vpack.c.b16 %v846, %v846
        %v875 = vpack.c.b16 %v847, %v847
        %v901 = vsel %vm417, %v767, 0
        %v904 = vsel %vm417, %v769, 0
        %v907 = vsel %vm424, %v872, 0
        %v910 = vsel %vm424, %v873, 0
        %v913 = vsel %vm424, %v874, 0
        %v916 = vsel %vm424, %v875, 0
        %918 = vmatpush.bf16.msra.mxu0 0
        %919 = vmatpush.bf16.msra.mxu0 %v907
        %920 = vmatpush.bf16.msra.mxu0 %v868
        %921 = vmatpush.bf16.msra.mxu0 %v864
        %922 = vmatpush.bf16.msra.mxu0 %v860
        %923 = vmatpush.bf16.msra.mxu0 %v856
        %924 = vmatpush.bf16.msra.mxu0 %v852
        %925 = vmatpush.bf16.msra.mxu0 %v848
        %926 = vmatmul.bf16.gmra.mxu0 %v901
        %v927 = vpop.f32.mrf.mxu0
        %v928 = vadd.f32 0.0, %v927
        %v929 = vpop.f32.mrf.mxu0
        %v930 = vadd.f32 0.0, %v929
        %931 = vmatmul.bf16.gmra.mxu0 %v904
        %v932 = vpop.f32.mrf.mxu0
        %v933 = vadd.f32 0.0, %v932
        %v934 = vpop.f32.mrf.mxu0
        %v935 = vadd.f32 0.0, %v934
        %936 = vdwg.mxu0
        %937 = vmatpush.bf16.msra.mxu0 0
        %938 = vmatpush.bf16.msra.mxu0 %v910
        %939 = vmatpush.bf16.msra.mxu0 %v869
        %940 = vmatpush.bf16.msra.mxu0 %v865
        %941 = vmatpush.bf16.msra.mxu0 %v861
        %942 = vmatpush.bf16.msra.mxu0 %v857
        %943 = vmatpush.bf16.msra.mxu0 %v853
        %944 = vmatpush.bf16.msra.mxu0 %v849
        %945 = vmatmul.bf16.gmra.mxu0 %v901
        %v946 = vpop.f32.mrf.mxu0
        %v947 = vadd.f32 0.0, %v946
        %v948 = vpop.f32.mrf.mxu0
        %v949 = vadd.f32 0.0, %v948
        %950 = vmatmul.bf16.gmra.mxu0 %v904
        %v951 = vpop.f32.mrf.mxu0
        %v952 = vadd.f32 0.0, %v951
        %v953 = vpop.f32.mrf.mxu0
        %v954 = vadd.f32 0.0, %v953
        %955 = vdwg.mxu0
        %956 = vmatpush.bf16.msra.mxu0 0
        %957 = vmatpush.bf16.msra.mxu0 %v913
        %958 = vmatpush.bf16.msra.mxu0 %v870
        %959 = vmatpush.bf16.msra.mxu0 %v866
        %960 = vmatpush.bf16.msra.mxu0 %v862
        %961 = vmatpush.bf16.msra.mxu0 %v858
        %962 = vmatpush.bf16.msra.mxu0 %v854
        %963 = vmatpush.bf16.msra.mxu0 %v850
        %964 = vmatmul.bf16.gmra.mxu0 %v901
        %v965 = vpop.f32.mrf.mxu0
        %v966 = vadd.f32 0.0, %v965
        %v967 = vpop.f32.mrf.mxu0
        %v968 = vadd.f32 0.0, %v967
        %969 = vmatmul.bf16.gmra.mxu0 %v904
        %v970 = vpop.f32.mrf.mxu0
        %v971 = vadd.f32 0.0, %v970
        %v972 = vpop.f32.mrf.mxu0
        %v973 = vadd.f32 0.0, %v972
        %974 = vdwg.mxu0
        %975 = vmatpush.bf16.msra.mxu0 0
        %976 = vmatpush.bf16.msra.mxu0 %v916
        %977 = vmatpush.bf16.msra.mxu0 %v871
        %978 = vmatpush.bf16.msra.mxu0 %v867
        %979 = vmatpush.bf16.msra.mxu0 %v863
        %980 = vmatpush.bf16.msra.mxu0 %v859
        %981 = vmatpush.bf16.msra.mxu0 %v855
        %982 = vmatpush.bf16.msra.mxu0 %v851
        %983 = vmatmul.bf16.gmra.mxu0 %v901
        %v984 = vpop.f32.mrf.mxu0
        %v985 = vadd.f32 0.0, %v984
        %v986 = vpop.f32.mrf.mxu0
        %v987 = vadd.f32 0.0, %v986
        %988 = vmatmul.bf16.gmra.mxu0 %v904
        %v989 = vpop.f32.mrf.mxu0
        %v990 = vadd.f32 0.0, %v989
        %v991 = vpop.f32.mrf.mxu0
        %v992 = vadd.f32 0.0, %v991
        %993 = vdwg.mxu0
        %v994 = vadd.f32 %v669, %v928
        %v995 = vadd.f32 %v688, %v947
        %v996 = vadd.f32 %v707, %v966
        %v997 = vadd.f32 %v726, %v985
        %v998 = vadd.f32 %v671, %v930
        %v999 = vadd.f32 %v690, %v949
        %v1000 = vadd.f32 %v709, %v968
        %v1001 = vadd.f32 %v728, %v987
        %v1002 = vadd.f32 %v674, %v933
        %v1003 = vadd.f32 %v693, %v952
        %v1004 = vadd.f32 %v712, %v971
        %v1005 = vadd.f32 %v731, %v990
        %v1006 = vadd.f32 %v676, %v935
        %v1007 = vadd.f32 %v695, %v954
        %v1008 = vadd.f32 %v714, %v973
        %v1009 = vadd.f32 %v733, %v992
        %v1010 = vmax.f32 %v994, 0.0
        %v1011 = vmax.f32 %v995, 0.0
        %v1012 = vmax.f32 %v996, 0.0
        %v1013 = vmax.f32 %v997, 0.0
        %v1014 = vmax.f32 %v998, 0.0
        %v1015 = vmax.f32 %v999, 0.0
        %v1016 = vmax.f32 %v1000, 0.0
        %v1017 = vmax.f32 %v1001, 0.0
        %v1018 = vmax.f32 %v1002, 0.0
        %v1019 = vmax.f32 %v1003, 0.0
        %v1020 = vmax.f32 %v1004, 0.0
        %v1021 = vmax.f32 %v1005, 0.0
        %v1022 = vmax.f32 %v1006, 0.0
        %v1023 = vmax.f32 %v1007, 0.0
        %v1024 = vmax.f32 %v1008, 0.0
        %v1025 = vmax.f32 %v1009, 0.0
        %v1030 = vrot.slane %v1010, 1
        %v1031 = vrot.slane %v1011, 1
        %v1032 = vrot.slane %v1012, 1
        %v1033 = vrot.slane %v1013, 1
        %v1038 = vrot.slane %v1010, 2
        %v1039 = vrot.slane %v1011, 2
        %v1040 = vrot.slane %v1012, 2
        %v1041 = vrot.slane %v1013, 2
        %v1046 = vrot.slane %v1010, 3
        %v1047 = vrot.slane %v1011, 3
        %v1048 = vrot.slane %v1012, 3
        %v1049 = vrot.slane %v1013, 3
        %v1058 = vrot.slane %v1014, 4
        %v1059 = vrot.slane %v1015, 4
        %v1060 = vrot.slane %v1016, 4
        %v1061 = vrot.slane %v1017, 4
        %v1066 = vrot.slane %v1014, 5
        %v1067 = vrot.slane %v1015, 5
        %v1068 = vrot.slane %v1016, 5
        %v1069 = vrot.slane %v1017, 5
        %v1074 = vrot.slane %v1014, 6
        %v1075 = vrot.slane %v1015, 6
        %v1076 = vrot.slane %v1016, 6
        %v1077 = vrot.slane %v1017, 6
        %v1082 = vrot.slane %v1014, 7
        %v1083 = vrot.slane %v1015, 7
        %v1084 = vrot.slane %v1016, 7
        %v1085 = vrot.slane %v1017, 7
        %v1094 = vrot.slane %v1018, 1
        %v1095 = vrot.slane %v1019, 1
        %v1096 = vrot.slane %v1020, 1
        %v1097 = vrot.slane %v1021, 1
        %v1102 = vrot.slane %v1018, 2
        %v1103 = vrot.slane %v1019, 2
        %v1104 = vrot.slane %v1020, 2
        %v1105 = vrot.slane %v1021, 2
        %v1110 = vrot.slane %v1018, 3
        %v1111 = vrot.slane %v1019, 3
        %v1112 = vrot.slane %v1020, 3
        %v1113 = vrot.slane %v1021, 3
        %v1122 = vrot.slane %v1022, 4
        %v1123 = vrot.slane %v1023, 4
        %v1124 = vrot.slane %v1024, 4
        %v1125 = vrot.slane %v1025, 4
        %v1130 = vrot.slane %v1022, 5
        %v1131 = vrot.slane %v1023, 5
        %v1132 = vrot.slane %v1024, 5
        %v1133 = vrot.slane %v1025, 5
        %v1138 = vrot.slane %v1022, 6
        %v1139 = vrot.slane %v1023, 6
        %v1140 = vrot.slane %v1024, 6
        %v1141 = vrot.slane %v1025, 6
        %v1146 = vrot.slane %v1022, 7
        %v1147 = vrot.slane %v1023, 7
        %v1148 = vrot.slane %v1024, 7
        %v1149 = vrot.slane %v1025, 7
        %vm1154 = vcmask 1040384
        %v1155 = vsel %vm1154, %v1010, %v1030
        %v1156 = vsel %vm1154, %v1011, %v1031
        %v1157 = vsel %vm1154, %v1012, %v1032
        %v1158 = vsel %vm1154, %v1013, %v1033
        %vm1159 = vcmask 1041408
        %v1160 = vsel %vm1159, %v1155, %v1038
        %v1161 = vsel %vm1159, %v1156, %v1039
        %v1162 = vsel %vm1159, %v1157, %v1040
        %v1163 = vsel %vm1159, %v1158, %v1041
        %v1164 = vsel %vm424, %v1160, %v1046
        %v1165 = vsel %vm424, %v1161, %v1047
        %v1166 = vsel %vm424, %v1162, %v1048
        %v1167 = vsel %vm424, %v1163, %v1049
        %vm1168 = vcmask 1043456
        %v1169 = vsel %vm1168, %v1164, %v1058
        %v1170 = vsel %vm1168, %v1165, %v1059
        %v1171 = vsel %vm1168, %v1166, %v1060
        %v1172 = vsel %vm1168, %v1167, %v1061
        %vm1173 = vcmask 1044480
        %v1174 = vsel %vm1173, %v1169, %v1066
        %v1175 = vsel %vm1173, %v1170, %v1067
        %v1176 = vsel %vm1173, %v1171, %v1068
        %v1177 = vsel %vm1173, %v1172, %v1069
        %vm1178 = vcmask 1045504
        %v1179 = vsel %vm1178, %v1174, %v1074
        %v1180 = vsel %vm1178, %v1175, %v1075
        %v1181 = vsel %vm1178, %v1176, %v1076
        %v1182 = vsel %vm1178, %v1177, %v1077
        %vm1183 = vcmask 1046528
        %v1184 = vsel %vm1183, %v1179, %v1082
        %v1185 = vsel %vm1183, %v1180, %v1083
        %v1186 = vsel %vm1183, %v1181, %v1084
        %v1187 = vsel %vm1183, %v1182, %v1085
        %v1188 = vsel %vm1154, %v1018, %v1094
        %v1189 = vsel %vm1154, %v1019, %v1095
        %v1190 = vsel %vm1154, %v1020, %v1096
        %v1191 = vsel %vm1154, %v1021, %v1097
        %v1192 = vsel %vm1159, %v1188, %v1102
        %v1193 = vsel %vm1159, %v1189, %v1103
        %v1194 = vsel %vm1159, %v1190, %v1104
        %v1195 = vsel %vm1159, %v1191, %v1105
        %v1196 = vsel %vm424, %v1192, %v1110
        %v1197 = vsel %vm424, %v1193, %v1111
        %v1198 = vsel %vm424, %v1194, %v1112
        %v1199 = vsel %vm424, %v1195, %v1113
        %v1200 = vsel %vm1168, %v1196, %v1122
        %v1201 = vsel %vm1168, %v1197, %v1123
        %v1202 = vsel %vm1168, %v1198, %v1124
        %v1203 = vsel %vm1168, %v1199, %v1125
        %v1204 = vsel %vm1173, %v1200, %v1130
        %v1205 = vsel %vm1173, %v1201, %v1131
        %v1206 = vsel %vm1173, %v1202, %v1132
        %v1207 = vsel %vm1173, %v1203, %v1133
        %v1208 = vsel %vm1178, %v1204, %v1138
        %v1209 = vsel %vm1178, %v1205, %v1139
        %v1210 = vsel %vm1178, %v1206, %v1140
        %v1211 = vsel %vm1178, %v1207, %v1141
        %v1212 = vsel %vm1183, %v1208, %v1146
        %v1213 = vsel %vm1183, %v1209, %v1147
        %v1214 = vsel %vm1183, %v1210, %v1148
        %v1215 = vsel %vm1183, %v1211, %v1149
        %v1216 = vrot.slane %v1010, 4
        %v1217 = vrot.slane %v1011, 4
        %v1218 = vrot.slane %v1012, 4
        %v1219 = vrot.slane %v1013, 4
        %v1224 = vrot.slane %v1018, 4
        %v1225 = vrot.slane %v1019, 4
        %v1226 = vrot.slane %v1020, 4
        %v1227 = vrot.slane %v1021, 4
        %v1232 = vsel %vm1154, %v1030, %v1038
        %v1233 = vsel %vm1154, %v1031, %v1039
        %v1234 = vsel %vm1154, %v1032, %v1040
        %v1235 = vsel %vm1154, %v1033, %v1041
        %v1236 = vsel %vm1159, %v1232, %v1046
        %v1237 = vsel %vm1159, %v1233, %v1047
        %v1238 = vsel %vm1159, %v1234, %v1048
        %v1239 = vsel %vm1159, %v1235, %v1049
        %v1240 = vsel %vm424, %v1236, %v1216
        %v1241 = vsel %vm424, %v1237, %v1217
        %v1242 = vsel %vm424, %v1238, %v1218
        %v1243 = vsel %vm424, %v1239, %v1219
        %v1244 = vsel %vm1168, %v1240, %v1066
        %v1245 = vsel %vm1168, %v1241, %v1067
        %v1246 = vsel %vm1168, %v1242, %v1068
        %v1247 = vsel %vm1168, %v1243, %v1069
        %v1248 = vsel %vm1173, %v1244, %v1074
        %v1249 = vsel %vm1173, %v1245, %v1075
        %v1250 = vsel %vm1173, %v1246, %v1076
        %v1251 = vsel %vm1173, %v1247, %v1077
        %v1252 = vsel %vm1178, %v1248, %v1082
        %v1253 = vsel %vm1178, %v1249, %v1083
        %v1254 = vsel %vm1178, %v1250, %v1084
        %v1255 = vsel %vm1178, %v1251, %v1085
        %v1256 = vsel %vm1183, %v1252, %v1014
        %v1257 = vsel %vm1183, %v1253, %v1015
        %v1258 = vsel %vm1183, %v1254, %v1016
        %v1259 = vsel %vm1183, %v1255, %v1017
        %v1260 = vsel %vm1154, %v1094, %v1102
        %v1261 = vsel %vm1154, %v1095, %v1103
        %v1262 = vsel %vm1154, %v1096, %v1104
        %v1263 = vsel %vm1154, %v1097, %v1105
        %v1264 = vsel %vm1159, %v1260, %v1110
        %v1265 = vsel %vm1159, %v1261, %v1111
        %v1266 = vsel %vm1159, %v1262, %v1112
        %v1267 = vsel %vm1159, %v1263, %v1113
        %v1268 = vsel %vm424, %v1264, %v1224
        %v1269 = vsel %vm424, %v1265, %v1225
        %v1270 = vsel %vm424, %v1266, %v1226
        %v1271 = vsel %vm424, %v1267, %v1227
        %v1272 = vsel %vm1168, %v1268, %v1130
        %v1273 = vsel %vm1168, %v1269, %v1131
        %v1274 = vsel %vm1168, %v1270, %v1132
        %v1275 = vsel %vm1168, %v1271, %v1133
        %v1276 = vsel %vm1173, %v1272, %v1138
        %v1277 = vsel %vm1173, %v1273, %v1139
        %v1278 = vsel %vm1173, %v1274, %v1140
        %v1279 = vsel %vm1173, %v1275, %v1141
        %v1280 = vsel %vm1178, %v1276, %v1146
        %v1281 = vsel %vm1178, %v1277, %v1147
        %v1282 = vsel %vm1178, %v1278, %v1148
        %v1283 = vsel %vm1178, %v1279, %v1149
        %v1284 = vsel %vm1183, %v1280, %v1022
        %v1285 = vsel %vm1183, %v1281, %v1023
        %v1286 = vsel %vm1183, %v1282, %v1024
        %v1287 = vsel %vm1183, %v1283, %v1025
        %v1288 = vmax.f32 %v1184, %v1256
        %v1289 = vmax.f32 %v1185, %v1257
        %v1290 = vmax.f32 %v1186, %v1258
        %v1291 = vmax.f32 %v1187, %v1259
        %v1292 = vmax.f32 %v1212, %v1284
        %v1293 = vmax.f32 %v1213, %v1285
        %v1294 = vmax.f32 %v1214, %v1286
        %v1295 = vmax.f32 %v1215, %v1287
        %1298 = vrot.lane.b32.xlu0 %v1288, 112
        %v1299 = vpop.permute.xlu0 %1298
        %1300 = vrot.lane.b32.xlu0 %v1292, 112
        %v1301 = vpop.permute.xlu0 %1300
        %1304 = vrot.lane.b32.xlu0 %v1288, 96
        %v1305 = vpop.permute.xlu0 %1304
        %1306 = vrot.lane.b32.xlu0 %v1292, 96
        %v1307 = vpop.permute.xlu0 %1306
        %1310 = vrot.lane.b32.xlu0 %v1288, 80
        %v1311 = vpop.permute.xlu0 %1310
        %1312 = vrot.lane.b32.xlu0 %v1292, 80
        %v1313 = vpop.permute.xlu0 %1312
        %1318 = vrot.lane.b32.xlu0 %v1289, 64
        %v1319 = vpop.permute.xlu0 %1318
        %1320 = vrot.lane.b32.xlu0 %v1293, 64
        %v1321 = vpop.permute.xlu0 %1320
        %1324 = vrot.lane.b32.xlu0 %v1289, 48
        %v1325 = vpop.permute.xlu0 %1324
        %1326 = vrot.lane.b32.xlu0 %v1293, 48
        %v1327 = vpop.permute.xlu0 %1326
        %1330 = vrot.lane.b32.xlu0 %v1289, 32
        %v1331 = vpop.permute.xlu0 %1330
        %1332 = vrot.lane.b32.xlu0 %v1293, 32
        %v1333 = vpop.permute.xlu0 %1332
        %1336 = vrot.lane.b32.xlu0 %v1289, 16
        %v1337 = vpop.permute.xlu0 %1336
        %1338 = vrot.lane.b32.xlu0 %v1293, 16
        %v1339 = vpop.permute.xlu0 %1338
        %1344 = vrot.lane.b32.xlu0 %v1290, 112
        %v1345 = vpop.permute.xlu0 %1344
        %1346 = vrot.lane.b32.xlu0 %v1294, 112
        %v1347 = vpop.permute.xlu0 %1346
        %1350 = vrot.lane.b32.xlu0 %v1290, 96
        %v1351 = vpop.permute.xlu0 %1350
        %1352 = vrot.lane.b32.xlu0 %v1294, 96
        %v1353 = vpop.permute.xlu0 %1352
        %1356 = vrot.lane.b32.xlu0 %v1290, 80
        %v1357 = vpop.permute.xlu0 %1356
        %1358 = vrot.lane.b32.xlu0 %v1294, 80
        %v1359 = vpop.permute.xlu0 %1358
        %1364 = vrot.lane.b32.xlu0 %v1291, 64
        %v1365 = vpop.permute.xlu0 %1364
        %1366 = vrot.lane.b32.xlu0 %v1295, 64
        %v1367 = vpop.permute.xlu0 %1366
        %1370 = vrot.lane.b32.xlu0 %v1291, 48
        %v1371 = vpop.permute.xlu0 %1370
        %1372 = vrot.lane.b32.xlu0 %v1295, 48
        %v1373 = vpop.permute.xlu0 %1372
        %1376 = vrot.lane.b32.xlu0 %v1291, 32
        %v1377 = vpop.permute.xlu0 %1376
        %1378 = vrot.lane.b32.xlu0 %v1295, 32
        %v1379 = vpop.permute.xlu0 %1378
        %1382 = vrot.lane.b32.xlu0 %v1291, 16
        %v1383 = vpop.permute.xlu0 %1382
        %1384 = vrot.lane.b32.xlu0 %v1295, 16
        %v1385 = vpop.permute.xlu0 %1384
        %vm1388 = vcmask 130048
        %v1389 = vsel %vm1388, %v1288, %v1299
        %v1390 = vsel %vm1388, %v1292, %v1301
        %vm1391 = vcmask 261120
        %v1392 = vsel %vm1391, %v1389, %v1305
        %v1393 = vsel %vm1391, %v1390, %v1307
        %vm1394 = vcmask 392192
        %v1395 = vsel %vm1394, %v1392, %v1311
        %v1396 = vsel %vm1394, %v1393, %v1313
        %vm1397 = vcmask 523264
        %v1398 = vsel %vm1397, %v1395, %v1319
        %v1399 = vsel %vm1397, %v1396, %v1321
        %vm1400 = vcmask 654336
        %v1401 = vsel %vm1400, %v1398, %v1325
        %v1402 = vsel %vm1400, %v1399, %v1327
        %vm1403 = vcmask 785408
        %v1404 = vsel %vm1403, %v1401, %v1331
        %v1405 = vsel %vm1403, %v1402, %v1333
        %vm1406 = vcmask 916480
        %v1407 = vsel %vm1406, %v1404, %v1337
        %v1408 = vsel %vm1406, %v1405, %v1339
        %v1409 = vsel %vm1388, %v1290, %v1345
        %v1410 = vsel %vm1388, %v1294, %v1347
        %v1411 = vsel %vm1391, %v1409, %v1351
        %v1412 = vsel %vm1391, %v1410, %v1353
        %v1413 = vsel %vm1394, %v1411, %v1357
        %v1414 = vsel %vm1394, %v1412, %v1359
        %v1415 = vsel %vm1397, %v1413, %v1365
        %v1416 = vsel %vm1397, %v1414, %v1367
        %v1417 = vsel %vm1400, %v1415, %v1371
        %v1418 = vsel %vm1400, %v1416, %v1373
        %v1419 = vsel %vm1403, %v1417, %v1377
        %v1420 = vsel %vm1403, %v1418, %v1379
        %v1421 = vsel %vm1406, %v1419, %v1383
        %v1422 = vsel %vm1406, %v1420, %v1385
        %1423 = vrot.lane.b32.xlu0 %v1288, 64
        %v1424 = vpop.permute.xlu0 %1423
        %1425 = vrot.lane.b32.xlu0 %v1292, 64
        %v1426 = vpop.permute.xlu0 %1425
        %1429 = vrot.lane.b32.xlu0 %v1290, 64
        %v1430 = vpop.permute.xlu0 %1429
        %1431 = vrot.lane.b32.xlu0 %v1294, 64
        %v1432 = vpop.permute.xlu0 %1431
        %v1435 = vsel %vm1388, %v1299, %v1305
        %v1436 = vsel %vm1388, %v1301, %v1307
        %v1437 = vsel %vm1391, %v1435, %v1311
        %v1438 = vsel %vm1391, %v1436, %v1313
        %v1439 = vsel %vm1394, %v1437, %v1424
        %v1440 = vsel %vm1394, %v1438, %v1426
        %v1441 = vsel %vm1397, %v1439, %v1325
        %v1442 = vsel %vm1397, %v1440, %v1327
        %v1443 = vsel %vm1400, %v1441, %v1331
        %v1444 = vsel %vm1400, %v1442, %v1333
        %v1445 = vsel %vm1403, %v1443, %v1337
        %v1446 = vsel %vm1403, %v1444, %v1339
        %v1447 = vsel %vm1406, %v1445, %v1289
        %v1448 = vsel %vm1406, %v1446, %v1293
        %v1449 = vsel %vm1388, %v1345, %v1351
        %v1450 = vsel %vm1388, %v1347, %v1353
        %v1451 = vsel %vm1391, %v1449, %v1357
        %v1452 = vsel %vm1391, %v1450, %v1359
        %v1453 = vsel %vm1394, %v1451, %v1430
        %v1454 = vsel %vm1394, %v1452, %v1432
        %v1455 = vsel %vm1397, %v1453, %v1371
        %v1456 = vsel %vm1397, %v1454, %v1373
        %v1457 = vsel %vm1400, %v1455, %v1377
        %v1458 = vsel %vm1400, %v1456, %v1379
        %v1459 = vsel %vm1403, %v1457, %v1383
        %v1460 = vsel %vm1403, %v1458, %v1385
        %v1461 = vsel %vm1406, %v1459, %v1291
        %v1462 = vsel %vm1406, %v1460, %v1295
        %v1463 = vmax.f32 %v1407, %v1447
        %v1464 = vmax.f32 %v1421, %v1461
        %v1465 = vmax.f32 %v1408, %v1448
        %v1466 = vmax.f32 %v1422, %v1462
        %1467 = vst [vmem:[%s160] sm:$0xff] %v1463
        %1468 = vst [vmem:[%s160 + $0x8] sm:$0xff] %v1464
        %1469 = vst [vmem:[%s160 + $0x10] sm:$0xff] %v1465
        %1470 = vst [vmem:[%s160 + $0x18] sm:$0xff] %v1466
        %p1471 = scmp.lt.s32.totalorder %s14, 1
        %s1472 = scalar_select %p1471, %s14, 1
        %s1473 = smul.addr %s1472, 4
        %s1474 = smul.addr %s1473, 8
        %s1475 = scalar_lea.vmem %s2, %s1474
        // Predicated region
        $region33: #{forward.6} parent=27 // pred_check
          %p1476 = pneg %p79
        $region34: #{forward.6} parent=27 // pred_check_branch
          %1478 = sbr.rel (%p1476) target = $region36
        $region35: #{forward.6} parent=27 // pred_region
          _
        $region36: #{forward.6} parent=27 // pred_fallthru
          _
      $region28: #{forward.6} parent=5 // pred_fallthru
        _
      %p1479 = scmp.le.s32.totalorder 2, %s9
      // Predicated region
      $region37: #{forward.6} parent=5 // pred_check
        %p1480 = pneg %p1479
      $region38: #{forward.6} parent=5 // pred_check_branch
        %1482 = sbr.rel (%p1480) target = $region40
      $region39: #{forward.6} parent=5 // pred_region
        %s1483 = ssub.s32 %s9, 2
        // Predicated region
        $region41: #{forward.6} parent=39 // pred_check
          %p1484 = pneg %p85
        $region42: #{forward.6} parent=39 // pred_check_branch
          %1486 = sbr.rel (%p1484) target = $region44
        $region43: #{forward.6} parent=39 // pred_region
          %p1487 = scmp.lt.s32.totalorder %s15, 1
          %s1488 = scalar_select %p1487, %s15, 1
          %s1489 = smul.addr %s1488, 4
          %s1490 = smul.addr %s1489, 8
          %s1491 = scalar_lea.vmem %s2, %s1490
        $region44: #{forward.6} parent=39 // pred_fallthru
          _
      $region40: #{forward.6} parent=5 // pred_fallthru
        _
    $region6: #{forward.6} parent=1 // loop_footer
      %s13 = sadd.s32 1, %s9
    $region7: #{forward.6} parent=1 // loop_footer_branch
      %8 = sbr.rel target = $region3
    $region8: #{forward.6} parent=1 // loop_exit
      _
    %1492 = vsyncpa [#allocation3], 1
    %s1493 = scalar_lea.sflag [#allocation3], 1
    %1494 = vsyncpa %s1493, 1

// kernel: forward.10
$region0: #{forward.10}
  #allocation0 [shape = 'u32[]', space=smem, size = 0x4, offset = 0x4, fixed_abs, tag = 'smem constant byte address 0x4 - core index']
  #allocation1 [shape = 'u32[72,128]{1,0:T(1,128)}', space=vmem, size = 0x9000, scoped, tag = 'internal scratch']
  %s0 = inlined_call_operand.vmem [shape: f32[2,2,32], index: 0, kind: input, shape index: {}]
  %s1 = inlined_call_operand.vmem [shape: bf16[3,64,32], index: 1, kind: input, shape index: {}]
  %s2 = inlined_call_operand.vmem [shape: f32[2,1,16], index: 2, kind: output, shape index: {}]
  %s3 = sld [smem:[#allocation0]]
  $region41: #{forward.10} parent=0
    _
  %s5 = ssub.s32 1, %s3
  %s6 = scalar_select 0, %s5, %s3
  loop: start=0, step=1, limit=4
  $region2: #{forward.10} parent=0 // loop_pre_header
    _
  $region3: #{forward.10} parent=0 // loop_header
    %s8 = sphi 0, %s12
    %p9 = scmp.ge.s32.totalorder %s8, 4
    %s18 = sphi 0, %s20
    %s21 = sphi 0, %s18
    %s22 = sphi 0, %s21
    %s38 = sphi 0, %s22
    %s42 = sphi 0, %s42
    %s44 = sphi 0, %s42
    %s45 = sphi 0, %s44
    %s59 = sphi 0, %s45
    %s65 = sphi 0, %s67
    %s68 = sphi 0, %s65
    %s69 = sphi 0, %s68
    %s85 = sphi 0, %s69
  $region4: #{forward.10} parent=0 // loop_header_branch
    %11 = sbr.rel (%p9) target = $region8
  $region5: #{forward.10} parent=0 // loop_body
    %s13 = ssub.s32 %s8, 1
    %s14 = ssub.s32 %s8, 2
    %s15 = sadd.s32 %s8, 1
    %s16 = ssub.s32 %s8, %s15
    %p17 = scmp.eq.s32.totalorder %s16, 0
    %s19 = sadd.s32 %s18, 1
    %s20 = scalar_select %p17, %s18, %s19
    %p23 = pneg %p17
    %p24 = scmp.eq.s32.totalorder %s8, 1
    %p25 = por %p23, %p24
    %p26 = scmp.ne.s32.totalorder %s18, %s21
    %p27 = scmp.eq.s32.totalorder %s8, 0
    %p28 = por %p26, %p27
    %p29 = scmp.ne.s32.totalorder %s18, %s21
    %p30 = scmp.eq.s32.totalorder %s13, 1
    %p31 = por %p29, %p30
    %p32 = scmp.ne.s32.totalorder %s21, %s22
    %p33 = scmp.eq.s32.totalorder %s13, 0
    %p34 = por %p32, %p33
    %p35 = scmp.ne.s32.totalorder %s21, %s22
    %p36 = scmp.eq.s32.totalorder %s14, 1
    %p37 = por %p35, %p36
    %p39 = scmp.ne.s32.totalorder %s22, %s38
    %p40 = scmp.eq.s32.totalorder %s14, 0
    %p41 = por %p39, %p40
    %s43 = sadd.s32 %s42, 1
    %p46 = scmp.eq.s32.totalorder %s8, 1
    %p47 = scmp.ne.s32.totalorder %s42, %s44
    %p48 = scmp.eq.s32.totalorder %s8, 0
    %p49 = por %p47, %p48
    %p50 = scmp.ne.s32.totalorder %s42, %s44
    %p51 = scmp.eq.s32.totalorder %s13, 1
    %p52 = por %p50, %p51
    %p53 = scmp.ne.s32.totalorder %s44, %s45
    %p54 = scmp.eq.s32.totalorder %s13, 0
    %p55 = por %p53, %p54
    %p56 = scmp.ne.s32.totalorder %s44, %s45
    %p57 = scmp.eq.s32.totalorder %s14, 1
    %p58 = por %p56, %p57
    %p60 = scmp.ne.s32.totalorder %s45, %s59
    %p61 = scmp.eq.s32.totalorder %s14, 0
    %p62 = por %p60, %p61
    %s63 = ssub.s32 %s8, %s15
    %p64 = scmp.eq.s32.totalorder %s63, 0
    %s66 = sadd.s32 %s65, 1
    %s67 = scalar_select %p64, %s65, %s66
    %p70 = pneg %p64
    %p71 = scmp.eq.s32.totalorder %s8, 1
    %p72 = por %p70, %p71
    %p73 = scmp.ne.s32.totalorder %s65, %s68
    %p74 = scmp.eq.s32.totalorder %s8, 0
    %p75 = por %p73, %p74
    %p76 = scmp.ne.s32.totalorder %s65, %s68
    %p77 = scmp.eq.s32.totalorder %s13, 1
    %p78 = por %p76, %p77
    %p79 = scmp.ne.s32.totalorder %s68, %s69
    %p80 = scmp.eq.s32.totalorder %s13, 0
    %p81 = por %p79, %p80
    %p82 = scmp.ne.s32.totalorder %s68, %s69
    %p83 = scmp.eq.s32.totalorder %s14, 1
    %p84 = por %p82, %p83
    %p86 = scmp.ne.s32.totalorder %s69, %s85
    %p87 = scmp.eq.s32.totalorder %s14, 0
    %p88 = por %p86, %p87
    %p89 = scmp.le.s32.totalorder 1, %s8
    %p90 = scmp.lt.s32.totalorder %s8, 3
    %p91 = pnand %p89, %p90
    %p92 = pneg %p91
    // Predicated region
    $region9: #{forward.10} parent=5 // pred_check
      _
    $region10: #{forward.10} parent=5 // pred_check_branch
      %94 = sbr.rel (%p91) target = $region12
    $region11: #{forward.10} parent=5 // pred_region
      %s95 = ssub.s32 %s8, 1
      // Predicated region
      $region13: #{forward.10} parent=11 // pred_check
        %p96 = pneg %p55
      $region14: #{forward.10} parent=11 // pred_check_branch
        %98 = sbr.rel (%p96) target = $region16
      $region15: #{forward.10} parent=11 // pred_region
        _
      $region16: #{forward.10} parent=11 // pred_fallthru
        _
    $region12: #{forward.10} parent=5 // pred_fallthru
      _
    %p99 = scmp.lt.s32.totalorder %s8, 2
    // Predicated region
    $region17: #{forward.10} parent=5 // pred_check
      %p100 = pneg %p99
    $region18: #{forward.10} parent=5 // pred_check_branch
      %102 = sbr.rel (%p100) target = $region20
    $region19: #{forward.10} parent=5 // pred_region
      // Predicated region
      $region21: #{forward.10} parent=19 // pred_check
        %p103 = pneg %p28
      $region22: #{forward.10} parent=19 // pred_check_branch
        %105 = sbr.rel (%p103) target = $region24
      $region23: #{forward.10} parent=19 // pred_region
        %p106 = scmp.lt.s32.totalorder %s8, 1
        %s107 = scalar_select %p106, %s8, 1
        %s108 = smul.addr %s107, 2
        %s109 = scalar_lea.vmem %s0, %s108
      $region24: #{forward.10} parent=19 // pred_fallthru
        _
    $region20: #{forward.10} parent=5 // pred_fallthru
      _
    %p110 = scmp.le.s32.totalorder 1, %s8
    %p111 = scmp.lt.s32.totalorder %s8, 3
    %p112 = pnand %p110, %p111
    %p113 = pneg %p112
    // Predicated region
    $region25: #{forward.10} parent=5 // pred_check
      _
    $region26: #{forward.10} parent=5 // pred_check_branch
      %115 = sbr.rel (%p112) target = $region28
    $region27: #{forward.10} parent=5 // pred_region
      %s116 = ssub.s32 %s8, 1
      %p117 = scmp.lt.s32.totalorder %s13, 1
      %s118 = scalar_select %p117, %s13, 1
      %s119 = smul.addr %s118, 2
      %s120 = scalar_lea.vmem %s0, %s119
      %p121 = pneg %p34
      %p122 = pneg %p31
      %p123 = pneg %p55
      %p124 = pneg %p52
      %p125 = pneg %p81
      %p126 = pneg %p78
      %p127 = scmp.lt.s32.totalorder %s13, 1
      %s128 = scalar_select %p127, %s13, 1
      %s129 = scalar_lea.vmem %s2, %s128
      %p130 = scmp.lt.s32.totalorder %s13, 1
      %s131 = scalar_select %p130, %s13, 1
      %s132 = smul.addr %s131, 2
      %s133 = scalar_lea.vmem %s0, %s132
      %p134 = scmp.lt.s32.totalorder %s13, 1
      %s135 = scalar_select %p134, %s13, 1
      %s136 = scalar_lea.vmem %s2, %s135
      %v138 = vld [vmem:[%s133] sm:$0x3]
      %v139 = vpack.c.bf16 %v138, %v138
      %v141 = vunpack.c.l.b16 %v139
      %v142 = vpack.c.b16 %v141, %v141
      %143 = vrot.lane.b32.xlu0 %v142, 16
      %v144 = vpop.permute.xlu0 %143
      %vm145 = vcmask 130048
      %v148 = vsel %vm145, 0, %v144
      %vm149 = vcmask 392192
      %v150 = vsel %vm149, %v148, 0
      %v151 = vshrl.u32 %v150, 16
      %v153 = vrot.slane %v151, 7
      %v154 = vshll.u32 %v150, 16
      %v156 = vor.u32 %v153, %v154
      %vm158 = vcmask 1040384
      %vm159 = vsmask.f32 256
      %vm160 = vmand %vm158, %vm159
      %v161 = vsel %vm160, 0, %v156
      %vm162 = vcmask 1041408
      %vm163 = vsmask.f32 1280
      %vm164 = vmand %vm162, %vm163
      %v165 = vsel %vm164, %v161, 0
      %v166 = vld [vmem:[%s1] sm:$0xf]
      %v167 = vld [vmem:[%s1 + $0x4] sm:$0xf]
      %v168 = vld [vmem:[%s1 + $0x8] sm:$0xf]
      %v169 = vld [vmem:[%s1 + $0xc] sm:$0xf]
      %v170 = vld [vmem:[%s1 + $0x10] sm:$0xf]
      %v171 = vld [vmem:[%s1 + $0x14] sm:$0xf]
      %v172 = vld [vmem:[%s1 + $0x18] sm:$0xf]
      %v173 = vld [vmem:[%s1 + $0x1c] sm:$0xf]
      %s174 = scalar_lea.vmem %s1, 32
      %v175 = vld [vmem:[%s174] sm:$0xf]
      %v176 = vld [vmem:[%s174 + $0x4] sm:$0xf]
      %v177 = vld [vmem:[%s174 + $0x8] sm:$0xf]
      %v178 = vld [vmem:[%s174 + $0xc] sm:$0xf]
      %v179 = vld [vmem:[%s174 + $0x10] sm:$0xf]
      %v180 = vld [vmem:[%s174 + $0x14] sm:$0xf]
      %v181 = vld [vmem:[%s174 + $0x18] sm:$0xf]
      %v182 = vld [vmem:[%s174 + $0x1c] sm:$0xf]
      %v184 = vshrl.u32 %v165, 16
      %v186 = vshll.u32 %v165, 16
      %v188 = vrot.slane %v186, 1
      %v189 = vor.u32 %v184, %v188
      %v198 = vunpack.c.l.b16 %v175
      %v199 = vunpack.c.l.b16 %v176
      %v200 = vunpack.c.l.b16 %v177
      %v201 = vunpack.c.l.b16 %v178
      %v202 = vunpack.c.l.b16 %v179
      %v203 = vunpack.c.l.b16 %v180
      %v204 = vunpack.c.l.b16 %v181
      %v205 = vunpack.c.l.b16 %v182
      %v206 = vpack.c.b16 %v199, %v198
      %v207 = vpack.c.b16 %v201, %v200
      %v208 = vpack.c.b16 %v203, %v202
      %v209 = vpack.c.b16 %v205, %v204
      %vm214 = vcmask 523264
      %v216 = vsel %vm214, %v189, 0
      %218 = vmatpush.bf16.msra.mxu0 0
      %219 = vmatpush.bf16.msra.mxu0 0
      %220 = vmatpush.bf16.msra.mxu0 0
      %221 = vmatpush.bf16.msra.mxu0 0
      %222 = vmatpush.bf16.msra.mxu0 %v209
      %223 = vmatpush.bf16.msra.mxu0 %v208
      %224 = vmatpush.bf16.msra.mxu0 %v207
      %225 = vmatpush.bf16.msra.mxu0 %v206
      %226 = vmatmul.bf16.gmra.mxu0 %v216
      %v227 = vpop.f32.mrf.mxu0
      %v228 = vadd.f32 0.0, %v227
      %v229 = vpop.f32.mrf.mxu0
      %230 = vdwg.mxu0
      %v239 = vunpack.c.l.b16 %v166
      %v240 = vunpack.c.l.b16 %v167
      %v241 = vunpack.c.l.b16 %v168
      %v242 = vunpack.c.l.b16 %v169
      %v243 = vunpack.c.l.b16 %v170
      %v244 = vunpack.c.l.b16 %v171
      %v245 = vunpack.c.l.b16 %v172
      %v246 = vunpack.c.l.b16 %v173
      %v247 = vpack.c.b16 %v240, %v239
      %v248 = vpack.c.b16 %v242, %v241
      %v249 = vpack.c.b16 %v244, %v243
      %v250 = vpack.c.b16 %v246, %v245
      %v255 = vsel %vm214, %v165, 0
      %257 = vmatpush.bf16.msra.mxu0 0
      %258 = vmatpush.bf16.msra.mxu0 0
      %259 = vmatpush.bf16.msra.mxu0 0
      %260 = vmatpush.bf16.msra.mxu0 0
      %261 = vmatpush.bf16.msra.mxu0 %v250
      %262 = vmatpush.bf16.msra.mxu0 %v249
      %263 = vmatpush.bf16.msra.mxu0 %v248
      %264 = vmatpush.bf16.msra.mxu0 %v247
      %265 = vmatmul.bf16.gmra.mxu0 %v255
      %v266 = vpop.f32.mrf.mxu0
      %v267 = vadd.f32 %v228, %v266
      %v268 = vpop.f32.mrf.mxu0
      %269 = vdwg.mxu0
      %s270 = scalar_lea.vmem %s1, 64
      %v271 = vld [vmem:[%s270] sm:$0xf]
      %v272 = vld [vmem:[%s270 + $0x4] sm:$0xf]
      %v273 = vld [vmem:[%s270 + $0x8] sm:$0xf]
      %v274 = vld [vmem:[%s270 + $0xc] sm:$0xf]
      %v275 = vld [vmem:[%s270 + $0x10] sm:$0xf]
      %v276 = vld [vmem:[%s270 + $0x14] sm:$0xf]
      %v277 = vld [vmem:[%s270 + $0x18] sm:$0xf]
      %v278 = vld [vmem:[%s270 + $0x1c] sm:$0xf]
      %v280 = vrot.slane %v165, 1
      %v289 = vunpack.c.l.b16 %v271
      %v290 = vunpack.c.l.b16 %v272
      %v291 = vunpack.c.l.b16 %v273
      %v292 = vunpack.c.l.b16 %v274
      %v293 = vunpack.c.l.b16 %v275
      %v294 = vunpack.c.l.b16 %v276
      %v295 = vunpack.c.l.b16 %v277
      %v296 = vunpack.c.l.b16 %v278
      %v297 = vpack.c.b16 %v290, %v289
      %v298 = vpack.c.b16 %v292, %v291
      %v299 = vpack.c.b16 %v294, %v293
      %v300 = vpack.c.b16 %v296, %v295
      %v306 = vsel %vm214, %v280, 0
      %308 = vmatpush.bf16.msra.mxu0 0
      %309 = vmatpush.bf16.msra.mxu0 0
      %310 = vmatpush.bf16.msra.mxu0 0
      %311 = vmatpush.bf16.msra.mxu0 0
      %312 = vmatpush.bf16.msra.mxu0 %v300
      %313 = vmatpush.bf16.msra.mxu0 %v299
      %314 = vmatpush.bf16.msra.mxu0 %v298
      %315 = vmatpush.bf16.msra.mxu0 %v297
      %316 = vmatmul.bf16.gmra.mxu0 %v306
      %v317 = vpop.f32.mrf.mxu0
      %v318 = vadd.f32 0.0, %v317
      %v319 = vpop.f32.mrf.mxu0
      %320 = vdwg.mxu0
      %v321 = vadd.f32 %v267, %v318
      %v322 = vmax.f32 %v321, 0.0
      %v324 = vrot.slane %v322, 1
      %v326 = vmax.f32 %v322, %v324
      %328 = vrot.lane.b32.xlu0 %v326, 112
      %v329 = vpop.permute.xlu0 %328
      %v331 = vmax.f32 %v326, %v329
      %vm332 = vcmask 122880
      %333 = vst.msk [vmem:[%s136] sm:$0x1] %vm332, %v331
      %p334 = scmp.lt.s32.totalorder %s13, 1
      %s335 = scalar_select %p334, %s13, 1
      %s336 = scalar_lea.vmem %s2, %s335
      // Predicated region
      $region29: #{forward.10} parent=27 // pred_check
        %p337 = pneg %p78
      $region30: #{forward.10} parent=27 // pred_check_branch
        %339 = sbr.rel (%p337) target = $region32
      $region31: #{forward.10} parent=27 // pred_region
        _
      $region32: #{forward.10} parent=27 // pred_fallthru
        _
    $region28: #{forward.10} parent=5 // pred_fallthru
      _
    %p340 = scmp.le.s32.totalorder 2, %s8
    // Predicated region
    $region33: #{forward.10} parent=5 // pred_check
      %p341 = pneg %p340
    $region34: #{forward.10} parent=5 // pred_check_branch
      %343 = sbr.rel (%p341) target = $region36
    $region35: #{forward.10} parent=5 // pred_region
      %s344 = ssub.s32 %s8, 2
      // Predicated region
      $region37: #{forward.10} parent=35 // pred_check
        %p345 = pneg %p84
      $region38: #{forward.10} parent=35 // pred_check_branch
        %347 = sbr.rel (%p345) target = $region40
      $region39: #{forward.10} parent=35 // pred_region
        %p348 = scmp.lt.s32.totalorder %s14, 1
        %s349 = scalar_select %p348, %s14, 1
        %s350 = scalar_lea.vmem %s2, %s349
      $region40: #{forward.10} parent=35 // pred_fallthru
        _
    $region36: #{forward.10} parent=5 // pred_fallthru
      _
  $region6: #{forward.10} parent=0 // loop_footer
    %s12 = sadd.s32 1, %s8
  $region7: #{forward.10} parent=0 // loop_footer_branch
    %7 = sbr.rel target = $region3
  $region8: #{forward.10} parent=0 // loop_exit
    _

// kernel: forward.11
$region0: #{forward.11}
  #allocation0 [shape = 'u32[]', space=smem, size = 0x4, offset = 0x4, fixed_abs, tag = 'smem constant byte address 0x4 - core index']
  #allocation1 [shape = 'u32[72,128]{1,0:T(1,128)}', space=vmem, size = 0x9000, scoped, tag = 'internal scratch']
  %s0 = inlined_call_operand.vmem [shape: f32[2,16], index: 0, kind: input, shape index: {}]
  %s1 = inlined_call_operand.vmem [shape: bf16[16,32], index: 1, kind: input, shape index: {}]
  %s2 = inlined_call_operand.vmem [shape: f32[1,32], index: 2, kind: input, shape index: {}]
  %s3 = inlined_call_operand.vmem [shape: bf16[32,10], index: 3, kind: input, shape index: {}]
  %s4 = inlined_call_operand.vmem [shape: f32[1,10], index: 4, kind: input, shape index: {}]
  %s5 = inlined_call_operand.hbm [shape: f32[2,10], index: 5, kind: output, shape index: {}]
  %s6 = sld [smem:[#allocation0]]
  $region30: #{forward.11} parent=0
    _
  %s8 = ssub.s32 1, %s6
  %s9 = scalar_select 0, %s8, %s6
  $region1: #{forward.11} parent=0
    #allocation2 [shape = 'u8[1024]{0}', space=vmem, size = 0x400, scoped, tag = 'output window, operand 0, single buffered']
    #allocation3 [shape = 's32[1]{0}', space=sflag, size = 0x4, scoped, tag = 'scoped memory for forward.11']
    %10 = vsyncpa [#allocation3], 0
    // Predicated region
    $region2: #{forward.11} parent=1 // pred_check
      _
    $region3: #{forward.11} parent=1 // pred_check_branch
      %12 = sbr.rel (0) target = $region5
    $region4: #{forward.11} parent=1 // pred_region
      _
    $region5: #{forward.11} parent=1 // pred_fallthru
      _
    // Predicated region
    $region6: #{forward.11} parent=1 // pred_check
      _
    $region7: #{forward.11} parent=1 // pred_check_branch
      %14 = sbr.rel (0) target = $region9
    $region8: #{forward.11} parent=1 // pred_region
      _
    $region9: #{forward.11} parent=1 // pred_fallthru
      _
    // Predicated region
    $region10: #{forward.11} parent=1 // pred_check
      _
    $region11: #{forward.11} parent=1 // pred_check_branch
      %16 = sbr.rel (0) target = $region13
    $region12: #{forward.11} parent=1 // pred_region
      _
    $region13: #{forward.11} parent=1 // pred_fallthru
      _
    // Predicated region
    $region14: #{forward.11} parent=1 // pred_check
      _
    $region15: #{forward.11} parent=1 // pred_check_branch
      %18 = sbr.rel (0) target = $region17
    $region16: #{forward.11} parent=1 // pred_region
      _
    $region17: #{forward.11} parent=1 // pred_fallthru
      _
    // Predicated region
    $region18: #{forward.11} parent=1 // pred_check
      _
    $region19: #{forward.11} parent=1 // pred_check_branch
      %20 = sbr.rel (0) target = $region21
    $region20: #{forward.11} parent=1 // pred_region
      _
    $region21: #{forward.11} parent=1 // pred_fallthru
      _
    %v22 = vld [vmem:[%s0] sm:$0x3]
    %v23 = vpack.c.bf16 %v22, %v22
    %v24 = vld [vmem:[%s1] sm:$0xf]
    %v25 = vld [vmem:[%s1 + $0x4] sm:$0xf]
    %v26 = vld [vmem:[%s2] sm:$0x1]
    %v28 = vperm.slane %v26, 0
    %v32 = vunpack.c.l.b16 %v24
    %v33 = vunpack.c.l.b16 %v25
    %v34 = vpack.c.b16 %v33, %v32
    %vm36 = vcmask 130048
    %v38 = vsel %vm36, %v23, 0
    %40 = vmatpush.bf16.msra.mxu0 0
    %41 = vmatpush.bf16.msra.mxu0 0
    %42 = vmatpush.bf16.msra.mxu0 0
    %43 = vmatpush.bf16.msra.mxu0 0
    %44 = vmatpush.bf16.msra.mxu0 0
    %45 = vmatpush.bf16.msra.mxu0 0
    %46 = vmatpush.bf16.msra.mxu0 0
    %47 = vmatpush.bf16.msra.mxu0 %v34
    %48 = vmatmul.bf16.gmra.mxu0 %v38
    %v49 = vpop.f32.mrf.mxu0
    %v50 = vadd.f32 %v28, %v49
    %v51 = vpop.f32.mrf.mxu0
    %52 = vdwg.mxu0
    %v53 = vmax.f32 %v50, 0.0
    %v54 = vpack.c.bf16 %v53, %v53
    %v55 = vld [vmem:[%s3] sm:$0xf]
    %v56 = vld [vmem:[%s3 + $0x4] sm:$0xf]
    %v57 = vld [vmem:[%s3 + $0x8] sm:$0xf]
    %v58 = vld [vmem:[%s3 + $0xc] sm:$0xf]
    %v59 = vld [vmem:[%s4] sm:$0x1]
    %v61 = vperm.slane %v59, 0
    %v67 = vunpack.c.l.b16 %v55
    %v68 = vunpack.c.l.b16 %v56
    %v69 = vunpack.c.l.b16 %v57
    %v70 = vunpack.c.l.b16 %v58
    %v71 = vpack.c.b16 %v68, %v67
    %v72 = vpack.c.b16 %v70, %v69
    %vm75 = vcmask 261120
    %v77 = vsel %vm75, %v54, 0
    %79 = vmatpush.bf16.msra.mxu0 0
    %80 = vmatpush.bf16.msra.mxu0 0
    %81 = vmatpush.bf16.msra.mxu0 0
    %82 = vmatpush.bf16.msra.mxu0 0
    %83 = vmatpush.bf16.msra.mxu0 0
    %84 = vmatpush.bf16.msra.mxu0 0
    %85 = vmatpush.bf16.msra.mxu0 %v72
    %86 = vmatpush.bf16.msra.mxu0 %v71
    %87 = vmatmul.bf16.gmra.mxu0 %v77
    %v88 = vpop.f32.mrf.mxu0
    %v89 = vadd.f32 %v61, %v88
    %v90 = vpop.f32.mrf.mxu0
    %91 = vdwg.mxu0
    %vm92 = vcmask 74752
    %v93 = vsel %vm92, %v89, -inf
    %94 = vmax.xlane.f32.xlu0 %v93
    %v95 = vpop.xlane.xlu0 %94
    %v96 = vsub.f32 %v89, %v95
    %v97 = vmul.f32 %v96, 1.442695
    %v98 = vpow.pop %v97
    %v99 = vsel %vm92, %v98, 0.0
    %100 = vadd.xlane.f32.xlu0 %v99
    %v101 = vpop.xlane.xlu0 %100
    %v102 = vrcp.pop %v101
    %v103 = vmul.f32 %v98, %v102
    %104 = vst.msk [vmem:[#allocation2] sm:$0x3] %vm92, %v103
    // Predicated region
    $region22: #{forward.11} parent=1 // pred_check
      _
    $region23: #{forward.11} parent=1 // pred_check_branch
      %106 = sbr.rel (0) target = $region25
    $region24: #{forward.11} parent=1 // pred_region
      %108 = vsyncadd [#allocation3], 0
      %s110 = sshll.u32 [#allocation2], 4
      %s111 = int_to_ptr.vmem [resolvable:$true] %s110
      %s112 = sshll.u32 %s5, 4
      %s113 = int_to_ptr.hbm [resolvable:$true] %s112
      %115 = dma.vmem_to_hbm [thread:$0]  %s111, 32, %s113, [#allocation3]
    $region25: #{forward.11} parent=1 // pred_fallthru
      _
    // Predicated region
    $region26: #{forward.11} parent=1 // pred_check
      _
    $region27: #{forward.11} parent=1 // pred_check_branch
      %117 = sbr.rel (0) target = $region29
    $region28: #{forward.11} parent=1 // pred_region
      %119 = dma.done [#allocation3], 32
    $region29: #{forward.11} parent=1 // pred_fallthru
      _
    %120 = vsyncpa [#allocation3], 1

</llo_original>
